<compile_context>
chip_gen: v7x
topology: tpu7x:2x2x1
jax: 0.10.0
libtpu: 0.0.40
codegen_flags: <defaults>
</compile_context>

<pallas_src>
import jax
import jax.numpy as jnp
from jax.experimental import pallas as pl
from jax.experimental.pallas import tpu as pltpu

NEG_SLOPE = 0.2


def _leaky(x):
    return jnp.where(x > 0, x, NEG_SLOPE * x)


def _round8(c):
    return ((c + 7) // 8) * 8


# ---------------------- kernel-operand construction (host, build time) ---------------------- #

def _banded_conv_weight(w_hwio, W, cp):
    """(3,3,Cin,Cout) conv weight -> (3, W*cp, W*Cout) bf16 banded matmul weight.

    For kernel row dh, T[dh] maps a lane-dense input row (lane = w_in*cp + ci) to a
    lane-dense output row (lane = w_out*Cout + co).  The three width taps sit on the
    block tri-diagonal; SAME zero-padding in W is encoded as missing (zero) blocks at
    the edges, so no activation padding is needed in the W direction.
    """
    kh, kw, cin, cout = w_hwio.shape
    wp = jnp.pad(jnp.asarray(w_hwio, jnp.float32),
                 ((0, 0), (0, 0), (0, cp - cin), (0, 0)))            # (3,3,cp,cout)
    w_in = jnp.arange(W)[:, None]
    w_out = jnp.arange(W)[None, :]
    dw = w_in - w_out + 1                                            # (W, W), valid in [0, kw)
    valid = ((dw >= 0) & (dw < kw)).astype(wp.dtype)
    t = wp[:, jnp.clip(dw, 0, kw - 1)] * valid[None, :, :, None, None]   # (3,W,W,cp,cout)
    t = jnp.transpose(t, (0, 1, 3, 2, 4))                            # (3, w_in, ci, w_out, co)
    return t.reshape(kh, W * cp, W * cout).astype(jnp.bfloat16)


def _blockdiag_weight(s, W, cp):
    """(Cin,Cout) 1x1-conv weight -> (W*cp, W*Cout) block-diagonal bf16 matmul weight."""
    cin, cout = s.shape
    sp = jnp.pad(jnp.asarray(s, jnp.float32), ((0, cp - cin), (0, 0)))
    return jnp.kron(jnp.eye(W, dtype=sp.dtype), sp).astype(jnp.bfloat16)


def _avgpool_mats(N, H, W, C):
    """AvgPool2d(2) as pooled = PH @ x2d @ PW, x2d laid out (N*H, W*C)."""
    Ho, Wo = H // 2, W // 2
    ph = 0.5 * (jnp.arange(Ho)[:, None] == (jnp.arange(H)[None, :] // 2)).astype(jnp.float32)
    ph_big = jnp.kron(jnp.eye(N, dtype=jnp.float32), ph)             # (N*Ho, N*H)
    pw = 0.5 * ((jnp.arange(W)[:, None] // 2) == jnp.arange(Wo)[None, :]).astype(jnp.float32)
    pw_big = jnp.kron(pw, jnp.eye(C, dtype=jnp.float32))             # (W*C, Wo*C)
    return ph_big, pw_big


def _gap_mat(W, C):
    """Width part of global average pooling: (W*C, C) with 1/W on the channel diagonal."""
    return jnp.kron(jnp.ones((W, 1), jnp.float32) / W, jnp.eye(C, dtype=jnp.float32))


def _lane_bias(b, W):
    """Per-channel bias -> (1, 1, W*Cout) lane vector (lane = w*Cout + co)."""
    b = jnp.asarray(b, jnp.float32).reshape(-1)
    return jnp.tile(b, W).reshape(1, 1, -1)


def _prepare_operands(params, N, H, W):
    """Build the flat operand list + static plan for the single fused forward kernel."""
    mean = jnp.asarray(params["norm_mean"], jnp.float32).reshape(-1)
    std = jnp.asarray(params["norm_std"], jnp.float32).reshape(-1)
    cin_img = mean.shape[0]
    cp0 = _round8(cin_img)                     # image channels padded to 8 -> 128 lanes
    mean_p = jnp.pad(mean, (0, cp0 - cin_img))
    inv_p = jnp.pad(1.0 / std, (0, cp0 - cin_img), constant_values=1.0)

    ops = [jnp.tile(mean_p, W).reshape(1, 1, W * cp0),
           jnp.tile(inv_p, W).reshape(1, 1, W * cp0)]

    stem_w = params["stem_w"]                  # (3,3,cin_img,C0)
    c0 = stem_w.shape[-1]
    ops += [_banded_conv_weight(stem_w, W, cp0), _lane_bias(params["stem_b"], W)]

    plan = {"N": N, "H0": H, "W0": W, "cp0": cp0, "stages": []}
    conv_shapes = [(N, H + 2, W * cp0)]        # scratch shape per conv, execution order
    cur_c, cur_h, cur_w = c0, H, W
    for si, blocks in enumerate(params["stages"]):
        st = {"pool": si > 0, "blocks": []}
        if si > 0:
            ph_big, pw_big = _avgpool_mats(N, cur_h, cur_w, cur_c)
            ops += [ph_big, pw_big]
            cur_h //= 2
            cur_w //= 2
        for blk in blocks:
            cin, cout = blk["w1"].shape[2], blk["w1"].shape[3]
            ops += [_banded_conv_weight(blk["w1"], cur_w, cin),
                    _lane_bias(blk["b1"], cur_w),
                    _banded_conv_weight(blk["w2"], cur_w, cout),
                    _lane_bias(blk["b2"], cur_w)]
            proj = blk["shortcut_w"] is not None
            if proj:
                ops.append(_blockdiag_weight(blk["shortcut_w"], cur_w, cin))
            conv_shapes += [(N, cur_h + 2, cur_w * cin), (N, cur_h + 2, cur_w * cout)]
            st["blocks"].append({"proj": proj})
            cur_c = cout
        plan["stages"].append(st)

    ops += [_gap_mat(cur_w, cur_c),
            jnp.asarray(params["head_w1"], jnp.float32),
            jnp.asarray(params["head_b1"], jnp.float32).reshape(1, -1),
            jnp.asarray(params["head_w2"], jnp.float32),
            jnp.asarray(params["head_b2"], jnp.float32).reshape(1, -1)]
    ops += [jnp.asarray(w, jnp.float32) for w in params["proj_ws"]]

    # De-dupe conv scratch shapes (reuse one buffer per distinct shape).
    scratch_shapes, scratch_index, conv_scratch_idx = [], {}, []
    for s in conv_shapes:
        if s not in scratch_index:
            scratch_index[s] = len(scratch_shapes)
            scratch_shapes.append(s)
        conv_scratch_idx.append(scratch_index[s])

    plan["conv_scratch_idx"] = conv_scratch_idx
    plan["scratch_shapes"] = scratch_shapes
    plan["n_proj"] = len(params["proj_ws"])
    plan["p0"] = params["head_w2"].shape[-1]
    plan["p_last"] = params["proj_ws"][-1].shape[-1]
    plan["n_ops"] = len(ops)
    return plan, ops


# --------------------------------- the fused kernel ---------------------------------- #

def _make_forward_kernel(plan):
    n_ops = plan["n_ops"]

    def kernel(*refs):
        x_ref = refs[0]
        op_refs = refs[1:1 + n_ops]
        f_ref, z_ref = refs[1 + n_ops], refs[2 + n_ops]
        scratch = refs[3 + n_ops:]

        op_it = iter(op_refs)
        sc_it = iter(plan["conv_scratch_idx"])

        def conv3x3(a, t_ref, b_ref):
            """3x3 SAME conv, lane-dense: a (N,H,W*Cin) -> (N,H,W*Cout)."""
            n, hh, lin = a.shape
            lout = t_ref.shape[-1]
            xp = scratch[next(sc_it)]                       # (n, hh+2, lin) f32 VMEM
            zrow = jnp.zeros((n, 1, lin), jnp.float32)
            xp[:, 0:1, :] = zrow                            # halo-only zero fill
            xp[:, hh + 1:hh + 2, :] = zrow
            xp[:, 1:hh + 1, :] = a
            acc = None
            for dh in range(3):
                slab = xp[:, dh:dh + hh, :].reshape(n * hh, lin).astype(jnp.bfloat16)
                d = jnp.dot(slab, t_ref[dh], preferred_element_type=jnp.float32)
                acc = d if acc is None else acc + d
            return acc.reshape(n, hh, lout) + b_ref[...]

        # --- stem: normalize + 3x3 conv --------------------------------------------
        mean_ref, inv_ref = next(op_it), next(op_it)
        stem_t, stem_b = next(op_it), next(op_it)
        h = conv3x3((x_ref[...] - mean_ref[...]) * inv_ref[...], stem_t, stem_b)

        # --- stages -----------------------------------------------------------------
        for st in plan["stages"]:
            if st["pool"]:
                ph_ref, pw_ref = next(op_it), next(op_it)
                n_, hh, l = h.shape
                h2 = jnp.dot(ph_ref[...], h.reshape(n_ * hh, l),
                             preferred_element_type=jnp.float32)
                h2 = jnp.dot(h2, pw_ref[...], preferred_element_type=jnp.float32)
                h = h2.reshape(n_, hh // 2, l // 2)
            for blk in st["blocks"]:
                t1, b1, t2, b2 = next(op_it), next(op_it), next(op_it), next(op_it)
                if blk["proj"]:
                    sc_ref = next(op_it)
                    n_, hh, lin = h.shape
                    lout = sc_ref.shape[-1]
                    sc = jnp.dot(h.reshape(n_ * hh, lin).astype(jnp.bfloat16),
                                 sc_ref[...],
                                 preferred_element_type=jnp.float32).reshape(n_, hh, lout)
                else:
                    sc = h
                t = conv3x3(_leaky(h), t1, b1)
                h = conv3x3(_leaky(t), t2, b2) + sc

        # --- LeakyReLU + global average pool + head MLP + projection MLP -------------
        gap_ref = next(op_it)
        hw1, hb1, hw2, hb2 = next(op_it), next(op_it), next(op_it), next(op_it)
        pooled = jnp.dot(jnp.mean(_leaky(h), axis=1), gap_ref[...],
                         preferred_element_type=jnp.float32)          # (N, C_last)
        f = _leaky(jnp.dot(pooled, hw1[...], preferred_element_type=jnp.float32)
                   + hb1[...])
        f = jnp.dot(f, hw2[...], preferred_element_type=jnp.float32) + hb2[...]
        z = f
        for i in range(plan["n_proj"]):
            pw = next(op_it)
            z = jnp.dot(z, pw[...], preferred_element_type=jnp.float32)
            if i < plan["n_proj"] - 1:
                z = _leaky(z)
        f_ref[...] = f.astype(f_ref.dtype)
        z_ref[...] = z.astype(z_ref.dtype)

    return kernel


# ---------------------------------- host-side wrapper --------------------------------- #

def build_resnet_forward(params, input_shape):
    """Prepare kernel operands once; return (jitted forward, operand list)."""
    N, _, H, W = input_shape
    plan, ops = _prepare_operands(params, N, H, W)
    kernel = _make_forward_kernel(plan)
    fused_call = pl.pallas_call(
        kernel,
        out_shape=(jax.ShapeDtypeStruct((N, plan["p0"]), jnp.float32),
                   jax.ShapeDtypeStruct((N, plan["p_last"]), jnp.float32)),
        scratch_shapes=[pltpu.VMEM(s, jnp.float32) for s in plan["scratch_shapes"]],
    )
    cp0, cin_img = plan["cp0"], params["norm_mean"].shape[-1]

    @jax.jit
    def forward(op_list, x_nchw):
        # NCHW (PyTorch) -> lane-dense (N, H, W*cp0), image channels zero-padded to cp0.
        x = jnp.transpose(x_nchw, (0, 2, 3, 1)).astype(jnp.float32)
        x = jnp.pad(x, ((0, 0), (0, 0), (0, 0), (0, cp0 - cin_img)))
        x = x.reshape(N, H, W * cp0)
        return fused_call(x, *op_list)

    return forward, ops


# ------------------------------------ parameters -------------------------------------- #

def init_params(key, layers, projection_layers, mean, std):
    keys = iter(jax.random.split(key, 64))

    def conv_w(k, kh, kw, cin, cout):
        # kaiming_normal_(mode='fan_in', nonlinearity='linear'): std = 1/sqrt(fan_in)
        s = (1.0 / (cin * kh * kw)) ** 0.5
        return jax.random.normal(k, (kh, kw, cin, cout), jnp.float32) * s

    def lin_w(k, din, dout):
        # nn.init.normal_(weight, 0.0, 0.01)
        return jax.random.normal(k, (din, dout), jnp.float32) * 0.01

    params = {
        "norm_mean": jnp.asarray(mean, jnp.float32),
        "norm_std": jnp.asarray(std, jnp.float32),
    }
    in_ch = layers[0][0]
    params["stem_w"] = conv_w(next(keys), 3, 3, 3, in_ch)
    params["stem_b"] = jnp.zeros((1, in_ch), jnp.float32)

    stages = []
    cur = in_ch
    for out_ch, num_blocks in layers:
        blocks = []
        for _ in range(num_blocks):
            blocks.append({
                "w1": conv_w(next(keys), 3, 3, cur, out_ch),
                "b1": jnp.zeros((1, out_ch), jnp.float32),
                "w2": conv_w(next(keys), 3, 3, out_ch, out_ch),
                "b2": jnp.zeros((1, out_ch), jnp.float32),
                "shortcut_w": (conv_w(next(keys), 1, 1, cur, out_ch).reshape(cur, out_ch)
                               if cur != out_ch else None),
            })
            cur = out_ch
        stages.append(blocks)
    params["stages"] = stages

    p0 = projection_layers[0]
    params["head_w1"] = lin_w(next(keys), cur, 2048)
    params["head_b1"] = jnp.zeros((1, 2048), jnp.float32)
    params["head_w2"] = lin_w(next(keys), 2048, p0)
    params["head_b2"] = jnp.zeros((1, p0), jnp.float32)
    params["proj_ws"] = [lin_w(next(keys), d0, d1)
                         for d0, d1 in zip(projection_layers[:-1], projection_layers[1:])]
    return params


# --------------------------------- pure-JAX reference --------------------------------- #

def _ref_conv(x, w, b=None):
    y = jax.lax.conv_general_dilated(
        x, w, window_strides=(1, 1), padding="SAME",
        dimension_numbers=("NHWC", "HWIO", "NHWC"))
    if b is not None:
        y = y + b.reshape(1, 1, 1, -1)
    return y


def ref_forward(params, x_nchw):
    x = jnp.transpose(x_nchw, (0, 2, 3, 1)).astype(jnp.float32)
    x = (x - params["norm_mean"]) / params["norm_std"]
    h = _ref_conv(x, params["stem_w"], params["stem_b"])
    for i, blocks in enumerate(params["stages"]):
        if i > 0:
            N_, H_, W_, C_ = h.shape
            h = h.reshape(N_, H_ // 2, 2, W_ // 2, 2, C_).mean(axis=(2, 4))
        for blk in blocks:
            sc = (jnp.einsum("nhwc,cd->nhwd", h, blk["shortcut_w"])
                  if blk["shortcut_w"] is not None else h)
            t = _ref_conv(_leaky(h), blk["w1"], blk["b1"])
            h = _ref_conv(_leaky(t), blk["w2"], blk["b2"]) + sc
    pooled = jnp.mean(_leaky(h), axis=(1, 2))
    f = _leaky(pooled @ params["head_w1"] + params["head_b1"])
    f = f @ params["head_w2"] + params["head_b2"]
    z = f
    nproj = len(params["proj_ws"])
    for i, w in enumerate(params["proj_ws"]):
        z = z @ w
        if i < nproj - 1:
            z = _leaky(z)
    return f, z


# -------------------------------------- main ------------------------------------------- #

if __name__ == "__main__":
    key = jax.random.PRNGKey(0)
    pkey, xkey = jax.random.split(key)

    # ResNet(layers=[(8,1),(16,1)], projection_layers=[32,64,16], mean, std)
    layers = [(8, 1), (16, 1)]
    projection_layers = [32, 64, 16]
    mean = [0.4914, 0.4822, 0.4465]
    std = [0.2470, 0.2435, 0.2616]

    params = init_params(pkey, layers, projection_layers, mean, std)

    # PyTorch-style NCHW input: batch=2, 3 channels, 16x16 spatial.
    x = jax.random.normal(xkey, (2, 3, 16, 16), jnp.float32)

    forward, ops = build_resnet_forward(params, x.shape)
    f, z = forward(ops, x)
    jax.block_until_ready((f, z))

    assert f.shape == (2, projection_layers[0]), f.shape
    assert z.shape == (2, projection_layers[-1]), z.shape

    f_ref, z_ref = ref_forward(params, x)
    assert jnp.max(jnp.abs(f - f_ref)) < 1e-3, float(jnp.max(jnp.abs(f - f_ref)))
    assert jnp.max(jnp.abs(z - z_ref)) < 1e-3, float(jnp.max(jnp.abs(z - z_ref)))

    print("KERNEL_OK")
</pallas_src>

<mosaic_0001>
module attributes {stable_mosaic.version = 11 : i64} {
  func.func @kernel(%arg0: memref<2x16x128xf32, #tpu.memory_space<vmem>>, %arg1: memref<1x1x128xf32, #tpu.memory_space<vmem>>, %arg2: memref<1x1x128xf32, #tpu.memory_space<vmem>>, %arg3: memref<3x128x128xbf16, #tpu.memory_space<vmem>>, %arg4: memref<1x1x128xf32, #tpu.memory_space<vmem>>, %arg5: memref<3x128x128xbf16, #tpu.memory_space<vmem>>, %arg6: memref<1x1x128xf32, #tpu.memory_space<vmem>>, %arg7: memref<3x128x128xbf16, #tpu.memory_space<vmem>>, %arg8: memref<1x1x128xf32, #tpu.memory_space<vmem>>, %arg9: memref<16x32xf32, #tpu.memory_space<vmem>>, %arg10: memref<128x64xf32, #tpu.memory_space<vmem>>, %arg11: memref<3x64x128xbf16, #tpu.memory_space<vmem>>, %arg12: memref<1x1x128xf32, #tpu.memory_space<vmem>>, %arg13: memref<3x128x128xbf16, #tpu.memory_space<vmem>>, %arg14: memref<1x1x128xf32, #tpu.memory_space<vmem>>, %arg15: memref<64x128xbf16, #tpu.memory_space<vmem>>, %arg16: memref<128x16xf32, #tpu.memory_space<vmem>>, %arg17: memref<16x2048xf32, #tpu.memory_space<vmem>>, %arg18: memref<1x2048xf32, #tpu.memory_space<vmem>>, %arg19: memref<2048x32xf32, #tpu.memory_space<vmem>>, %arg20: memref<1x32xf32, #tpu.memory_space<vmem>>, %arg21: memref<32x64xf32, #tpu.memory_space<vmem>>, %arg22: memref<64x16xf32, #tpu.memory_space<vmem>>, %arg23: memref<2x32xf32, #tpu.memory_space<vmem>>, %arg24: memref<2x16xf32, #tpu.memory_space<vmem>>, %arg25: memref<2x18x128xf32, #tpu.memory_space<vmem>>, %arg26: memref<2x10x64xf32, #tpu.memory_space<vmem>>, %arg27: memref<2x10x128xf32, #tpu.memory_space<vmem>>) attributes {dimension_semantics = [], scalar_prefetch = 0 : i64, scratch_operands = 3 : i64, tpu.core_type = #tpu.core_type<tc>} {
    %c0 = arith.constant 0 : index
    %c0_0 = arith.constant 0 : index
    %c0_1 = arith.constant 0 : index
    %0 = vector.load %arg0[%c0, %c0_0, %c0_1] : memref<2x16x128xf32, #tpu.memory_space<vmem>>, vector<2x16x128xf32>
    %c0_2 = arith.constant 0 : index
    %c0_3 = arith.constant 0 : index
    %c0_4 = arith.constant 0 : index
    %1 = vector.load %arg1[%c0_2, %c0_3, %c0_4] : memref<1x1x128xf32, #tpu.memory_space<vmem>>, vector<1x1x128xf32>
    %2 = vector.broadcast %1 : vector<1x1x128xf32> to vector<2x16x128xf32>
    %3 = arith.subf %0, %2 : vector<2x16x128xf32>
    %c0_5 = arith.constant 0 : index
    %c0_6 = arith.constant 0 : index
    %c0_7 = arith.constant 0 : index
    %4 = vector.load %arg2[%c0_5, %c0_6, %c0_7] : memref<1x1x128xf32, #tpu.memory_space<vmem>>, vector<1x1x128xf32>
    %5 = vector.broadcast %4 : vector<1x1x128xf32> to vector<2x16x128xf32>
    %6 = arith.mulf %3, %5 : vector<2x16x128xf32>
    %cst = arith.constant 0.000000e+00 : f32
    %7 = vector.broadcast %cst : f32 to vector<2x1x128xf32>
    %c0_8 = arith.constant 0 : index
    %c0_9 = arith.constant 0 : index
    %c0_10 = arith.constant 0 : index
    %8 = vector.load %arg25[%c0_8, %c0_9, %c0_10] : memref<2x18x128xf32, #tpu.memory_space<vmem>>, vector<2x1x128xf32>
    tpu.vector_store %arg25[%c0_8, %c0_9, %c0_10], %7 {strides = array<i32>} : memref<2x18x128xf32, #tpu.memory_space<vmem>>, vector<2x1x128xf32>,
    %c0_11 = arith.constant 0 : index
    %c17 = arith.constant 17 : index
    %c0_12 = arith.constant 0 : index
    %9 = vector.load %arg25[%c0_11, %c17, %c0_12] : memref<2x18x128xf32, #tpu.memory_space<vmem>>, vector<2x1x128xf32>
    tpu.vector_store %arg25[%c0_11, %c17, %c0_12], %7 {strides = array<i32>} : memref<2x18x128xf32, #tpu.memory_space<vmem>>, vector<2x1x128xf32>,
    %c0_13 = arith.constant 0 : index
    %c1 = arith.constant 1 : index
    %c0_14 = arith.constant 0 : index
    %10 = vector.load %arg25[%c0_13, %c1, %c0_14] : memref<2x18x128xf32, #tpu.memory_space<vmem>>, vector<2x16x128xf32>
    tpu.vector_store %arg25[%c0_13, %c1, %c0_14], %6 {strides = array<i32>} : memref<2x18x128xf32, #tpu.memory_space<vmem>>, vector<2x16x128xf32>,
    %c0_15 = arith.constant 0 : index
    %c0_16 = arith.constant 0 : index
    %c0_17 = arith.constant 0 : index
    %11 = vector.load %arg25[%c0_15, %c0_16, %c0_17] : memref<2x18x128xf32, #tpu.memory_space<vmem>>, vector<2x16x128xf32>
    %12 = vector.shape_cast %11 : vector<2x16x128xf32> to vector<32x128xf32>
    %13 = arith.truncf %12 : vector<32x128xf32> to vector<32x128xbf16>
    %c0_18 = arith.constant 0 : index
    %c0_19 = arith.constant 0 : index
    %c0_20 = arith.constant 0 : index
    %14 = vector.load %arg3[%c0_18, %c0_19, %c0_20] : memref<3x128x128xbf16, #tpu.memory_space<vmem>>, vector<1x128x128xbf16>
    %15 = vector.shape_cast %14 : vector<1x128x128xbf16> to vector<128x128xbf16>
    %cst_21 = arith.constant dense<0.000000e+00> : vector<32x128xf32>
    %16 = tpu.matmul %13, %15, %cst_21 {dimension_numbers = #tpu.dot_dimension_numbers<[1], [0], [0], [1], [0, 0, 1, 1], [], []>} : vector<32x128xbf16>, vector<128x128xbf16>, vector<32x128xf32> -> vector<32x128xf32>
    %c0_22 = arith.constant 0 : index
    %c1_23 = arith.constant 1 : index
    %c0_24 = arith.constant 0 : index
    %17 = vector.load %arg25[%c0_22, %c1_23, %c0_24] : memref<2x18x128xf32, #tpu.memory_space<vmem>>, vector<2x16x128xf32>
    %18 = vector.shape_cast %17 : vector<2x16x128xf32> to vector<32x128xf32>
    %19 = arith.truncf %18 : vector<32x128xf32> to vector<32x128xbf16>
    %c1_25 = arith.constant 1 : index
    %c0_26 = arith.constant 0 : index
    %c0_27 = arith.constant 0 : index
    %20 = vector.load %arg3[%c1_25, %c0_26, %c0_27] : memref<3x128x128xbf16, #tpu.memory_space<vmem>>, vector<1x128x128xbf16>
    %21 = vector.shape_cast %20 : vector<1x128x128xbf16> to vector<128x128xbf16>
    %cst_28 = arith.constant dense<0.000000e+00> : vector<32x128xf32>
    %22 = tpu.matmul %19, %21, %cst_28 {dimension_numbers = #tpu.dot_dimension_numbers<[1], [0], [0], [1], [0, 0, 1, 1], [], []>} : vector<32x128xbf16>, vector<128x128xbf16>, vector<32x128xf32> -> vector<32x128xf32>
    %23 = arith.addf %16, %22 : vector<32x128xf32>
    %c0_29 = arith.constant 0 : index
    %c2 = arith.constant 2 : index
    %c0_30 = arith.constant 0 : index
    %24 = vector.load %arg25[%c0_29, %c2, %c0_30] : memref<2x18x128xf32, #tpu.memory_space<vmem>>, vector<2x16x128xf32>
    %25 = vector.shape_cast %24 : vector<2x16x128xf32> to vector<32x128xf32>
    %26 = arith.truncf %25 : vector<32x128xf32> to vector<32x128xbf16>
    %c2_31 = arith.constant 2 : index
    %c0_32 = arith.constant 0 : index
    %c0_33 = arith.constant 0 : index
    %27 = vector.load %arg3[%c2_31, %c0_32, %c0_33] : memref<3x128x128xbf16, #tpu.memory_space<vmem>>, vector<1x128x128xbf16>
    %28 = vector.shape_cast %27 : vector<1x128x128xbf16> to vector<128x128xbf16>
    %cst_34 = arith.constant dense<0.000000e+00> : vector<32x128xf32>
    %29 = tpu.matmul %26, %28, %cst_34 {dimension_numbers = #tpu.dot_dimension_numbers<[1], [0], [0], [1], [0, 0, 1, 1], [], []>} : vector<32x128xbf16>, vector<128x128xbf16>, vector<32x128xf32> -> vector<32x128xf32>
    %30 = arith.addf %23, %29 : vector<32x128xf32>
    %31 = vector.shape_cast %30 : vector<32x128xf32> to vector<2x16x128xf32>
    %c0_35 = arith.constant 0 : index
    %c0_36 = arith.constant 0 : index
    %c0_37 = arith.constant 0 : index
    %32 = vector.load %arg4[%c0_35, %c0_36, %c0_37] : memref<1x1x128xf32, #tpu.memory_space<vmem>>, vector<1x1x128xf32>
    %33 = vector.broadcast %32 : vector<1x1x128xf32> to vector<2x16x128xf32>
    %34 = arith.addf %31, %33 : vector<2x16x128xf32>
    %cst_38 = arith.constant 0.000000e+00 : f32
    %35 = vector.broadcast %cst_38 : f32 to vector<2x16x128xf32>
    %36 = arith.cmpf ogt, %34, %35 : vector<2x16x128xf32>
    %cst_39 = arith.constant 2.000000e-01 : f32
    %37 = vector.broadcast %cst_39 : f32 to vector<2x16x128xf32>
    %38 = arith.mulf %37, %34 : vector<2x16x128xf32>
    %39 = arith.select %36, %34, %38 : vector<2x16x128xi1>, vector<2x16x128xf32>
    %cst_40 = arith.constant 0.000000e+00 : f32
    %40 = vector.broadcast %cst_40 : f32 to vector<2x1x128xf32>
    %c0_41 = arith.constant 0 : index
    %c0_42 = arith.constant 0 : index
    %c0_43 = arith.constant 0 : index
    %41 = vector.load %arg25[%c0_41, %c0_42, %c0_43] : memref<2x18x128xf32, #tpu.memory_space<vmem>>, vector<2x1x128xf32>
    tpu.vector_store %arg25[%c0_41, %c0_42, %c0_43], %40 {strides = array<i32>} : memref<2x18x128xf32, #tpu.memory_space<vmem>>, vector<2x1x128xf32>,
    %c0_44 = arith.constant 0 : index
    %c17_45 = arith.constant 17 : index
    %c0_46 = arith.constant 0 : index
    %42 = vector.load %arg25[%c0_44, %c17_45, %c0_46] : memref<2x18x128xf32, #tpu.memory_space<vmem>>, vector<2x1x128xf32>
    tpu.vector_store %arg25[%c0_44, %c17_45, %c0_46], %40 {strides = array<i32>} : memref<2x18x128xf32, #tpu.memory_space<vmem>>, vector<2x1x128xf32>,
    %c0_47 = arith.constant 0 : index
    %c1_48 = arith.constant 1 : index
    %c0_49 = arith.constant 0 : index
    %43 = vector.load %arg25[%c0_47, %c1_48, %c0_49] : memref<2x18x128xf32, #tpu.memory_space<vmem>>, vector<2x16x128xf32>
    tpu.vector_store %arg25[%c0_47, %c1_48, %c0_49], %39 {strides = array<i32>} : memref<2x18x128xf32, #tpu.memory_space<vmem>>, vector<2x16x128xf32>,
    %c0_50 = arith.constant 0 : index
    %c0_51 = arith.constant 0 : index
    %c0_52 = arith.constant 0 : index
    %44 = vector.load %arg25[%c0_50, %c0_51, %c0_52] : memref<2x18x128xf32, #tpu.memory_space<vmem>>, vector<2x16x128xf32>
    %45 = vector.shape_cast %44 : vector<2x16x128xf32> to vector<32x128xf32>
    %46 = arith.truncf %45 : vector<32x128xf32> to vector<32x128xbf16>
    %c0_53 = arith.constant 0 : index
    %c0_54 = arith.constant 0 : index
    %c0_55 = arith.constant 0 : index
    %47 = vector.load %arg5[%c0_53, %c0_54, %c0_55] : memref<3x128x128xbf16, #tpu.memory_space<vmem>>, vector<1x128x128xbf16>
    %48 = vector.shape_cast %47 : vector<1x128x128xbf16> to vector<128x128xbf16>
    %cst_56 = arith.constant dense<0.000000e+00> : vector<32x128xf32>
    %49 = tpu.matmul %46, %48, %cst_56 {dimension_numbers = #tpu.dot_dimension_numbers<[1], [0], [0], [1], [0, 0, 1, 1], [], []>} : vector<32x128xbf16>, vector<128x128xbf16>, vector<32x128xf32> -> vector<32x128xf32>
    %c0_57 = arith.constant 0 : index
    %c1_58 = arith.constant 1 : index
    %c0_59 = arith.constant 0 : index
    %50 = vector.load %arg25[%c0_57, %c1_58, %c0_59] : memref<2x18x128xf32, #tpu.memory_space<vmem>>, vector<2x16x128xf32>
    %51 = vector.shape_cast %50 : vector<2x16x128xf32> to vector<32x128xf32>
    %52 = arith.truncf %51 : vector<32x128xf32> to vector<32x128xbf16>
    %c1_60 = arith.constant 1 : index
    %c0_61 = arith.constant 0 : index
    %c0_62 = arith.constant 0 : index
    %53 = vector.load %arg5[%c1_60, %c0_61, %c0_62] : memref<3x128x128xbf16, #tpu.memory_space<vmem>>, vector<1x128x128xbf16>
    %54 = vector.shape_cast %53 : vector<1x128x128xbf16> to vector<128x128xbf16>
    %cst_63 = arith.constant dense<0.000000e+00> : vector<32x128xf32>
    %55 = tpu.matmul %52, %54, %cst_63 {dimension_numbers = #tpu.dot_dimension_numbers<[1], [0], [0], [1], [0, 0, 1, 1], [], []>} : vector<32x128xbf16>, vector<128x128xbf16>, vector<32x128xf32> -> vector<32x128xf32>
    %56 = arith.addf %49, %55 : vector<32x128xf32>
    %c0_64 = arith.constant 0 : index
    %c2_65 = arith.constant 2 : index
    %c0_66 = arith.constant 0 : index
    %57 = vector.load %arg25[%c0_64, %c2_65, %c0_66] : memref<2x18x128xf32, #tpu.memory_space<vmem>>, vector<2x16x128xf32>
    %58 = vector.shape_cast %57 : vector<2x16x128xf32> to vector<32x128xf32>
    %59 = arith.truncf %58 : vector<32x128xf32> to vector<32x128xbf16>
    %c2_67 = arith.constant 2 : index
    %c0_68 = arith.constant 0 : index
    %c0_69 = arith.constant 0 : index
    %60 = vector.load %arg5[%c2_67, %c0_68, %c0_69] : memref<3x128x128xbf16, #tpu.memory_space<vmem>>, vector<1x128x128xbf16>
    %61 = vector.shape_cast %60 : vector<1x128x128xbf16> to vector<128x128xbf16>
    %cst_70 = arith.constant dense<0.000000e+00> : vector<32x128xf32>
    %62 = tpu.matmul %59, %61, %cst_70 {dimension_numbers = #tpu.dot_dimension_numbers<[1], [0], [0], [1], [0, 0, 1, 1], [], []>} : vector<32x128xbf16>, vector<128x128xbf16>, vector<32x128xf32> -> vector<32x128xf32>
    %63 = arith.addf %56, %62 : vector<32x128xf32>
    %64 = vector.shape_cast %63 : vector<32x128xf32> to vector<2x16x128xf32>
    %c0_71 = arith.constant 0 : index
    %c0_72 = arith.constant 0 : index
    %c0_73 = arith.constant 0 : index
    %65 = vector.load %arg6[%c0_71, %c0_72, %c0_73] : memref<1x1x128xf32, #tpu.memory_space<vmem>>, vector<1x1x128xf32>
    %66 = vector.broadcast %65 : vector<1x1x128xf32> to vector<2x16x128xf32>
    %67 = arith.addf %64, %66 : vector<2x16x128xf32>
    %cst_74 = arith.constant 0.000000e+00 : f32
    %68 = vector.broadcast %cst_74 : f32 to vector<2x16x128xf32>
    %69 = arith.cmpf ogt, %67, %68 : vector<2x16x128xf32>
    %cst_75 = arith.constant 2.000000e-01 : f32
    %70 = vector.broadcast %cst_75 : f32 to vector<2x16x128xf32>
    %71 = arith.mulf %70, %67 : vector<2x16x128xf32>
    %72 = arith.select %69, %67, %71 : vector<2x16x128xi1>, vector<2x16x128xf32>
    %cst_76 = arith.constant 0.000000e+00 : f32
    %73 = vector.broadcast %cst_76 : f32 to vector<2x1x128xf32>
    %c0_77 = arith.constant 0 : index
    %c0_78 = arith.constant 0 : index
    %c0_79 = arith.constant 0 : index
    %74 = vector.load %arg25[%c0_77, %c0_78, %c0_79] : memref<2x18x128xf32, #tpu.memory_space<vmem>>, vector<2x1x128xf32>
    tpu.vector_store %arg25[%c0_77, %c0_78, %c0_79], %73 {strides = array<i32>} : memref<2x18x128xf32, #tpu.memory_space<vmem>>, vector<2x1x128xf32>,
    %c0_80 = arith.constant 0 : index
    %c17_81 = arith.constant 17 : index
    %c0_82 = arith.constant 0 : index
    %75 = vector.load %arg25[%c0_80, %c17_81, %c0_82] : memref<2x18x128xf32, #tpu.memory_space<vmem>>, vector<2x1x128xf32>
    tpu.vector_store %arg25[%c0_80, %c17_81, %c0_82], %73 {strides = array<i32>} : memref<2x18x128xf32, #tpu.memory_space<vmem>>, vector<2x1x128xf32>,
    %c0_83 = arith.constant 0 : index
    %c1_84 = arith.constant 1 : index
    %c0_85 = arith.constant 0 : index
    %76 = vector.load %arg25[%c0_83, %c1_84, %c0_85] : memref<2x18x128xf32, #tpu.memory_space<vmem>>, vector<2x16x128xf32>
    tpu.vector_store %arg25[%c0_83, %c1_84, %c0_85], %72 {strides = array<i32>} : memref<2x18x128xf32, #tpu.memory_space<vmem>>, vector<2x16x128xf32>,
    %c0_86 = arith.constant 0 : index
    %c0_87 = arith.constant 0 : index
    %c0_88 = arith.constant 0 : index
    %77 = vector.load %arg25[%c0_86, %c0_87, %c0_88] : memref<2x18x128xf32, #tpu.memory_space<vmem>>, vector<2x16x128xf32>
    %78 = vector.shape_cast %77 : vector<2x16x128xf32> to vector<32x128xf32>
    %79 = arith.truncf %78 : vector<32x128xf32> to vector<32x128xbf16>
    %c0_89 = arith.constant 0 : index
    %c0_90 = arith.constant 0 : index
    %c0_91 = arith.constant 0 : index
    %80 = vector.load %arg7[%c0_89, %c0_90, %c0_91] : memref<3x128x128xbf16, #tpu.memory_space<vmem>>, vector<1x128x128xbf16>
    %81 = vector.shape_cast %80 : vector<1x128x128xbf16> to vector<128x128xbf16>
    %cst_92 = arith.constant dense<0.000000e+00> : vector<32x128xf32>
    %82 = tpu.matmul %79, %81, %cst_92 {dimension_numbers = #tpu.dot_dimension_numbers<[1], [0], [0], [1], [0, 0, 1, 1], [], []>} : vector<32x128xbf16>, vector<128x128xbf16>, vector<32x128xf32> -> vector<32x128xf32>
    %c0_93 = arith.constant 0 : index
    %c1_94 = arith.constant 1 : index
    %c0_95 = arith.constant 0 : index
    %83 = vector.load %arg25[%c0_93, %c1_94, %c0_95] : memref<2x18x128xf32, #tpu.memory_space<vmem>>, vector<2x16x128xf32>
    %84 = vector.shape_cast %83 : vector<2x16x128xf32> to vector<32x128xf32>
    %85 = arith.truncf %84 : vector<32x128xf32> to vector<32x128xbf16>
    %c1_96 = arith.constant 1 : index
    %c0_97 = arith.constant 0 : index
    %c0_98 = arith.constant 0 : index
    %86 = vector.load %arg7[%c1_96, %c0_97, %c0_98] : memref<3x128x128xbf16, #tpu.memory_space<vmem>>, vector<1x128x128xbf16>
    %87 = vector.shape_cast %86 : vector<1x128x128xbf16> to vector<128x128xbf16>
    %cst_99 = arith.constant dense<0.000000e+00> : vector<32x128xf32>
    %88 = tpu.matmul %85, %87, %cst_99 {dimension_numbers = #tpu.dot_dimension_numbers<[1], [0], [0], [1], [0, 0, 1, 1], [], []>} : vector<32x128xbf16>, vector<128x128xbf16>, vector<32x128xf32> -> vector<32x128xf32>
    %89 = arith.addf %82, %88 : vector<32x128xf32>
    %c0_100 = arith.constant 0 : index
    %c2_101 = arith.constant 2 : index
    %c0_102 = arith.constant 0 : index
    %90 = vector.load %arg25[%c0_100, %c2_101, %c0_102] : memref<2x18x128xf32, #tpu.memory_space<vmem>>, vector<2x16x128xf32>
    %91 = vector.shape_cast %90 : vector<2x16x128xf32> to vector<32x128xf32>
    %92 = arith.truncf %91 : vector<32x128xf32> to vector<32x128xbf16>
    %c2_103 = arith.constant 2 : index
    %c0_104 = arith.constant 0 : index
    %c0_105 = arith.constant 0 : index
    %93 = vector.load %arg7[%c2_103, %c0_104, %c0_105] : memref<3x128x128xbf16, #tpu.memory_space<vmem>>, vector<1x128x128xbf16>
    %94 = vector.shape_cast %93 : vector<1x128x128xbf16> to vector<128x128xbf16>
    %cst_106 = arith.constant dense<0.000000e+00> : vector<32x128xf32>
    %95 = tpu.matmul %92, %94, %cst_106 {dimension_numbers = #tpu.dot_dimension_numbers<[1], [0], [0], [1], [0, 0, 1, 1], [], []>} : vector<32x128xbf16>, vector<128x128xbf16>, vector<32x128xf32> -> vector<32x128xf32>
    %96 = arith.addf %89, %95 : vector<32x128xf32>
    %97 = vector.shape_cast %96 : vector<32x128xf32> to vector<2x16x128xf32>
    %c0_107 = arith.constant 0 : index
    %c0_108 = arith.constant 0 : index
    %c0_109 = arith.constant 0 : index
    %98 = vector.load %arg8[%c0_107, %c0_108, %c0_109] : memref<1x1x128xf32, #tpu.memory_space<vmem>>, vector<1x1x128xf32>
    %99 = vector.broadcast %98 : vector<1x1x128xf32> to vector<2x16x128xf32>
    %100 = arith.addf %97, %99 : vector<2x16x128xf32>
    %101 = arith.addf %100, %34 : vector<2x16x128xf32>
    %c0_110 = arith.constant 0 : index
    %c0_111 = arith.constant 0 : index
    %102 = vector.load %arg9[%c0_110, %c0_111] : memref<16x32xf32, #tpu.memory_space<vmem>>, vector<16x32xf32>
    %103 = vector.shape_cast %101 : vector<2x16x128xf32> to vector<32x128xf32>
    %cst_112 = arith.constant dense<0.000000e+00> : vector<16x128xf32>
    %104 = tpu.matmul %102, %103, %cst_112 {dimension_numbers = #tpu.dot_dimension_numbers<[1], [0], [0], [1], [0, 0, 1, 1], [], []>} : vector<16x32xf32>, vector<32x128xf32>, vector<16x128xf32> -> vector<16x128xf32>
    %c0_113 = arith.constant 0 : index
    %c0_114 = arith.constant 0 : index
    %105 = vector.load %arg10[%c0_113, %c0_114] : memref<128x64xf32, #tpu.memory_space<vmem>>, vector<128x64xf32>
    %cst_115 = arith.constant dense<0.000000e+00> : vector<16x64xf32>
    %106 = tpu.matmul %104, %105, %cst_115 {dimension_numbers = #tpu.dot_dimension_numbers<[1], [0], [0], [1], [0, 0, 1, 1], [], []>} : vector<16x128xf32>, vector<128x64xf32>, vector<16x64xf32> -> vector<16x64xf32>
    %107 = vector.shape_cast %106 : vector<16x64xf32> to vector<2x8x64xf32>
    %108 = vector.shape_cast %107 : vector<2x8x64xf32> to vector<16x64xf32>
    %109 = arith.truncf %108 : vector<16x64xf32> to vector<16x64xbf16>
    %c0_116 = arith.constant 0 : index
    %c0_117 = arith.constant 0 : index
    %110 = vector.load %arg15[%c0_116, %c0_117] : memref<64x128xbf16, #tpu.memory_space<vmem>>, vector<64x128xbf16>
    %cst_118 = arith.constant dense<0.000000e+00> : vector<16x128xf32>
    %111 = tpu.matmul %109, %110, %cst_118 {dimension_numbers = #tpu.dot_dimension_numbers<[1], [0], [0], [1], [0, 0, 1, 1], [], []>} : vector<16x64xbf16>, vector<64x128xbf16>, vector<16x128xf32> -> vector<16x128xf32>
    %112 = vector.shape_cast %111 : vector<16x128xf32> to vector<2x8x128xf32>
    %cst_119 = arith.constant 0.000000e+00 : f32
    %113 = vector.broadcast %cst_119 : f32 to vector<2x8x64xf32>
    %114 = arith.cmpf ogt, %107, %113 : vector<2x8x64xf32>
    %cst_120 = arith.constant 2.000000e-01 : f32
    %115 = vector.broadcast %cst_120 : f32 to vector<2x8x64xf32>
    %116 = arith.mulf %115, %107 : vector<2x8x64xf32>
    %117 = arith.select %114, %107, %116 : vector<2x8x64xi1>, vector<2x8x64xf32>
    %cst_121 = arith.constant 0.000000e+00 : f32
    %118 = vector.broadcast %cst_121 : f32 to vector<2x1x64xf32>
    %c0_122 = arith.constant 0 : index
    %c0_123 = arith.constant 0 : index
    %c0_124 = arith.constant 0 : index
    %119 = vector.load %arg26[%c0_122, %c0_123, %c0_124] : memref<2x10x64xf32, #tpu.memory_space<vmem>>, vector<2x1x64xf32>
    tpu.vector_store %arg26[%c0_122, %c0_123, %c0_124], %118 {strides = array<i32>} : memref<2x10x64xf32, #tpu.memory_space<vmem>>, vector<2x1x64xf32>,
    %c0_125 = arith.constant 0 : index
    %c9 = arith.constant 9 : index
    %c0_126 = arith.constant 0 : index
    %120 = vector.load %arg26[%c0_125, %c9, %c0_126] : memref<2x10x64xf32, #tpu.memory_space<vmem>>, vector<2x1x64xf32>
    tpu.vector_store %arg26[%c0_125, %c9, %c0_126], %118 {strides = array<i32>} : memref<2x10x64xf32, #tpu.memory_space<vmem>>, vector<2x1x64xf32>,
    %c0_127 = arith.constant 0 : index
    %c1_128 = arith.constant 1 : index
    %c0_129 = arith.constant 0 : index
    %121 = vector.load %arg26[%c0_127, %c1_128, %c0_129] : memref<2x10x64xf32, #tpu.memory_space<vmem>>, vector<2x8x64xf32>
    tpu.vector_store %arg26[%c0_127, %c1_128, %c0_129], %117 {strides = array<i32>} : memref<2x10x64xf32, #tpu.memory_space<vmem>>, vector<2x8x64xf32>,
    %c0_130 = arith.constant 0 : index
    %c0_131 = arith.constant 0 : index
    %c0_132 = arith.constant 0 : index
    %122 = vector.load %arg26[%c0_130, %c0_131, %c0_132] : memref<2x10x64xf32, #tpu.memory_space<vmem>>, vector<2x8x64xf32>
    %123 = vector.shape_cast %122 : vector<2x8x64xf32> to vector<16x64xf32>
    %124 = arith.truncf %123 : vector<16x64xf32> to vector<16x64xbf16>
    %c0_133 = arith.constant 0 : index
    %c0_134 = arith.constant 0 : index
    %c0_135 = arith.constant 0 : index
    %125 = vector.load %arg11[%c0_133, %c0_134, %c0_135] : memref<3x64x128xbf16, #tpu.memory_space<vmem>>, vector<1x64x128xbf16>
    %126 = vector.shape_cast %125 : vector<1x64x128xbf16> to vector<64x128xbf16>
    %cst_136 = arith.constant dense<0.000000e+00> : vector<16x128xf32>
    %127 = tpu.matmul %124, %126, %cst_136 {dimension_numbers = #tpu.dot_dimension_numbers<[1], [0], [0], [1], [0, 0, 1, 1], [], []>} : vector<16x64xbf16>, vector<64x128xbf16>, vector<16x128xf32> -> vector<16x128xf32>
    %c0_137 = arith.constant 0 : index
    %c1_138 = arith.constant 1 : index
    %c0_139 = arith.constant 0 : index
    %128 = vector.load %arg26[%c0_137, %c1_138, %c0_139] : memref<2x10x64xf32, #tpu.memory_space<vmem>>, vector<2x8x64xf32>
    %129 = vector.shape_cast %128 : vector<2x8x64xf32> to vector<16x64xf32>
    %130 = arith.truncf %129 : vector<16x64xf32> to vector<16x64xbf16>
    %c1_140 = arith.constant 1 : index
    %c0_141 = arith.constant 0 : index
    %c0_142 = arith.constant 0 : index
    %131 = vector.load %arg11[%c1_140, %c0_141, %c0_142] : memref<3x64x128xbf16, #tpu.memory_space<vmem>>, vector<1x64x128xbf16>
    %132 = vector.shape_cast %131 : vector<1x64x128xbf16> to vector<64x128xbf16>
    %cst_143 = arith.constant dense<0.000000e+00> : vector<16x128xf32>
    %133 = tpu.matmul %130, %132, %cst_143 {dimension_numbers = #tpu.dot_dimension_numbers<[1], [0], [0], [1], [0, 0, 1, 1], [], []>} : vector<16x64xbf16>, vector<64x128xbf16>, vector<16x128xf32> -> vector<16x128xf32>
    %134 = arith.addf %127, %133 : vector<16x128xf32>
    %c0_144 = arith.constant 0 : index
    %c2_145 = arith.constant 2 : index
    %c0_146 = arith.constant 0 : index
    %135 = vector.load %arg26[%c0_144, %c2_145, %c0_146] : memref<2x10x64xf32, #tpu.memory_space<vmem>>, vector<2x8x64xf32>
    %136 = vector.shape_cast %135 : vector<2x8x64xf32> to vector<16x64xf32>
    %137 = arith.truncf %136 : vector<16x64xf32> to vector<16x64xbf16>
    %c2_147 = arith.constant 2 : index
    %c0_148 = arith.constant 0 : index
    %c0_149 = arith.constant 0 : index
    %138 = vector.load %arg11[%c2_147, %c0_148, %c0_149] : memref<3x64x128xbf16, #tpu.memory_space<vmem>>, vector<1x64x128xbf16>
    %139 = vector.shape_cast %138 : vector<1x64x128xbf16> to vector<64x128xbf16>
    %cst_150 = arith.constant dense<0.000000e+00> : vector<16x128xf32>
    %140 = tpu.matmul %137, %139, %cst_150 {dimension_numbers = #tpu.dot_dimension_numbers<[1], [0], [0], [1], [0, 0, 1, 1], [], []>} : vector<16x64xbf16>, vector<64x128xbf16>, vector<16x128xf32> -> vector<16x128xf32>
    %141 = arith.addf %134, %140 : vector<16x128xf32>
    %142 = vector.shape_cast %141 : vector<16x128xf32> to vector<2x8x128xf32>
    %c0_151 = arith.constant 0 : index
    %c0_152 = arith.constant 0 : index
    %c0_153 = arith.constant 0 : index
    %143 = vector.load %arg12[%c0_151, %c0_152, %c0_153] : memref<1x1x128xf32, #tpu.memory_space<vmem>>, vector<1x1x128xf32>
    %144 = vector.broadcast %143 : vector<1x1x128xf32> to vector<2x8x128xf32>
    %145 = arith.addf %142, %144 : vector<2x8x128xf32>
    %cst_154 = arith.constant 0.000000e+00 : f32
    %146 = vector.broadcast %cst_154 : f32 to vector<2x8x128xf32>
    %147 = arith.cmpf ogt, %145, %146 : vector<2x8x128xf32>
    %cst_155 = arith.constant 2.000000e-01 : f32
    %148 = vector.broadcast %cst_155 : f32 to vector<2x8x128xf32>
    %149 = arith.mulf %148, %145 : vector<2x8x128xf32>
    %150 = arith.select %147, %145, %149 : vector<2x8x128xi1>, vector<2x8x128xf32>
    %cst_156 = arith.constant 0.000000e+00 : f32
    %151 = vector.broadcast %cst_156 : f32 to vector<2x1x128xf32>
    %c0_157 = arith.constant 0 : index
    %c0_158 = arith.constant 0 : index
    %c0_159 = arith.constant 0 : index
    %152 = vector.load %arg27[%c0_157, %c0_158, %c0_159] : memref<2x10x128xf32, #tpu.memory_space<vmem>>, vector<2x1x128xf32>
    tpu.vector_store %arg27[%c0_157, %c0_158, %c0_159], %151 {strides = array<i32>} : memref<2x10x128xf32, #tpu.memory_space<vmem>>, vector<2x1x128xf32>,
    %c0_160 = arith.constant 0 : index
    %c9_161 = arith.constant 9 : index
    %c0_162 = arith.constant 0 : index
    %153 = vector.load %arg27[%c0_160, %c9_161, %c0_162] : memref<2x10x128xf32, #tpu.memory_space<vmem>>, vector<2x1x128xf32>
    tpu.vector_store %arg27[%c0_160, %c9_161, %c0_162], %151 {strides = array<i32>} : memref<2x10x128xf32, #tpu.memory_space<vmem>>, vector<2x1x128xf32>,
    %c0_163 = arith.constant 0 : index
    %c1_164 = arith.constant 1 : index
    %c0_165 = arith.constant 0 : index
    %154 = vector.load %arg27[%c0_163, %c1_164, %c0_165] : memref<2x10x128xf32, #tpu.memory_space<vmem>>, vector<2x8x128xf32>
    tpu.vector_store %arg27[%c0_163, %c1_164, %c0_165], %150 {strides = array<i32>} : memref<2x10x128xf32, #tpu.memory_space<vmem>>, vector<2x8x128xf32>,
    %c0_166 = arith.constant 0 : index
    %c0_167 = arith.constant 0 : index
    %c0_168 = arith.constant 0 : index
    %155 = vector.load %arg27[%c0_166, %c0_167, %c0_168] : memref<2x10x128xf32, #tpu.memory_space<vmem>>, vector<2x8x128xf32>
    %156 = vector.shape_cast %155 : vector<2x8x128xf32> to vector<16x128xf32>
    %157 = arith.truncf %156 : vector<16x128xf32> to vector<16x128xbf16>
    %c0_169 = arith.constant 0 : index
    %c0_170 = arith.constant 0 : index
    %c0_171 = arith.constant 0 : index
    %158 = vector.load %arg13[%c0_169, %c0_170, %c0_171] : memref<3x128x128xbf16, #tpu.memory_space<vmem>>, vector<1x128x128xbf16>
    %159 = vector.shape_cast %158 : vector<1x128x128xbf16> to vector<128x128xbf16>
    %cst_172 = arith.constant dense<0.000000e+00> : vector<16x128xf32>
    %160 = tpu.matmul %157, %159, %cst_172 {dimension_numbers = #tpu.dot_dimension_numbers<[1], [0], [0], [1], [0, 0, 1, 1], [], []>} : vector<16x128xbf16>, vector<128x128xbf16>, vector<16x128xf32> -> vector<16x128xf32>
    %c0_173 = arith.constant 0 : index
    %c1_174 = arith.constant 1 : index
    %c0_175 = arith.constant 0 : index
    %161 = vector.load %arg27[%c0_173, %c1_174, %c0_175] : memref<2x10x128xf32, #tpu.memory_space<vmem>>, vector<2x8x128xf32>
    %162 = vector.shape_cast %161 : vector<2x8x128xf32> to vector<16x128xf32>
    %163 = arith.truncf %162 : vector<16x128xf32> to vector<16x128xbf16>
    %c1_176 = arith.constant 1 : index
    %c0_177 = arith.constant 0 : index
    %c0_178 = arith.constant 0 : index
    %164 = vector.load %arg13[%c1_176, %c0_177, %c0_178] : memref<3x128x128xbf16, #tpu.memory_space<vmem>>, vector<1x128x128xbf16>
    %165 = vector.shape_cast %164 : vector<1x128x128xbf16> to vector<128x128xbf16>
    %cst_179 = arith.constant dense<0.000000e+00> : vector<16x128xf32>
    %166 = tpu.matmul %163, %165, %cst_179 {dimension_numbers = #tpu.dot_dimension_numbers<[1], [0], [0], [1], [0, 0, 1, 1], [], []>} : vector<16x128xbf16>, vector<128x128xbf16>, vector<16x128xf32> -> vector<16x128xf32>
    %167 = arith.addf %160, %166 : vector<16x128xf32>
    %c0_180 = arith.constant 0 : index
    %c2_181 = arith.constant 2 : index
    %c0_182 = arith.constant 0 : index
    %168 = vector.load %arg27[%c0_180, %c2_181, %c0_182] : memref<2x10x128xf32, #tpu.memory_space<vmem>>, vector<2x8x128xf32>
    %169 = vector.shape_cast %168 : vector<2x8x128xf32> to vector<16x128xf32>
    %170 = arith.truncf %169 : vector<16x128xf32> to vector<16x128xbf16>
    %c2_183 = arith.constant 2 : index
    %c0_184 = arith.constant 0 : index
    %c0_185 = arith.constant 0 : index
    %171 = vector.load %arg13[%c2_183, %c0_184, %c0_185] : memref<3x128x128xbf16, #tpu.memory_space<vmem>>, vector<1x128x128xbf16>
    %172 = vector.shape_cast %171 : vector<1x128x128xbf16> to vector<128x128xbf16>
    %cst_186 = arith.constant dense<0.000000e+00> : vector<16x128xf32>
    %173 = tpu.matmul %170, %172, %cst_186 {dimension_numbers = #tpu.dot_dimension_numbers<[1], [0], [0], [1], [0, 0, 1, 1], [], []>} : vector<16x128xbf16>, vector<128x128xbf16>, vector<16x128xf32> -> vector<16x128xf32>
    %174 = arith.addf %167, %173 : vector<16x128xf32>
    %175 = vector.shape_cast %174 : vector<16x128xf32> to vector<2x8x128xf32>
    %c0_187 = arith.constant 0 : index
    %c0_188 = arith.constant 0 : index
    %c0_189 = arith.constant 0 : index
    %176 = vector.load %arg14[%c0_187, %c0_188, %c0_189] : memref<1x1x128xf32, #tpu.memory_space<vmem>>, vector<1x1x128xf32>
    %177 = vector.broadcast %176 : vector<1x1x128xf32> to vector<2x8x128xf32>
    %178 = arith.addf %175, %177 : vector<2x8x128xf32>
    %179 = arith.addf %178, %112 : vector<2x8x128xf32>
    %cst_190 = arith.constant 0.000000e+00 : f32
    %180 = vector.broadcast %cst_190 : f32 to vector<2x8x128xf32>
    %181 = arith.cmpf ogt, %179, %180 : vector<2x8x128xf32>
    %cst_191 = arith.constant 2.000000e-01 : f32
    %182 = vector.broadcast %cst_191 : f32 to vector<2x8x128xf32>
    %183 = arith.mulf %182, %179 : vector<2x8x128xf32>
    %184 = arith.select %181, %179, %183 : vector<2x8x128xi1>, vector<2x8x128xf32>
    %cst_192 = arith.constant dense<0.000000e+00> : vector<2x128xf32>
    %185 = vector.multi_reduction <add>, %184, %cst_192 [1] : vector<2x8x128xf32> to vector<2x128xf32>
    %cst_193 = arith.constant 8.000000e+00 : f32
    %186 = vector.broadcast %cst_193 : f32 to vector<2x128xf32>
    %187 = arith.divf %185, %186 : vector<2x128xf32>
    %c0_194 = arith.constant 0 : index
    %c0_195 = arith.constant 0 : index
    %188 = vector.load %arg16[%c0_194, %c0_195] : memref<128x16xf32, #tpu.memory_space<vmem>>, vector<128x16xf32>
    %cst_196 = arith.constant dense<0.000000e+00> : vector<2x16xf32>
    %189 = tpu.matmul %187, %188, %cst_196 {dimension_numbers = #tpu.dot_dimension_numbers<[1], [0], [0], [1], [0, 0, 1, 1], [], []>} : vector<2x128xf32>, vector<128x16xf32>, vector<2x16xf32> -> vector<2x16xf32>
    %c0_197 = arith.constant 0 : index
    %c0_198 = arith.constant 0 : index
    %190 = vector.load %arg17[%c0_197, %c0_198] : memref<16x2048xf32, #tpu.memory_space<vmem>>, vector<16x2048xf32>
    %cst_199 = arith.constant dense<0.000000e+00> : vector<2x2048xf32>
    %191 = tpu.matmul %189, %190, %cst_199 {dimension_numbers = #tpu.dot_dimension_numbers<[1], [0], [0], [1], [0, 0, 1, 1], [], []>} : vector<2x16xf32>, vector<16x2048xf32>, vector<2x2048xf32> -> vector<2x2048xf32>
    %c0_200 = arith.constant 0 : index
    %c0_201 = arith.constant 0 : index
    %192 = vector.load %arg18[%c0_200, %c0_201] : memref<1x2048xf32, #tpu.memory_space<vmem>>, vector<1x2048xf32>
    %193 = vector.broadcast %192 : vector<1x2048xf32> to vector<2x2048xf32>
    %194 = arith.addf %191, %193 : vector<2x2048xf32>
    %cst_202 = arith.constant 0.000000e+00 : f32
    %195 = vector.broadcast %cst_202 : f32 to vector<2x2048xf32>
    %196 = arith.cmpf ogt, %194, %195 : vector<2x2048xf32>
    %cst_203 = arith.constant 2.000000e-01 : f32
    %197 = vector.broadcast %cst_203 : f32 to vector<2x2048xf32>
    %198 = arith.mulf %197, %194 : vector<2x2048xf32>
    %199 = arith.select %196, %194, %198 : vector<2x2048xi1>, vector<2x2048xf32>
    %c0_204 = arith.constant 0 : index
    %c0_205 = arith.constant 0 : index
    %200 = vector.load %arg19[%c0_204, %c0_205] : memref<2048x32xf32, #tpu.memory_space<vmem>>, vector<2048x32xf32>
    %cst_206 = arith.constant dense<0.000000e+00> : vector<2x32xf32>
    %201 = tpu.matmul %199, %200, %cst_206 {dimension_numbers = #tpu.dot_dimension_numbers<[1], [0], [0], [1], [0, 0, 1, 1], [], []>} : vector<2x2048xf32>, vector<2048x32xf32>, vector<2x32xf32> -> vector<2x32xf32>
    %c0_207 = arith.constant 0 : index
    %c0_208 = arith.constant 0 : index
    %202 = vector.load %arg20[%c0_207, %c0_208] : memref<1x32xf32, #tpu.memory_space<vmem>>, vector<1x32xf32>
    %203 = vector.broadcast %202 : vector<1x32xf32> to vector<2x32xf32>
    %204 = arith.addf %201, %203 : vector<2x32xf32>
    %c0_209 = arith.constant 0 : index
    %c0_210 = arith.constant 0 : index
    %205 = vector.load %arg21[%c0_209, %c0_210] : memref<32x64xf32, #tpu.memory_space<vmem>>, vector<32x64xf32>
    %cst_211 = arith.constant dense<0.000000e+00> : vector<2x64xf32>
    %206 = tpu.matmul %204, %205, %cst_211 {dimension_numbers = #tpu.dot_dimension_numbers<[1], [0], [0], [1], [0, 0, 1, 1], [], []>} : vector<2x32xf32>, vector<32x64xf32>, vector<2x64xf32> -> vector<2x64xf32>
    %cst_212 = arith.constant 0.000000e+00 : f32
    %207 = vector.broadcast %cst_212 : f32 to vector<2x64xf32>
    %208 = arith.cmpf ogt, %206, %207 : vector<2x64xf32>
    %cst_213 = arith.constant 2.000000e-01 : f32
    %209 = vector.broadcast %cst_213 : f32 to vector<2x64xf32>
    %210 = arith.mulf %209, %206 : vector<2x64xf32>
    %211 = arith.select %208, %206, %210 : vector<2x64xi1>, vector<2x64xf32>
    %c0_214 = arith.constant 0 : index
    %c0_215 = arith.constant 0 : index
    %212 = vector.load %arg22[%c0_214, %c0_215] : memref<64x16xf32, #tpu.memory_space<vmem>>, vector<64x16xf32>
    %cst_216 = arith.constant dense<0.000000e+00> : vector<2x16xf32>
    %213 = tpu.matmul %211, %212, %cst_216 {dimension_numbers = #tpu.dot_dimension_numbers<[1], [0], [0], [1], [0, 0, 1, 1], [], []>} : vector<2x64xf32>, vector<64x16xf32>, vector<2x16xf32> -> vector<2x16xf32>
    %c0_217 = arith.constant 0 : index
    %c0_218 = arith.constant 0 : index
    %214 = vector.load %arg23[%c0_217, %c0_218] : memref<2x32xf32, #tpu.memory_space<vmem>>, vector<2x32xf32>
    tpu.vector_store %arg23[%c0_217, %c0_218], %204 {strides = array<i32>} : memref<2x32xf32, #tpu.memory_space<vmem>>, vector<2x32xf32>,
    %c0_219 = arith.constant 0 : index
    %c0_220 = arith.constant 0 : index
    %215 = vector.load %arg24[%c0_219, %c0_220] : memref<2x16xf32, #tpu.memory_space<vmem>>, vector<2x16xf32>
    tpu.vector_store %arg24[%c0_219, %c0_220], %213 {strides = array<i32>} : memref<2x16xf32, #tpu.memory_space<vmem>>, vector<2x16xf32>,
    return
  }
}

</mosaic_0001>

<llo_original>
// kernel: forward.1
$region0: #{forward.1}
  #allocation0 [shape = 'u32[]', space=smem, size = 0x4, offset = 0x4, fixed_abs, tag = 'smem constant byte address 0x4 - core index']
  #allocation1 [shape = 'u32[144,128]{1,0:T(1,128)}', space=vmem, size = 0x12000, scoped, tag = 'internal scratch']
  #allocation2 [shape = 'f32[2,18,128]{2,1,0:T(8,128)}', space=vmem, size = 0x6000, scoped, tag = 'scratch operand']
  #allocation3 [shape = 'f32[2,10,64]{2,1,0:T(8,128)}', space=vmem, size = 0x4000, scoped, tag = 'scratch operand']
  #allocation4 [shape = 'f32[2,10,128]{2,1,0:T(8,128)}', space=vmem, size = 0x4000, scoped, tag = 'scratch operand']
  %s0 = inlined_call_operand.vmem [shape: f32[2,16,128], index: 0, kind: input, shape index: {}]
  %s1 = inlined_call_operand.vmem [shape: f32[1,1,128], index: 1, kind: input, shape index: {}]
  %s2 = inlined_call_operand.vmem [shape: f32[1,1,128], index: 2, kind: input, shape index: {}]
  %s3 = inlined_call_operand.vmem [shape: bf16[3,128,128], index: 3, kind: input, shape index: {}]
  %s4 = inlined_call_operand.vmem [shape: f32[1,1,128], index: 4, kind: input, shape index: {}]
  %s5 = inlined_call_operand.vmem [shape: bf16[3,128,128], index: 5, kind: input, shape index: {}]
  %s6 = inlined_call_operand.vmem [shape: f32[1,1,128], index: 6, kind: input, shape index: {}]
  %s7 = inlined_call_operand.vmem [shape: bf16[3,128,128], index: 7, kind: input, shape index: {}]
  %s8 = inlined_call_operand.vmem [shape: f32[1,1,128], index: 8, kind: input, shape index: {}]
  %s9 = inlined_call_operand.vmem [shape: f32[16,32], index: 9, kind: input, shape index: {}]
  %s10 = inlined_call_operand.vmem [shape: f32[128,64], index: 10, kind: input, shape index: {}]
  %s11 = inlined_call_operand.vmem [shape: bf16[3,64,128], index: 11, kind: input, shape index: {}]
  %s12 = inlined_call_operand.vmem [shape: f32[1,1,128], index: 12, kind: input, shape index: {}]
  %s13 = inlined_call_operand.vmem [shape: bf16[3,128,128], index: 13, kind: input, shape index: {}]
  %s14 = inlined_call_operand.vmem [shape: f32[1,1,128], index: 14, kind: input, shape index: {}]
  %s15 = inlined_call_operand.vmem [shape: bf16[64,128], index: 15, kind: input, shape index: {}]
  %s16 = inlined_call_operand.vmem [shape: f32[128,16], index: 16, kind: input, shape index: {}]
  %s17 = inlined_call_operand.vmem [shape: f32[16,2048], index: 17, kind: input, shape index: {}]
  %s18 = inlined_call_operand.vmem [shape: f32[1,2048], index: 18, kind: input, shape index: {}]
  %s19 = inlined_call_operand.vmem [shape: f32[2048,32], index: 19, kind: input, shape index: {}]
  %s20 = inlined_call_operand.vmem [shape: f32[1,32], index: 20, kind: input, shape index: {}]
  %s21 = inlined_call_operand.vmem [shape: f32[32,64], index: 21, kind: input, shape index: {}]
  %s22 = inlined_call_operand.vmem [shape: f32[64,16], index: 22, kind: input, shape index: {}]
  %s23 = inlined_call_operand.hbm [shape: f32[2,32], index: 23, kind: output, shape index: {0}]
  %s24 = inlined_call_operand.hbm [shape: f32[2,16], index: 24, kind: output, shape index: {1}]
  %25 = xla_tuple %s23, %s24
  %s26 = sld [smem:[#allocation0]]
  $region110: #{forward.1} parent=0
    _
  %s28 = ssub.s32 1, %s26
  %s29 = scalar_select 0, %s28, %s26
  $region1: #{forward.1} parent=0
    #allocation5 [shape = 'u8[1024]{0}', space=vmem, size = 0x400, scoped, tag = 'output window, operand 0, single buffered']
    #allocation6 [shape = 's32[1]{0}', space=sflag, size = 0x4, scoped, tag = 'scoped memory for forward.1']
    #allocation7 [shape = 'u8[1024]{0}', space=vmem, size = 0x400, scoped, tag = 'output window, operand 1, single buffered']
    #allocation8 [shape = 's32[1]{0}', space=sflag, size = 0x4, scoped, tag = 'scoped memory for forward.1']
    %30 = vsyncpa [#allocation6], 0
    %31 = vsyncpa [#allocation8], 0
    // Predicated region
    $region2: #{forward.1} parent=1 // pred_check
      _
    $region3: #{forward.1} parent=1 // pred_check_branch
      %33 = sbr.rel (0) target = $region5
    $region4: #{forward.1} parent=1 // pred_region
      _
    $region5: #{forward.1} parent=1 // pred_fallthru
      _
    // Predicated region
    $region6: #{forward.1} parent=1 // pred_check
      _
    $region7: #{forward.1} parent=1 // pred_check_branch
      %35 = sbr.rel (0) target = $region9
    $region8: #{forward.1} parent=1 // pred_region
      _
    $region9: #{forward.1} parent=1 // pred_fallthru
      _
    // Predicated region
    $region10: #{forward.1} parent=1 // pred_check
      _
    $region11: #{forward.1} parent=1 // pred_check_branch
      %37 = sbr.rel (0) target = $region13
    $region12: #{forward.1} parent=1 // pred_region
      _
    $region13: #{forward.1} parent=1 // pred_fallthru
      _
    // Predicated region
    $region14: #{forward.1} parent=1 // pred_check
      _
    $region15: #{forward.1} parent=1 // pred_check_branch
      %39 = sbr.rel (0) target = $region17
    $region16: #{forward.1} parent=1 // pred_region
      _
    $region17: #{forward.1} parent=1 // pred_fallthru
      _
    // Predicated region
    $region18: #{forward.1} parent=1 // pred_check
      _
    $region19: #{forward.1} parent=1 // pred_check_branch
      %41 = sbr.rel (0) target = $region21
    $region20: #{forward.1} parent=1 // pred_region
      _
    $region21: #{forward.1} parent=1 // pred_fallthru
      _
    // Predicated region
    $region22: #{forward.1} parent=1 // pred_check
      _
    $region23: #{forward.1} parent=1 // pred_check_branch
      %43 = sbr.rel (0) target = $region25
    $region24: #{forward.1} parent=1 // pred_region
      _
    $region25: #{forward.1} parent=1 // pred_fallthru
      _
    // Predicated region
    $region26: #{forward.1} parent=1 // pred_check
      _
    $region27: #{forward.1} parent=1 // pred_check_branch
      %45 = sbr.rel (0) target = $region29
    $region28: #{forward.1} parent=1 // pred_region
      _
    $region29: #{forward.1} parent=1 // pred_fallthru
      _
    // Predicated region
    $region30: #{forward.1} parent=1 // pred_check
      _
    $region31: #{forward.1} parent=1 // pred_check_branch
      %47 = sbr.rel (0) target = $region33
    $region32: #{forward.1} parent=1 // pred_region
      _
    $region33: #{forward.1} parent=1 // pred_fallthru
      _
    // Predicated region
    $region34: #{forward.1} parent=1 // pred_check
      _
    $region35: #{forward.1} parent=1 // pred_check_branch
      %49 = sbr.rel (0) target = $region37
    $region36: #{forward.1} parent=1 // pred_region
      _
    $region37: #{forward.1} parent=1 // pred_fallthru
      _
    // Predicated region
    $region38: #{forward.1} parent=1 // pred_check
      _
    $region39: #{forward.1} parent=1 // pred_check_branch
      %51 = sbr.rel (0) target = $region41
    $region40: #{forward.1} parent=1 // pred_region
      _
    $region41: #{forward.1} parent=1 // pred_fallthru
      _
    // Predicated region
    $region42: #{forward.1} parent=1 // pred_check
      _
    $region43: #{forward.1} parent=1 // pred_check_branch
      %53 = sbr.rel (0) target = $region45
    $region44: #{forward.1} parent=1 // pred_region
      _
    $region45: #{forward.1} parent=1 // pred_fallthru
      _
    // Predicated region
    $region46: #{forward.1} parent=1 // pred_check
      _
    $region47: #{forward.1} parent=1 // pred_check_branch
      %55 = sbr.rel (0) target = $region49
    $region48: #{forward.1} parent=1 // pred_region
      _
    $region49: #{forward.1} parent=1 // pred_fallthru
      _
    // Predicated region
    $region50: #{forward.1} parent=1 // pred_check
      _
    $region51: #{forward.1} parent=1 // pred_check_branch
      %57 = sbr.rel (0) target = $region53
    $region52: #{forward.1} parent=1 // pred_region
      _
    $region53: #{forward.1} parent=1 // pred_fallthru
      _
    // Predicated region
    $region54: #{forward.1} parent=1 // pred_check
      _
    $region55: #{forward.1} parent=1 // pred_check_branch
      %59 = sbr.rel (0) target = $region57
    $region56: #{forward.1} parent=1 // pred_region
      _
    $region57: #{forward.1} parent=1 // pred_fallthru
      _
    // Predicated region
    $region58: #{forward.1} parent=1 // pred_check
      _
    $region59: #{forward.1} parent=1 // pred_check_branch
      %61 = sbr.rel (0) target = $region61
    $region60: #{forward.1} parent=1 // pred_region
      _
    $region61: #{forward.1} parent=1 // pred_fallthru
      _
    // Predicated region
    $region62: #{forward.1} parent=1 // pred_check
      _
    $region63: #{forward.1} parent=1 // pred_check_branch
      %63 = sbr.rel (0) target = $region65
    $region64: #{forward.1} parent=1 // pred_region
      _
    $region65: #{forward.1} parent=1 // pred_fallthru
      _
    // Predicated region
    $region66: #{forward.1} parent=1 // pred_check
      _
    $region67: #{forward.1} parent=1 // pred_check_branch
      %65 = sbr.rel (0) target = $region69
    $region68: #{forward.1} parent=1 // pred_region
      _
    $region69: #{forward.1} parent=1 // pred_fallthru
      _
    // Predicated region
    $region70: #{forward.1} parent=1 // pred_check
      _
    $region71: #{forward.1} parent=1 // pred_check_branch
      %67 = sbr.rel (0) target = $region73
    $region72: #{forward.1} parent=1 // pred_region
      _
    $region73: #{forward.1} parent=1 // pred_fallthru
      _
    // Predicated region
    $region74: #{forward.1} parent=1 // pred_check
      _
    $region75: #{forward.1} parent=1 // pred_check_branch
      %69 = sbr.rel (0) target = $region77
    $region76: #{forward.1} parent=1 // pred_region
      _
    $region77: #{forward.1} parent=1 // pred_fallthru
      _
    // Predicated region
    $region78: #{forward.1} parent=1 // pred_check
      _
    $region79: #{forward.1} parent=1 // pred_check_branch
      %71 = sbr.rel (0) target = $region81
    $region80: #{forward.1} parent=1 // pred_region
      _
    $region81: #{forward.1} parent=1 // pred_fallthru
      _
    // Predicated region
    $region82: #{forward.1} parent=1 // pred_check
      _
    $region83: #{forward.1} parent=1 // pred_check_branch
      %73 = sbr.rel (0) target = $region85
    $region84: #{forward.1} parent=1 // pred_region
      _
    $region85: #{forward.1} parent=1 // pred_fallthru
      _
    // Predicated region
    $region86: #{forward.1} parent=1 // pred_check
      _
    $region87: #{forward.1} parent=1 // pred_check_branch
      %75 = sbr.rel (0) target = $region89
    $region88: #{forward.1} parent=1 // pred_region
      _
    $region89: #{forward.1} parent=1 // pred_fallthru
      _
    // Predicated region
    $region90: #{forward.1} parent=1 // pred_check
      _
    $region91: #{forward.1} parent=1 // pred_check_branch
      %77 = sbr.rel (0) target = $region93
    $region92: #{forward.1} parent=1 // pred_region
      _
    $region93: #{forward.1} parent=1 // pred_fallthru
      _
    %v79 = vld [vmem:[%s0] sm:$0xff]
    %v80 = vld [vmem:[%s0 + $0x8] sm:$0xff]
    %v81 = vld [vmem:[%s0 + $0x10] sm:$0xff]
    %v82 = vld [vmem:[%s0 + $0x18] sm:$0xff]
    %v83 = vld [vmem:[%s1] sm:$0x1]
    %v85 = vlaneseq
    %v86 = vshrl.u32 %v85, 7
    %v87 = vsub.s32 0, %v86
    %v88 = vrot.slane %v83, %v87
    %v90 = vsub.f32 %v79, %v88
    %v91 = vsub.f32 %v80, %v88
    %v92 = vsub.f32 %v81, %v88
    %v93 = vsub.f32 %v82, %v88
    %v94 = vld [vmem:[%s2] sm:$0x1]
    %v96 = vlaneseq
    %v97 = vshrl.u32 %v96, 7
    %v98 = vsub.s32 0, %v97
    %v99 = vrot.slane %v94, %v98
    %v101 = vmul.f32 %v90, %v99
    %v102 = vmul.f32 %v91, %v99
    %v103 = vmul.f32 %v92, %v99
    %v104 = vmul.f32 %v93, %v99
    %105 = vst [vmem:[#allocation2] sm:$0x1] 0.0
    %106 = vst [vmem:[#allocation2 + $0x18] sm:$0x1] 0.0
    %107 = vst [vmem:[#allocation2 + $0x11] sm:$0x1] 0.0
    %108 = vst [vmem:[#allocation2 + $0x29] sm:$0x1] 0.0
    %109 = vst [vmem:[#allocation2 + $0x1] sm:$0xff] %v101
    %110 = vst [vmem:[#allocation2 + $0x9] sm:$0xff] %v102
    %111 = vst [vmem:[#allocation2 + $0x19] sm:$0xff] %v103
    %112 = vst [vmem:[#allocation2 + $0x21] sm:$0xff] %v104
    %v113 = vld [vmem:[#allocation2] sm:$0xff]
    %v114 = vld [vmem:[#allocation2 + $0x8] sm:$0xff]
    %v115 = vld [vmem:[#allocation2 + $0x18] sm:$0xff]
    %v116 = vld [vmem:[#allocation2 + $0x20] sm:$0xff]
    %v117 = vpack.c.bf16 %v114, %v113
    %v118 = vpack.c.bf16 %v116, %v115
    %v119 = vld [vmem:[%s3] sm:$0xf]
    %v120 = vld [vmem:[%s3 + $0x4] sm:$0xf]
    %v121 = vld [vmem:[%s3 + $0x8] sm:$0xf]
    %v122 = vld [vmem:[%s3 + $0xc] sm:$0xf]
    %v123 = vld [vmem:[%s3 + $0x10] sm:$0xf]
    %v124 = vld [vmem:[%s3 + $0x14] sm:$0xf]
    %v125 = vld [vmem:[%s3 + $0x18] sm:$0xf]
    %v126 = vld [vmem:[%s3 + $0x1c] sm:$0xf]
    %v127 = vld [vmem:[%s3 + $0x20] sm:$0xf]
    %v128 = vld [vmem:[%s3 + $0x24] sm:$0xf]
    %v129 = vld [vmem:[%s3 + $0x28] sm:$0xf]
    %v130 = vld [vmem:[%s3 + $0x2c] sm:$0xf]
    %v131 = vld [vmem:[%s3 + $0x30] sm:$0xf]
    %v132 = vld [vmem:[%s3 + $0x34] sm:$0xf]
    %v133 = vld [vmem:[%s3 + $0x38] sm:$0xf]
    %v134 = vld [vmem:[%s3 + $0x3c] sm:$0xf]
    %v135 = vld [vmem:[#allocation2 + $0x1] sm:$0xff]
    %v136 = vld [vmem:[#allocation2 + $0x9] sm:$0xff]
    %v137 = vld [vmem:[#allocation2 + $0x19] sm:$0xff]
    %v138 = vld [vmem:[#allocation2 + $0x21] sm:$0xff]
    %v139 = vpack.c.bf16 %v136, %v135
    %v140 = vpack.c.bf16 %v138, %v137
    %s141 = scalar_lea.vmem %s3, 64
    %v142 = vld [vmem:[%s141] sm:$0xf]
    %v143 = vld [vmem:[%s141 + $0x4] sm:$0xf]
    %v144 = vld [vmem:[%s141 + $0x8] sm:$0xf]
    %v145 = vld [vmem:[%s141 + $0xc] sm:$0xf]
    %v146 = vld [vmem:[%s141 + $0x10] sm:$0xf]
    %v147 = vld [vmem:[%s141 + $0x14] sm:$0xf]
    %v148 = vld [vmem:[%s141 + $0x18] sm:$0xf]
    %v149 = vld [vmem:[%s141 + $0x1c] sm:$0xf]
    %v150 = vld [vmem:[%s141 + $0x20] sm:$0xf]
    %v151 = vld [vmem:[%s141 + $0x24] sm:$0xf]
    %v152 = vld [vmem:[%s141 + $0x28] sm:$0xf]
    %v153 = vld [vmem:[%s141 + $0x2c] sm:$0xf]
    %v154 = vld [vmem:[%s141 + $0x30] sm:$0xf]
    %v155 = vld [vmem:[%s141 + $0x34] sm:$0xf]
    %v156 = vld [vmem:[%s141 + $0x38] sm:$0xf]
    %v157 = vld [vmem:[%s141 + $0x3c] sm:$0xf]
    %v174 = vunpack.c.l.b16 %v142
    %v175 = vunpack.c.l.b16 %v143
    %v176 = vunpack.c.l.b16 %v144
    %v177 = vunpack.c.l.b16 %v145
    %v178 = vunpack.c.l.b16 %v146
    %v179 = vunpack.c.l.b16 %v147
    %v180 = vunpack.c.l.b16 %v148
    %v181 = vunpack.c.l.b16 %v149
    %v182 = vunpack.c.l.b16 %v150
    %v183 = vunpack.c.l.b16 %v151
    %v184 = vunpack.c.l.b16 %v152
    %v185 = vunpack.c.l.b16 %v153
    %v186 = vunpack.c.l.b16 %v154
    %v187 = vunpack.c.l.b16 %v155
    %v188 = vunpack.c.l.b16 %v156
    %v189 = vunpack.c.l.b16 %v157
    %v190 = vpack.c.b16 %v175, %v174
    %v191 = vpack.c.b16 %v177, %v176
    %v192 = vpack.c.b16 %v179, %v178
    %v193 = vpack.c.b16 %v181, %v180
    %v194 = vpack.c.b16 %v183, %v182
    %v195 = vpack.c.b16 %v185, %v184
    %v196 = vpack.c.b16 %v187, %v186
    %v197 = vpack.c.b16 %v189, %v188
    %206 = vmatprep.subr.bf16.mxu0 0
    %207 = vmatpush1.bf16.msra.mxu0 %v190
    %208 = vmatprep.subr.bf16.mxu0 0
    %209 = vmatpush1.bf16.msra.mxu0 %v191
    %210 = vmatprep.subr.bf16.mxu0 0
    %211 = vmatpush1.bf16.msra.mxu0 %v192
    %212 = vmatprep.subr.bf16.mxu0 0
    %213 = vmatpush1.bf16.msra.mxu0 %v193
    %214 = vmatprep.subr.bf16.mxu0 0
    %215 = vmatpush1.bf16.msra.mxu0 %v194
    %216 = vmatprep.subr.bf16.mxu0 0
    %217 = vmatpush1.bf16.msra.mxu0 %v195
    %218 = vmatprep.subr.bf16.mxu0 0
    %219 = vmatpush1.bf16.msra.mxu0 %v196
    %220 = vmatprep.subr.bf16.mxu0 0
    %221 = vmatpush1.bf16.msra.mxu0 %v197
    %222 = vmatprep.subr.bf16.mxu0 0
    %223 = vmatpush1.bf16.msra.mxu0 0
    %224 = vmatprep.subr.bf16.mxu0 0
    %225 = vmatpush1.bf16.msra.mxu0 0
    %226 = vmatprep.subr.bf16.mxu0 0
    %227 = vmatpush1.bf16.msra.mxu0 0
    %228 = vmatprep.subr.bf16.mxu0 0
    %229 = vmatpush1.bf16.msra.mxu0 0
    %230 = vmatprep.subr.bf16.mxu0 0
    %231 = vmatpush1.bf16.msra.mxu0 0
    %232 = vmatprep.subr.bf16.mxu0 0
    %233 = vmatpush1.bf16.msra.mxu0 0
    %234 = vmatprep.subr.bf16.mxu0 0
    %235 = vmatpush1.bf16.msra.mxu0 0
    %236 = vmatprep.subr.bf16.mxu0 0
    %237 = vmatpush1.bf16.msra.mxu0 0
    %238 = vmatprep.mubr.bf16.mxu0 0
    %239 = vmatmul.mubr.bf16.gmra.mrb[0].mxu0 %v139
    %v240 = vpop.f32.mrb[0].mxu0
    %v241 = vadd.f32 0.0, %v240
    %v242 = vpop.f32.mrb[0].mxu0
    %v243 = vpop.f32.mrb[0].mxu0
    %v244 = vadd.f32 0.0, %v243
    %v245 = vpop.f32.mrb[0].mxu0
    %246 = vmatprep.mubr.bf16.mxu0 0
    %247 = vmatmul.mubr.bf16.gmra.mrb[0].mxu0 %v140
    %v248 = vpop.f32.mrb[0].mxu0
    %v249 = vadd.f32 0.0, %v248
    %v250 = vpop.f32.mrb[0].mxu0
    %v251 = vpop.f32.mrb[0].mxu0
    %v252 = vadd.f32 0.0, %v251
    %v253 = vpop.f32.mrb[0].mxu0
    %254 = vdwg.mxu0
    %v271 = vunpack.c.l.b16 %v119
    %v272 = vunpack.c.l.b16 %v120
    %v273 = vunpack.c.l.b16 %v121
    %v274 = vunpack.c.l.b16 %v122
    %v275 = vunpack.c.l.b16 %v123
    %v276 = vunpack.c.l.b16 %v124
    %v277 = vunpack.c.l.b16 %v125
    %v278 = vunpack.c.l.b16 %v126
    %v279 = vunpack.c.l.b16 %v127
    %v280 = vunpack.c.l.b16 %v128
    %v281 = vunpack.c.l.b16 %v129
    %v282 = vunpack.c.l.b16 %v130
    %v283 = vunpack.c.l.b16 %v131
    %v284 = vunpack.c.l.b16 %v132
    %v285 = vunpack.c.l.b16 %v133
    %v286 = vunpack.c.l.b16 %v134
    %v287 = vpack.c.b16 %v272, %v271
    %v288 = vpack.c.b16 %v274, %v273
    %v289 = vpack.c.b16 %v276, %v275
    %v290 = vpack.c.b16 %v278, %v277
    %v291 = vpack.c.b16 %v280, %v279
    %v292 = vpack.c.b16 %v282, %v281
    %v293 = vpack.c.b16 %v284, %v283
    %v294 = vpack.c.b16 %v286, %v285
    %303 = vmatprep.subr.bf16.mxu0 0
    %304 = vmatpush1.bf16.msra.mxu0 %v287
    %305 = vmatprep.subr.bf16.mxu0 0
    %306 = vmatpush1.bf16.msra.mxu0 %v288
    %307 = vmatprep.subr.bf16.mxu0 0
    %308 = vmatpush1.bf16.msra.mxu0 %v289
    %309 = vmatprep.subr.bf16.mxu0 0
    %310 = vmatpush1.bf16.msra.mxu0 %v290
    %311 = vmatprep.subr.bf16.mxu0 0
    %312 = vmatpush1.bf16.msra.mxu0 %v291
    %313 = vmatprep.subr.bf16.mxu0 0
    %314 = vmatpush1.bf16.msra.mxu0 %v292
    %315 = vmatprep.subr.bf16.mxu0 0
    %316 = vmatpush1.bf16.msra.mxu0 %v293
    %317 = vmatprep.subr.bf16.mxu0 0
    %318 = vmatpush1.bf16.msra.mxu0 %v294
    %319 = vmatprep.subr.bf16.mxu0 0
    %320 = vmatpush1.bf16.msra.mxu0 0
    %321 = vmatprep.subr.bf16.mxu0 0
    %322 = vmatpush1.bf16.msra.mxu0 0
    %323 = vmatprep.subr.bf16.mxu0 0
    %324 = vmatpush1.bf16.msra.mxu0 0
    %325 = vmatprep.subr.bf16.mxu0 0
    %326 = vmatpush1.bf16.msra.mxu0 0
    %327 = vmatprep.subr.bf16.mxu0 0
    %328 = vmatpush1.bf16.msra.mxu0 0
    %329 = vmatprep.subr.bf16.mxu0 0
    %330 = vmatpush1.bf16.msra.mxu0 0
    %331 = vmatprep.subr.bf16.mxu0 0
    %332 = vmatpush1.bf16.msra.mxu0 0
    %333 = vmatprep.subr.bf16.mxu0 0
    %334 = vmatpush1.bf16.msra.mxu0 0
    %335 = vmatprep.mubr.bf16.mxu0 0
    %336 = vmatmul.mubr.bf16.gmra.mrb[0].mxu0 %v117
    %v337 = vpop.f32.mrb[0].mxu0
    %v338 = vadd.f32 %v241, %v337
    %v339 = vpop.f32.mrb[0].mxu0
    %v340 = vpop.f32.mrb[0].mxu0
    %v341 = vadd.f32 %v244, %v340
    %v342 = vpop.f32.mrb[0].mxu0
    %343 = vmatprep.mubr.bf16.mxu0 0
    %344 = vmatmul.mubr.bf16.gmra.mrb[0].mxu0 %v118
    %v345 = vpop.f32.mrb[0].mxu0
    %v346 = vadd.f32 %v249, %v345
    %v347 = vpop.f32.mrb[0].mxu0
    %v348 = vpop.f32.mrb[0].mxu0
    %v349 = vadd.f32 %v252, %v348
    %v350 = vpop.f32.mrb[0].mxu0
    %351 = vdwg.mxu0
    %v352 = vld [vmem:[#allocation2 + $0x2] sm:$0xff]
    %v353 = vld [vmem:[#allocation2 + $0xa] sm:$0xff]
    %v354 = vld [vmem:[#allocation2 + $0x1a] sm:$0xff]
    %v355 = vld [vmem:[#allocation2 + $0x22] sm:$0xff]
    %v356 = vpack.c.bf16 %v353, %v352
    %v357 = vpack.c.bf16 %v355, %v354
    %s358 = scalar_lea.vmem %s3, 128
    %v359 = vld [vmem:[%s358] sm:$0xf]
    %v360 = vld [vmem:[%s358 + $0x4] sm:$0xf]
    %v361 = vld [vmem:[%s358 + $0x8] sm:$0xf]
    %v362 = vld [vmem:[%s358 + $0xc] sm:$0xf]
    %v363 = vld [vmem:[%s358 + $0x10] sm:$0xf]
    %v364 = vld [vmem:[%s358 + $0x14] sm:$0xf]
    %v365 = vld [vmem:[%s358 + $0x18] sm:$0xf]
    %v366 = vld [vmem:[%s358 + $0x1c] sm:$0xf]
    %v367 = vld [vmem:[%s358 + $0x20] sm:$0xf]
    %v368 = vld [vmem:[%s358 + $0x24] sm:$0xf]
    %v369 = vld [vmem:[%s358 + $0x28] sm:$0xf]
    %v370 = vld [vmem:[%s358 + $0x2c] sm:$0xf]
    %v371 = vld [vmem:[%s358 + $0x30] sm:$0xf]
    %v372 = vld [vmem:[%s358 + $0x34] sm:$0xf]
    %v373 = vld [vmem:[%s358 + $0x38] sm:$0xf]
    %v374 = vld [vmem:[%s358 + $0x3c] sm:$0xf]
    %v391 = vunpack.c.l.b16 %v359
    %v392 = vunpack.c.l.b16 %v360
    %v393 = vunpack.c.l.b16 %v361
    %v394 = vunpack.c.l.b16 %v362
    %v395 = vunpack.c.l.b16 %v363
    %v396 = vunpack.c.l.b16 %v364
    %v397 = vunpack.c.l.b16 %v365
    %v398 = vunpack.c.l.b16 %v366
    %v399 = vunpack.c.l.b16 %v367
    %v400 = vunpack.c.l.b16 %v368
    %v401 = vunpack.c.l.b16 %v369
    %v402 = vunpack.c.l.b16 %v370
    %v403 = vunpack.c.l.b16 %v371
    %v404 = vunpack.c.l.b16 %v372
    %v405 = vunpack.c.l.b16 %v373
    %v406 = vunpack.c.l.b16 %v374
    %v407 = vpack.c.b16 %v392, %v391
    %v408 = vpack.c.b16 %v394, %v393
    %v409 = vpack.c.b16 %v396, %v395
    %v410 = vpack.c.b16 %v398, %v397
    %v411 = vpack.c.b16 %v400, %v399
    %v412 = vpack.c.b16 %v402, %v401
    %v413 = vpack.c.b16 %v404, %v403
    %v414 = vpack.c.b16 %v406, %v405
    %423 = vmatprep.subr.bf16.mxu0 0
    %424 = vmatpush1.bf16.msra.mxu0 %v407
    %425 = vmatprep.subr.bf16.mxu0 0
    %426 = vmatpush1.bf16.msra.mxu0 %v408
    %427 = vmatprep.subr.bf16.mxu0 0
    %428 = vmatpush1.bf16.msra.mxu0 %v409
    %429 = vmatprep.subr.bf16.mxu0 0
    %430 = vmatpush1.bf16.msra.mxu0 %v410
    %431 = vmatprep.subr.bf16.mxu0 0
    %432 = vmatpush1.bf16.msra.mxu0 %v411
    %433 = vmatprep.subr.bf16.mxu0 0
    %434 = vmatpush1.bf16.msra.mxu0 %v412
    %435 = vmatprep.subr.bf16.mxu0 0
    %436 = vmatpush1.bf16.msra.mxu0 %v413
    %437 = vmatprep.subr.bf16.mxu0 0
    %438 = vmatpush1.bf16.msra.mxu0 %v414
    %439 = vmatprep.subr.bf16.mxu0 0
    %440 = vmatpush1.bf16.msra.mxu0 0
    %441 = vmatprep.subr.bf16.mxu0 0
    %442 = vmatpush1.bf16.msra.mxu0 0
    %443 = vmatprep.subr.bf16.mxu0 0
    %444 = vmatpush1.bf16.msra.mxu0 0
    %445 = vmatprep.subr.bf16.mxu0 0
    %446 = vmatpush1.bf16.msra.mxu0 0
    %447 = vmatprep.subr.bf16.mxu0 0
    %448 = vmatpush1.bf16.msra.mxu0 0
    %449 = vmatprep.subr.bf16.mxu0 0
    %450 = vmatpush1.bf16.msra.mxu0 0
    %451 = vmatprep.subr.bf16.mxu0 0
    %452 = vmatpush1.bf16.msra.mxu0 0
    %453 = vmatprep.subr.bf16.mxu0 0
    %454 = vmatpush1.bf16.msra.mxu0 0
    %455 = vmatprep.mubr.bf16.mxu0 0
    %456 = vmatmul.mubr.bf16.gmra.mrb[0].mxu0 %v356
    %v457 = vpop.f32.mrb[0].mxu0
    %v458 = vadd.f32 0.0, %v457
    %v459 = vpop.f32.mrb[0].mxu0
    %v460 = vpop.f32.mrb[0].mxu0
    %v461 = vadd.f32 0.0, %v460
    %v462 = vpop.f32.mrb[0].mxu0
    %463 = vmatprep.mubr.bf16.mxu0 0
    %464 = vmatmul.mubr.bf16.gmra.mrb[0].mxu0 %v357
    %v465 = vpop.f32.mrb[0].mxu0
    %v466 = vadd.f32 0.0, %v465
    %v467 = vpop.f32.mrb[0].mxu0
    %v468 = vpop.f32.mrb[0].mxu0
    %v469 = vadd.f32 0.0, %v468
    %v470 = vpop.f32.mrb[0].mxu0
    %471 = vdwg.mxu0
    %v472 = vadd.f32 %v338, %v458
    %v473 = vadd.f32 %v341, %v461
    %v474 = vadd.f32 %v346, %v466
    %v475 = vadd.f32 %v349, %v469
    %v476 = vld [vmem:[%s4] sm:$0x1]
    %v478 = vlaneseq
    %v479 = vshrl.u32 %v478, 7
    %v480 = vsub.s32 0, %v479
    %v481 = vrot.slane %v476, %v480
    %v483 = vadd.f32 %v472, %v481
    %v484 = vadd.f32 %v473, %v481
    %v485 = vadd.f32 %v474, %v481
    %v486 = vadd.f32 %v475, %v481
    %vm487 = vcmp.gt.f32.partialorder %v483, 0.0
    %vm488 = vcmp.gt.f32.partialorder %v484, 0.0
    %vm489 = vcmp.gt.f32.partialorder %v485, 0.0
    %vm490 = vcmp.gt.f32.partialorder %v486, 0.0
    %v491 = vmul.f32 %v483, 0.2
    %v492 = vmul.f32 %v484, 0.2
    %v493 = vmul.f32 %v485, 0.2
    %v494 = vmul.f32 %v486, 0.2
    %v495 = vsel %vm487, %v483, %v491
    %v496 = vsel %vm488, %v484, %v492
    %v497 = vsel %vm489, %v485, %v493
    %v498 = vsel %vm490, %v486, %v494
    %499 = vst [vmem:[#allocation2] sm:$0x1] 0.0
    %500 = vst [vmem:[#allocation2 + $0x18] sm:$0x1] 0.0
    %501 = vst [vmem:[#allocation2 + $0x11] sm:$0x1] 0.0
    %502 = vst [vmem:[#allocation2 + $0x29] sm:$0x1] 0.0
    %503 = vst [vmem:[#allocation2 + $0x1] sm:$0xff] %v495
    %504 = vst [vmem:[#allocation2 + $0x9] sm:$0xff] %v496
    %505 = vst [vmem:[#allocation2 + $0x19] sm:$0xff] %v497
    %506 = vst [vmem:[#allocation2 + $0x21] sm:$0xff] %v498
    %v507 = vld [vmem:[#allocation2] sm:$0xff]
    %v508 = vld [vmem:[#allocation2 + $0x8] sm:$0xff]
    %v509 = vld [vmem:[#allocation2 + $0x18] sm:$0xff]
    %v510 = vld [vmem:[#allocation2 + $0x20] sm:$0xff]
    %v511 = vpack.c.bf16 %v508, %v507
    %v512 = vpack.c.bf16 %v510, %v509
    %v513 = vld [vmem:[%s5] sm:$0xf]
    %v514 = vld [vmem:[%s5 + $0x4] sm:$0xf]
    %v515 = vld [vmem:[%s5 + $0x8] sm:$0xf]
    %v516 = vld [vmem:[%s5 + $0xc] sm:$0xf]
    %v517 = vld [vmem:[%s5 + $0x10] sm:$0xf]
    %v518 = vld [vmem:[%s5 + $0x14] sm:$0xf]
    %v519 = vld [vmem:[%s5 + $0x18] sm:$0xf]
    %v520 = vld [vmem:[%s5 + $0x1c] sm:$0xf]
    %v521 = vld [vmem:[%s5 + $0x20] sm:$0xf]
    %v522 = vld [vmem:[%s5 + $0x24] sm:$0xf]
    %v523 = vld [vmem:[%s5 + $0x28] sm:$0xf]
    %v524 = vld [vmem:[%s5 + $0x2c] sm:$0xf]
    %v525 = vld [vmem:[%s5 + $0x30] sm:$0xf]
    %v526 = vld [vmem:[%s5 + $0x34] sm:$0xf]
    %v527 = vld [vmem:[%s5 + $0x38] sm:$0xf]
    %v528 = vld [vmem:[%s5 + $0x3c] sm:$0xf]
    %v529 = vld [vmem:[#allocation2 + $0x1] sm:$0xff]
    %v530 = vld [vmem:[#allocation2 + $0x9] sm:$0xff]
    %v531 = vld [vmem:[#allocation2 + $0x19] sm:$0xff]
    %v532 = vld [vmem:[#allocation2 + $0x21] sm:$0xff]
    %v533 = vpack.c.bf16 %v530, %v529
    %v534 = vpack.c.bf16 %v532, %v531
    %s535 = scalar_lea.vmem %s5, 64
    %v536 = vld [vmem:[%s535] sm:$0xf]
    %v537 = vld [vmem:[%s535 + $0x4] sm:$0xf]
    %v538 = vld [vmem:[%s535 + $0x8] sm:$0xf]
    %v539 = vld [vmem:[%s535 + $0xc] sm:$0xf]
    %v540 = vld [vmem:[%s535 + $0x10] sm:$0xf]
    %v541 = vld [vmem:[%s535 + $0x14] sm:$0xf]
    %v542 = vld [vmem:[%s535 + $0x18] sm:$0xf]
    %v543 = vld [vmem:[%s535 + $0x1c] sm:$0xf]
    %v544 = vld [vmem:[%s535 + $0x20] sm:$0xf]
    %v545 = vld [vmem:[%s535 + $0x24] sm:$0xf]
    %v546 = vld [vmem:[%s535 + $0x28] sm:$0xf]
    %v547 = vld [vmem:[%s535 + $0x2c] sm:$0xf]
    %v548 = vld [vmem:[%s535 + $0x30] sm:$0xf]
    %v549 = vld [vmem:[%s535 + $0x34] sm:$0xf]
    %v550 = vld [vmem:[%s535 + $0x38] sm:$0xf]
    %v551 = vld [vmem:[%s535 + $0x3c] sm:$0xf]
    %v568 = vunpack.c.l.b16 %v536
    %v569 = vunpack.c.l.b16 %v537
    %v570 = vunpack.c.l.b16 %v538
    %v571 = vunpack.c.l.b16 %v539
    %v572 = vunpack.c.l.b16 %v540
    %v573 = vunpack.c.l.b16 %v541
    %v574 = vunpack.c.l.b16 %v542
    %v575 = vunpack.c.l.b16 %v543
    %v576 = vunpack.c.l.b16 %v544
    %v577 = vunpack.c.l.b16 %v545
    %v578 = vunpack.c.l.b16 %v546
    %v579 = vunpack.c.l.b16 %v547
    %v580 = vunpack.c.l.b16 %v548
    %v581 = vunpack.c.l.b16 %v549
    %v582 = vunpack.c.l.b16 %v550
    %v583 = vunpack.c.l.b16 %v551
    %v584 = vpack.c.b16 %v569, %v568
    %v585 = vpack.c.b16 %v571, %v570
    %v586 = vpack.c.b16 %v573, %v572
    %v587 = vpack.c.b16 %v575, %v574
    %v588 = vpack.c.b16 %v577, %v576
    %v589 = vpack.c.b16 %v579, %v578
    %v590 = vpack.c.b16 %v581, %v580
    %v591 = vpack.c.b16 %v583, %v582
    %600 = vmatprep.subr.bf16.mxu0 0
    %601 = vmatpush1.bf16.msra.mxu0 %v584
    %602 = vmatprep.subr.bf16.mxu0 0
    %603 = vmatpush1.bf16.msra.mxu0 %v585
    %604 = vmatprep.subr.bf16.mxu0 0
    %605 = vmatpush1.bf16.msra.mxu0 %v586
    %606 = vmatprep.subr.bf16.mxu0 0
    %607 = vmatpush1.bf16.msra.mxu0 %v587
    %608 = vmatprep.subr.bf16.mxu0 0
    %609 = vmatpush1.bf16.msra.mxu0 %v588
    %610 = vmatprep.subr.bf16.mxu0 0
    %611 = vmatpush1.bf16.msra.mxu0 %v589
    %612 = vmatprep.subr.bf16.mxu0 0
    %613 = vmatpush1.bf16.msra.mxu0 %v590
    %614 = vmatprep.subr.bf16.mxu0 0
    %615 = vmatpush1.bf16.msra.mxu0 %v591
    %616 = vmatprep.subr.bf16.mxu0 0
    %617 = vmatpush1.bf16.msra.mxu0 0
    %618 = vmatprep.subr.bf16.mxu0 0
    %619 = vmatpush1.bf16.msra.mxu0 0
    %620 = vmatprep.subr.bf16.mxu0 0
    %621 = vmatpush1.bf16.msra.mxu0 0
    %622 = vmatprep.subr.bf16.mxu0 0
    %623 = vmatpush1.bf16.msra.mxu0 0
    %624 = vmatprep.subr.bf16.mxu0 0
    %625 = vmatpush1.bf16.msra.mxu0 0
    %626 = vmatprep.subr.bf16.mxu0 0
    %627 = vmatpush1.bf16.msra.mxu0 0
    %628 = vmatprep.subr.bf16.mxu0 0
    %629 = vmatpush1.bf16.msra.mxu0 0
    %630 = vmatprep.subr.bf16.mxu0 0
    %631 = vmatpush1.bf16.msra.mxu0 0
    %632 = vmatprep.mubr.bf16.mxu0 0
    %633 = vmatmul.mubr.bf16.gmra.mrb[0].mxu0 %v533
    %v634 = vpop.f32.mrb[0].mxu0
    %v635 = vadd.f32 0.0, %v634
    %v636 = vpop.f32.mrb[0].mxu0
    %v637 = vpop.f32.mrb[0].mxu0
    %v638 = vadd.f32 0.0, %v637
    %v639 = vpop.f32.mrb[0].mxu0
    %640 = vmatprep.mubr.bf16.mxu0 0
    %641 = vmatmul.mubr.bf16.gmra.mrb[0].mxu0 %v534
    %v642 = vpop.f32.mrb[0].mxu0
    %v643 = vadd.f32 0.0, %v642
    %v644 = vpop.f32.mrb[0].mxu0
    %v645 = vpop.f32.mrb[0].mxu0
    %v646 = vadd.f32 0.0, %v645
    %v647 = vpop.f32.mrb[0].mxu0
    %648 = vdwg.mxu0
    %v665 = vunpack.c.l.b16 %v513
    %v666 = vunpack.c.l.b16 %v514
    %v667 = vunpack.c.l.b16 %v515
    %v668 = vunpack.c.l.b16 %v516
    %v669 = vunpack.c.l.b16 %v517
    %v670 = vunpack.c.l.b16 %v518
    %v671 = vunpack.c.l.b16 %v519
    %v672 = vunpack.c.l.b16 %v520
    %v673 = vunpack.c.l.b16 %v521
    %v674 = vunpack.c.l.b16 %v522
    %v675 = vunpack.c.l.b16 %v523
    %v676 = vunpack.c.l.b16 %v524
    %v677 = vunpack.c.l.b16 %v525
    %v678 = vunpack.c.l.b16 %v526
    %v679 = vunpack.c.l.b16 %v527
    %v680 = vunpack.c.l.b16 %v528
    %v681 = vpack.c.b16 %v666, %v665
    %v682 = vpack.c.b16 %v668, %v667
    %v683 = vpack.c.b16 %v670, %v669
    %v684 = vpack.c.b16 %v672, %v671
    %v685 = vpack.c.b16 %v674, %v673
    %v686 = vpack.c.b16 %v676, %v675
    %v687 = vpack.c.b16 %v678, %v677
    %v688 = vpack.c.b16 %v680, %v679
    %697 = vmatprep.subr.bf16.mxu0 0
    %698 = vmatpush1.bf16.msra.mxu0 %v681
    %699 = vmatprep.subr.bf16.mxu0 0
    %700 = vmatpush1.bf16.msra.mxu0 %v682
    %701 = vmatprep.subr.bf16.mxu0 0
    %702 = vmatpush1.bf16.msra.mxu0 %v683
    %703 = vmatprep.subr.bf16.mxu0 0
    %704 = vmatpush1.bf16.msra.mxu0 %v684
    %705 = vmatprep.subr.bf16.mxu0 0
    %706 = vmatpush1.bf16.msra.mxu0 %v685
    %707 = vmatprep.subr.bf16.mxu0 0
    %708 = vmatpush1.bf16.msra.mxu0 %v686
    %709 = vmatprep.subr.bf16.mxu0 0
    %710 = vmatpush1.bf16.msra.mxu0 %v687
    %711 = vmatprep.subr.bf16.mxu0 0
    %712 = vmatpush1.bf16.msra.mxu0 %v688
    %713 = vmatprep.subr.bf16.mxu0 0
    %714 = vmatpush1.bf16.msra.mxu0 0
    %715 = vmatprep.subr.bf16.mxu0 0
    %716 = vmatpush1.bf16.msra.mxu0 0
    %717 = vmatprep.subr.bf16.mxu0 0
    %718 = vmatpush1.bf16.msra.mxu0 0
    %719 = vmatprep.subr.bf16.mxu0 0
    %720 = vmatpush1.bf16.msra.mxu0 0
    %721 = vmatprep.subr.bf16.mxu0 0
    %722 = vmatpush1.bf16.msra.mxu0 0
    %723 = vmatprep.subr.bf16.mxu0 0
    %724 = vmatpush1.bf16.msra.mxu0 0
    %725 = vmatprep.subr.bf16.mxu0 0
    %726 = vmatpush1.bf16.msra.mxu0 0
    %727 = vmatprep.subr.bf16.mxu0 0
    %728 = vmatpush1.bf16.msra.mxu0 0
    %729 = vmatprep.mubr.bf16.mxu0 0
    %730 = vmatmul.mubr.bf16.gmra.mrb[0].mxu0 %v511
    %v731 = vpop.f32.mrb[0].mxu0
    %v732 = vadd.f32 %v635, %v731
    %v733 = vpop.f32.mrb[0].mxu0
    %v734 = vpop.f32.mrb[0].mxu0
    %v735 = vadd.f32 %v638, %v734
    %v736 = vpop.f32.mrb[0].mxu0
    %737 = vmatprep.mubr.bf16.mxu0 0
    %738 = vmatmul.mubr.bf16.gmra.mrb[0].mxu0 %v512
    %v739 = vpop.f32.mrb[0].mxu0
    %v740 = vadd.f32 %v643, %v739
    %v741 = vpop.f32.mrb[0].mxu0
    %v742 = vpop.f32.mrb[0].mxu0
    %v743 = vadd.f32 %v646, %v742
    %v744 = vpop.f32.mrb[0].mxu0
    %745 = vdwg.mxu0
    %v746 = vld [vmem:[#allocation2 + $0x2] sm:$0xff]
    %v747 = vld [vmem:[#allocation2 + $0xa] sm:$0xff]
    %v748 = vld [vmem:[#allocation2 + $0x1a] sm:$0xff]
    %v749 = vld [vmem:[#allocation2 + $0x22] sm:$0xff]
    %v750 = vpack.c.bf16 %v747, %v746
    %v751 = vpack.c.bf16 %v749, %v748
    %s752 = scalar_lea.vmem %s5, 128
    %v753 = vld [vmem:[%s752] sm:$0xf]
    %v754 = vld [vmem:[%s752 + $0x4] sm:$0xf]
    %v755 = vld [vmem:[%s752 + $0x8] sm:$0xf]
    %v756 = vld [vmem:[%s752 + $0xc] sm:$0xf]
    %v757 = vld [vmem:[%s752 + $0x10] sm:$0xf]
    %v758 = vld [vmem:[%s752 + $0x14] sm:$0xf]
    %v759 = vld [vmem:[%s752 + $0x18] sm:$0xf]
    %v760 = vld [vmem:[%s752 + $0x1c] sm:$0xf]
    %v761 = vld [vmem:[%s752 + $0x20] sm:$0xf]
    %v762 = vld [vmem:[%s752 + $0x24] sm:$0xf]
    %v763 = vld [vmem:[%s752 + $0x28] sm:$0xf]
    %v764 = vld [vmem:[%s752 + $0x2c] sm:$0xf]
    %v765 = vld [vmem:[%s752 + $0x30] sm:$0xf]
    %v766 = vld [vmem:[%s752 + $0x34] sm:$0xf]
    %v767 = vld [vmem:[%s752 + $0x38] sm:$0xf]
    %v768 = vld [vmem:[%s752 + $0x3c] sm:$0xf]
    %v785 = vunpack.c.l.b16 %v753
    %v786 = vunpack.c.l.b16 %v754
    %v787 = vunpack.c.l.b16 %v755
    %v788 = vunpack.c.l.b16 %v756
    %v789 = vunpack.c.l.b16 %v757
    %v790 = vunpack.c.l.b16 %v758
    %v791 = vunpack.c.l.b16 %v759
    %v792 = vunpack.c.l.b16 %v760
    %v793 = vunpack.c.l.b16 %v761
    %v794 = vunpack.c.l.b16 %v762
    %v795 = vunpack.c.l.b16 %v763
    %v796 = vunpack.c.l.b16 %v764
    %v797 = vunpack.c.l.b16 %v765
    %v798 = vunpack.c.l.b16 %v766
    %v799 = vunpack.c.l.b16 %v767
    %v800 = vunpack.c.l.b16 %v768
    %v801 = vpack.c.b16 %v786, %v785
    %v802 = vpack.c.b16 %v788, %v787
    %v803 = vpack.c.b16 %v790, %v789
    %v804 = vpack.c.b16 %v792, %v791
    %v805 = vpack.c.b16 %v794, %v793
    %v806 = vpack.c.b16 %v796, %v795
    %v807 = vpack.c.b16 %v798, %v797
    %v808 = vpack.c.b16 %v800, %v799
    %817 = vmatprep.subr.bf16.mxu0 0
    %818 = vmatpush1.bf16.msra.mxu0 %v801
    %819 = vmatprep.subr.bf16.mxu0 0
    %820 = vmatpush1.bf16.msra.mxu0 %v802
    %821 = vmatprep.subr.bf16.mxu0 0
    %822 = vmatpush1.bf16.msra.mxu0 %v803
    %823 = vmatprep.subr.bf16.mxu0 0
    %824 = vmatpush1.bf16.msra.mxu0 %v804
    %825 = vmatprep.subr.bf16.mxu0 0
    %826 = vmatpush1.bf16.msra.mxu0 %v805
    %827 = vmatprep.subr.bf16.mxu0 0
    %828 = vmatpush1.bf16.msra.mxu0 %v806
    %829 = vmatprep.subr.bf16.mxu0 0
    %830 = vmatpush1.bf16.msra.mxu0 %v807
    %831 = vmatprep.subr.bf16.mxu0 0
    %832 = vmatpush1.bf16.msra.mxu0 %v808
    %833 = vmatprep.subr.bf16.mxu0 0
    %834 = vmatpush1.bf16.msra.mxu0 0
    %835 = vmatprep.subr.bf16.mxu0 0
    %836 = vmatpush1.bf16.msra.mxu0 0
    %837 = vmatprep.subr.bf16.mxu0 0
    %838 = vmatpush1.bf16.msra.mxu0 0
    %839 = vmatprep.subr.bf16.mxu0 0
    %840 = vmatpush1.bf16.msra.mxu0 0
    %841 = vmatprep.subr.bf16.mxu0 0
    %842 = vmatpush1.bf16.msra.mxu0 0
    %843 = vmatprep.subr.bf16.mxu0 0
    %844 = vmatpush1.bf16.msra.mxu0 0
    %845 = vmatprep.subr.bf16.mxu0 0
    %846 = vmatpush1.bf16.msra.mxu0 0
    %847 = vmatprep.subr.bf16.mxu0 0
    %848 = vmatpush1.bf16.msra.mxu0 0
    %849 = vmatprep.mubr.bf16.mxu0 0
    %850 = vmatmul.mubr.bf16.gmra.mrb[0].mxu0 %v750
    %v851 = vpop.f32.mrb[0].mxu0
    %v852 = vadd.f32 0.0, %v851
    %v853 = vpop.f32.mrb[0].mxu0
    %v854 = vpop.f32.mrb[0].mxu0
    %v855 = vadd.f32 0.0, %v854
    %v856 = vpop.f32.mrb[0].mxu0
    %857 = vmatprep.mubr.bf16.mxu0 0
    %858 = vmatmul.mubr.bf16.gmra.mrb[0].mxu0 %v751
    %v859 = vpop.f32.mrb[0].mxu0
    %v860 = vadd.f32 0.0, %v859
    %v861 = vpop.f32.mrb[0].mxu0
    %v862 = vpop.f32.mrb[0].mxu0
    %v863 = vadd.f32 0.0, %v862
    %v864 = vpop.f32.mrb[0].mxu0
    %865 = vdwg.mxu0
    %v866 = vadd.f32 %v732, %v852
    %v867 = vadd.f32 %v735, %v855
    %v868 = vadd.f32 %v740, %v860
    %v869 = vadd.f32 %v743, %v863
    %v870 = vld [vmem:[%s6] sm:$0x1]
    %v872 = vlaneseq
    %v873 = vshrl.u32 %v872, 7
    %v874 = vsub.s32 0, %v873
    %v875 = vrot.slane %v870, %v874
    %v877 = vadd.f32 %v866, %v875
    %v878 = vadd.f32 %v867, %v875
    %v879 = vadd.f32 %v868, %v875
    %v880 = vadd.f32 %v869, %v875
    %vm881 = vcmp.gt.f32.partialorder %v877, 0.0
    %vm882 = vcmp.gt.f32.partialorder %v878, 0.0
    %vm883 = vcmp.gt.f32.partialorder %v879, 0.0
    %vm884 = vcmp.gt.f32.partialorder %v880, 0.0
    %v885 = vmul.f32 %v877, 0.2
    %v886 = vmul.f32 %v878, 0.2
    %v887 = vmul.f32 %v879, 0.2
    %v888 = vmul.f32 %v880, 0.2
    %v889 = vsel %vm881, %v877, %v885
    %v890 = vsel %vm882, %v878, %v886
    %v891 = vsel %vm883, %v879, %v887
    %v892 = vsel %vm884, %v880, %v888
    %893 = vst [vmem:[#allocation2] sm:$0x1] 0.0
    %894 = vst [vmem:[#allocation2 + $0x18] sm:$0x1] 0.0
    %895 = vst [vmem:[#allocation2 + $0x11] sm:$0x1] 0.0
    %896 = vst [vmem:[#allocation2 + $0x29] sm:$0x1] 0.0
    %897 = vst [vmem:[#allocation2 + $0x1] sm:$0xff] %v889
    %898 = vst [vmem:[#allocation2 + $0x9] sm:$0xff] %v890
    %899 = vst [vmem:[#allocation2 + $0x19] sm:$0xff] %v891
    %900 = vst [vmem:[#allocation2 + $0x21] sm:$0xff] %v892
    %v901 = vld [vmem:[#allocation2] sm:$0xff]
    %v902 = vld [vmem:[#allocation2 + $0x8] sm:$0xff]
    %v903 = vld [vmem:[#allocation2 + $0x18] sm:$0xff]
    %v904 = vld [vmem:[#allocation2 + $0x20] sm:$0xff]
    %v905 = vpack.c.bf16 %v902, %v901
    %v906 = vpack.c.bf16 %v904, %v903
    %v907 = vld [vmem:[%s7] sm:$0xf]
    %v908 = vld [vmem:[%s7 + $0x4] sm:$0xf]
    %v909 = vld [vmem:[%s7 + $0x8] sm:$0xf]
    %v910 = vld [vmem:[%s7 + $0xc] sm:$0xf]
    %v911 = vld [vmem:[%s7 + $0x10] sm:$0xf]
    %v912 = vld [vmem:[%s7 + $0x14] sm:$0xf]
    %v913 = vld [vmem:[%s7 + $0x18] sm:$0xf]
    %v914 = vld [vmem:[%s7 + $0x1c] sm:$0xf]
    %v915 = vld [vmem:[%s7 + $0x20] sm:$0xf]
    %v916 = vld [vmem:[%s7 + $0x24] sm:$0xf]
    %v917 = vld [vmem:[%s7 + $0x28] sm:$0xf]
    %v918 = vld [vmem:[%s7 + $0x2c] sm:$0xf]
    %v919 = vld [vmem:[%s7 + $0x30] sm:$0xf]
    %v920 = vld [vmem:[%s7 + $0x34] sm:$0xf]
    %v921 = vld [vmem:[%s7 + $0x38] sm:$0xf]
    %v922 = vld [vmem:[%s7 + $0x3c] sm:$0xf]
    %v923 = vld [vmem:[#allocation2 + $0x1] sm:$0xff]
    %v924 = vld [vmem:[#allocation2 + $0x9] sm:$0xff]
    %v925 = vld [vmem:[#allocation2 + $0x19] sm:$0xff]
    %v926 = vld [vmem:[#allocation2 + $0x21] sm:$0xff]
    %v927 = vpack.c.bf16 %v924, %v923
    %v928 = vpack.c.bf16 %v926, %v925
    %s929 = scalar_lea.vmem %s7, 64
    %v930 = vld [vmem:[%s929] sm:$0xf]
    %v931 = vld [vmem:[%s929 + $0x4] sm:$0xf]
    %v932 = vld [vmem:[%s929 + $0x8] sm:$0xf]
    %v933 = vld [vmem:[%s929 + $0xc] sm:$0xf]
    %v934 = vld [vmem:[%s929 + $0x10] sm:$0xf]
    %v935 = vld [vmem:[%s929 + $0x14] sm:$0xf]
    %v936 = vld [vmem:[%s929 + $0x18] sm:$0xf]
    %v937 = vld [vmem:[%s929 + $0x1c] sm:$0xf]
    %v938 = vld [vmem:[%s929 + $0x20] sm:$0xf]
    %v939 = vld [vmem:[%s929 + $0x24] sm:$0xf]
    %v940 = vld [vmem:[%s929 + $0x28] sm:$0xf]
    %v941 = vld [vmem:[%s929 + $0x2c] sm:$0xf]
    %v942 = vld [vmem:[%s929 + $0x30] sm:$0xf]
    %v943 = vld [vmem:[%s929 + $0x34] sm:$0xf]
    %v944 = vld [vmem:[%s929 + $0x38] sm:$0xf]
    %v945 = vld [vmem:[%s929 + $0x3c] sm:$0xf]
    %v962 = vunpack.c.l.b16 %v930
    %v963 = vunpack.c.l.b16 %v931
    %v964 = vunpack.c.l.b16 %v932
    %v965 = vunpack.c.l.b16 %v933
    %v966 = vunpack.c.l.b16 %v934
    %v967 = vunpack.c.l.b16 %v935
    %v968 = vunpack.c.l.b16 %v936
    %v969 = vunpack.c.l.b16 %v937
    %v970 = vunpack.c.l.b16 %v938
    %v971 = vunpack.c.l.b16 %v939
    %v972 = vunpack.c.l.b16 %v940
    %v973 = vunpack.c.l.b16 %v941
    %v974 = vunpack.c.l.b16 %v942
    %v975 = vunpack.c.l.b16 %v943
    %v976 = vunpack.c.l.b16 %v944
    %v977 = vunpack.c.l.b16 %v945
    %v978 = vpack.c.b16 %v963, %v962
    %v979 = vpack.c.b16 %v965, %v964
    %v980 = vpack.c.b16 %v967, %v966
    %v981 = vpack.c.b16 %v969, %v968
    %v982 = vpack.c.b16 %v971, %v970
    %v983 = vpack.c.b16 %v973, %v972
    %v984 = vpack.c.b16 %v975, %v974
    %v985 = vpack.c.b16 %v977, %v976
    %994 = vmatprep.subr.bf16.mxu0 0
    %995 = vmatpush1.bf16.msra.mxu0 %v978
    %996 = vmatprep.subr.bf16.mxu0 0
    %997 = vmatpush1.bf16.msra.mxu0 %v979
    %998 = vmatprep.subr.bf16.mxu0 0
    %999 = vmatpush1.bf16.msra.mxu0 %v980
    %1000 = vmatprep.subr.bf16.mxu0 0
    %1001 = vmatpush1.bf16.msra.mxu0 %v981
    %1002 = vmatprep.subr.bf16.mxu0 0
    %1003 = vmatpush1.bf16.msra.mxu0 %v982
    %1004 = vmatprep.subr.bf16.mxu0 0
    %1005 = vmatpush1.bf16.msra.mxu0 %v983
    %1006 = vmatprep.subr.bf16.mxu0 0
    %1007 = vmatpush1.bf16.msra.mxu0 %v984
    %1008 = vmatprep.subr.bf16.mxu0 0
    %1009 = vmatpush1.bf16.msra.mxu0 %v985
    %1010 = vmatprep.subr.bf16.mxu0 0
    %1011 = vmatpush1.bf16.msra.mxu0 0
    %1012 = vmatprep.subr.bf16.mxu0 0
    %1013 = vmatpush1.bf16.msra.mxu0 0
    %1014 = vmatprep.subr.bf16.mxu0 0
    %1015 = vmatpush1.bf16.msra.mxu0 0
    %1016 = vmatprep.subr.bf16.mxu0 0
    %1017 = vmatpush1.bf16.msra.mxu0 0
    %1018 = vmatprep.subr.bf16.mxu0 0
    %1019 = vmatpush1.bf16.msra.mxu0 0
    %1020 = vmatprep.subr.bf16.mxu0 0
    %1021 = vmatpush1.bf16.msra.mxu0 0
    %1022 = vmatprep.subr.bf16.mxu0 0
    %1023 = vmatpush1.bf16.msra.mxu0 0
    %1024 = vmatprep.subr.bf16.mxu0 0
    %1025 = vmatpush1.bf16.msra.mxu0 0
    %1026 = vmatprep.mubr.bf16.mxu0 0
    %1027 = vmatmul.mubr.bf16.gmra.mrb[0].mxu0 %v927
    %v1028 = vpop.f32.mrb[0].mxu0
    %v1029 = vadd.f32 0.0, %v1028
    %v1030 = vpop.f32.mrb[0].mxu0
    %v1031 = vpop.f32.mrb[0].mxu0
    %v1032 = vadd.f32 0.0, %v1031
    %v1033 = vpop.f32.mrb[0].mxu0
    %1034 = vmatprep.mubr.bf16.mxu0 0
    %1035 = vmatmul.mubr.bf16.gmra.mrb[0].mxu0 %v928
    %v1036 = vpop.f32.mrb[0].mxu0
    %v1037 = vadd.f32 0.0, %v1036
    %v1038 = vpop.f32.mrb[0].mxu0
    %v1039 = vpop.f32.mrb[0].mxu0
    %v1040 = vadd.f32 0.0, %v1039
    %v1041 = vpop.f32.mrb[0].mxu0
    %1042 = vdwg.mxu0
    %v1059 = vunpack.c.l.b16 %v907
    %v1060 = vunpack.c.l.b16 %v908
    %v1061 = vunpack.c.l.b16 %v909
    %v1062 = vunpack.c.l.b16 %v910
    %v1063 = vunpack.c.l.b16 %v911
    %v1064 = vunpack.c.l.b16 %v912
    %v1065 = vunpack.c.l.b16 %v913
    %v1066 = vunpack.c.l.b16 %v914
    %v1067 = vunpack.c.l.b16 %v915
    %v1068 = vunpack.c.l.b16 %v916
    %v1069 = vunpack.c.l.b16 %v917
    %v1070 = vunpack.c.l.b16 %v918
    %v1071 = vunpack.c.l.b16 %v919
    %v1072 = vunpack.c.l.b16 %v920
    %v1073 = vunpack.c.l.b16 %v921
    %v1074 = vunpack.c.l.b16 %v922
    %v1075 = vpack.c.b16 %v1060, %v1059
    %v1076 = vpack.c.b16 %v1062, %v1061
    %v1077 = vpack.c.b16 %v1064, %v1063
    %v1078 = vpack.c.b16 %v1066, %v1065
    %v1079 = vpack.c.b16 %v1068, %v1067
    %v1080 = vpack.c.b16 %v1070, %v1069
    %v1081 = vpack.c.b16 %v1072, %v1071
    %v1082 = vpack.c.b16 %v1074, %v1073
    %1091 = vmatprep.subr.bf16.mxu0 0
    %1092 = vmatpush1.bf16.msra.mxu0 %v1075
    %1093 = vmatprep.subr.bf16.mxu0 0
    %1094 = vmatpush1.bf16.msra.mxu0 %v1076
    %1095 = vmatprep.subr.bf16.mxu0 0
    %1096 = vmatpush1.bf16.msra.mxu0 %v1077
    %1097 = vmatprep.subr.bf16.mxu0 0
    %1098 = vmatpush1.bf16.msra.mxu0 %v1078
    %1099 = vmatprep.subr.bf16.mxu0 0
    %1100 = vmatpush1.bf16.msra.mxu0 %v1079
    %1101 = vmatprep.subr.bf16.mxu0 0
    %1102 = vmatpush1.bf16.msra.mxu0 %v1080
    %1103 = vmatprep.subr.bf16.mxu0 0
    %1104 = vmatpush1.bf16.msra.mxu0 %v1081
    %1105 = vmatprep.subr.bf16.mxu0 0
    %1106 = vmatpush1.bf16.msra.mxu0 %v1082
    %1107 = vmatprep.subr.bf16.mxu0 0
    %1108 = vmatpush1.bf16.msra.mxu0 0
    %1109 = vmatprep.subr.bf16.mxu0 0
    %1110 = vmatpush1.bf16.msra.mxu0 0
    %1111 = vmatprep.subr.bf16.mxu0 0
    %1112 = vmatpush1.bf16.msra.mxu0 0
    %1113 = vmatprep.subr.bf16.mxu0 0
    %1114 = vmatpush1.bf16.msra.mxu0 0
    %1115 = vmatprep.subr.bf16.mxu0 0
    %1116 = vmatpush1.bf16.msra.mxu0 0
    %1117 = vmatprep.subr.bf16.mxu0 0
    %1118 = vmatpush1.bf16.msra.mxu0 0
    %1119 = vmatprep.subr.bf16.mxu0 0
    %1120 = vmatpush1.bf16.msra.mxu0 0
    %1121 = vmatprep.subr.bf16.mxu0 0
    %1122 = vmatpush1.bf16.msra.mxu0 0
    %1123 = vmatprep.mubr.bf16.mxu0 0
    %1124 = vmatmul.mubr.bf16.gmra.mrb[0].mxu0 %v905
    %v1125 = vpop.f32.mrb[0].mxu0
    %v1126 = vadd.f32 %v1029, %v1125
    %v1127 = vpop.f32.mrb[0].mxu0
    %v1128 = vpop.f32.mrb[0].mxu0
    %v1129 = vadd.f32 %v1032, %v1128
    %v1130 = vpop.f32.mrb[0].mxu0
    %1131 = vmatprep.mubr.bf16.mxu0 0
    %1132 = vmatmul.mubr.bf16.gmra.mrb[0].mxu0 %v906
    %v1133 = vpop.f32.mrb[0].mxu0
    %v1134 = vadd.f32 %v1037, %v1133
    %v1135 = vpop.f32.mrb[0].mxu0
    %v1136 = vpop.f32.mrb[0].mxu0
    %v1137 = vadd.f32 %v1040, %v1136
    %v1138 = vpop.f32.mrb[0].mxu0
    %1139 = vdwg.mxu0
    %v1140 = vld [vmem:[#allocation2 + $0x2] sm:$0xff]
    %v1141 = vld [vmem:[#allocation2 + $0xa] sm:$0xff]
    %v1142 = vld [vmem:[#allocation2 + $0x1a] sm:$0xff]
    %v1143 = vld [vmem:[#allocation2 + $0x22] sm:$0xff]
    %v1144 = vpack.c.bf16 %v1141, %v1140
    %v1145 = vpack.c.bf16 %v1143, %v1142
    %s1146 = scalar_lea.vmem %s7, 128
    %v1147 = vld [vmem:[%s1146] sm:$0xf]
    %v1148 = vld [vmem:[%s1146 + $0x4] sm:$0xf]
    %v1149 = vld [vmem:[%s1146 + $0x8] sm:$0xf]
    %v1150 = vld [vmem:[%s1146 + $0xc] sm:$0xf]
    %v1151 = vld [vmem:[%s1146 + $0x10] sm:$0xf]
    %v1152 = vld [vmem:[%s1146 + $0x14] sm:$0xf]
    %v1153 = vld [vmem:[%s1146 + $0x18] sm:$0xf]
    %v1154 = vld [vmem:[%s1146 + $0x1c] sm:$0xf]
    %v1155 = vld [vmem:[%s1146 + $0x20] sm:$0xf]
    %v1156 = vld [vmem:[%s1146 + $0x24] sm:$0xf]
    %v1157 = vld [vmem:[%s1146 + $0x28] sm:$0xf]
    %v1158 = vld [vmem:[%s1146 + $0x2c] sm:$0xf]
    %v1159 = vld [vmem:[%s1146 + $0x30] sm:$0xf]
    %v1160 = vld [vmem:[%s1146 + $0x34] sm:$0xf]
    %v1161 = vld [vmem:[%s1146 + $0x38] sm:$0xf]
    %v1162 = vld [vmem:[%s1146 + $0x3c] sm:$0xf]
    %v1179 = vunpack.c.l.b16 %v1147
    %v1180 = vunpack.c.l.b16 %v1148
    %v1181 = vunpack.c.l.b16 %v1149
    %v1182 = vunpack.c.l.b16 %v1150
    %v1183 = vunpack.c.l.b16 %v1151
    %v1184 = vunpack.c.l.b16 %v1152
    %v1185 = vunpack.c.l.b16 %v1153
    %v1186 = vunpack.c.l.b16 %v1154
    %v1187 = vunpack.c.l.b16 %v1155
    %v1188 = vunpack.c.l.b16 %v1156
    %v1189 = vunpack.c.l.b16 %v1157
    %v1190 = vunpack.c.l.b16 %v1158
    %v1191 = vunpack.c.l.b16 %v1159
    %v1192 = vunpack.c.l.b16 %v1160
    %v1193 = vunpack.c.l.b16 %v1161
    %v1194 = vunpack.c.l.b16 %v1162
    %v1195 = vpack.c.b16 %v1180, %v1179
    %v1196 = vpack.c.b16 %v1182, %v1181
    %v1197 = vpack.c.b16 %v1184, %v1183
    %v1198 = vpack.c.b16 %v1186, %v1185
    %v1199 = vpack.c.b16 %v1188, %v1187
    %v1200 = vpack.c.b16 %v1190, %v1189
    %v1201 = vpack.c.b16 %v1192, %v1191
    %v1202 = vpack.c.b16 %v1194, %v1193
    %1211 = vmatprep.subr.bf16.mxu0 0
    %1212 = vmatpush1.bf16.msra.mxu0 %v1195
    %1213 = vmatprep.subr.bf16.mxu0 0
    %1214 = vmatpush1.bf16.msra.mxu0 %v1196
    %1215 = vmatprep.subr.bf16.mxu0 0
    %1216 = vmatpush1.bf16.msra.mxu0 %v1197
    %1217 = vmatprep.subr.bf16.mxu0 0
    %1218 = vmatpush1.bf16.msra.mxu0 %v1198
    %1219 = vmatprep.subr.bf16.mxu0 0
    %1220 = vmatpush1.bf16.msra.mxu0 %v1199
    %1221 = vmatprep.subr.bf16.mxu0 0
    %1222 = vmatpush1.bf16.msra.mxu0 %v1200
    %1223 = vmatprep.subr.bf16.mxu0 0
    %1224 = vmatpush1.bf16.msra.mxu0 %v1201
    %1225 = vmatprep.subr.bf16.mxu0 0
    %1226 = vmatpush1.bf16.msra.mxu0 %v1202
    %1227 = vmatprep.subr.bf16.mxu0 0
    %1228 = vmatpush1.bf16.msra.mxu0 0
    %1229 = vmatprep.subr.bf16.mxu0 0
    %1230 = vmatpush1.bf16.msra.mxu0 0
    %1231 = vmatprep.subr.bf16.mxu0 0
    %1232 = vmatpush1.bf16.msra.mxu0 0
    %1233 = vmatprep.subr.bf16.mxu0 0
    %1234 = vmatpush1.bf16.msra.mxu0 0
    %1235 = vmatprep.subr.bf16.mxu0 0
    %1236 = vmatpush1.bf16.msra.mxu0 0
    %1237 = vmatprep.subr.bf16.mxu0 0
    %1238 = vmatpush1.bf16.msra.mxu0 0
    %1239 = vmatprep.subr.bf16.mxu0 0
    %1240 = vmatpush1.bf16.msra.mxu0 0
    %1241 = vmatprep.subr.bf16.mxu0 0
    %1242 = vmatpush1.bf16.msra.mxu0 0
    %1243 = vmatprep.mubr.bf16.mxu0 0
    %1244 = vmatmul.mubr.bf16.gmra.mrb[0].mxu0 %v1144
    %v1245 = vpop.f32.mrb[0].mxu0
    %v1246 = vadd.f32 0.0, %v1245
    %v1247 = vpop.f32.mrb[0].mxu0
    %v1248 = vpop.f32.mrb[0].mxu0
    %v1249 = vadd.f32 0.0, %v1248
    %v1250 = vpop.f32.mrb[0].mxu0
    %1251 = vmatprep.mubr.bf16.mxu0 0
    %1252 = vmatmul.mubr.bf16.gmra.mrb[0].mxu0 %v1145
    %v1253 = vpop.f32.mrb[0].mxu0
    %v1254 = vadd.f32 0.0, %v1253
    %v1255 = vpop.f32.mrb[0].mxu0
    %v1256 = vpop.f32.mrb[0].mxu0
    %v1257 = vadd.f32 0.0, %v1256
    %v1258 = vpop.f32.mrb[0].mxu0
    %1259 = vdwg.mxu0
    %v1260 = vadd.f32 %v1126, %v1246
    %v1261 = vadd.f32 %v1129, %v1249
    %v1262 = vadd.f32 %v1134, %v1254
    %v1263 = vadd.f32 %v1137, %v1257
    %v1264 = vld [vmem:[%s8] sm:$0x1]
    %v1266 = vlaneseq
    %v1267 = vshrl.u32 %v1266, 7
    %v1268 = vsub.s32 0, %v1267
    %v1269 = vrot.slane %v1264, %v1268
    %v1271 = vadd.f32 %v1260, %v1269
    %v1272 = vadd.f32 %v1261, %v1269
    %v1273 = vadd.f32 %v1262, %v1269
    %v1274 = vadd.f32 %v1263, %v1269
    %v1275 = vadd.f32 %v1271, %v483
    %v1276 = vadd.f32 %v1272, %v484
    %v1277 = vadd.f32 %v1273, %v485
    %v1278 = vadd.f32 %v1274, %v486
    %v1279 = vld [vmem:[%s9] sm:$0xff]
    %v1280 = vld [vmem:[%s9 + $0x8] sm:$0xff]
    %vm1281 = vcmask 261120
    %v1283 = vsel %vm1281, %v1279, 0
    %v1286 = vsel %vm1281, %v1280, 0
    %1288 = vmatprep.subr.mxu0 0.0
    %1289 = vmatpush1.msra.mxu0 %v1275
    %1290 = vmatprep.subr.mxu0 0.0
    %1291 = vmatpush1.msra.mxu0 %v1276
    %1292 = vmatprep.subr.mxu0 0.0
    %1293 = vmatpush1.msra.mxu0 %v1277
    %1294 = vmatprep.subr.mxu0 0.0
    %1295 = vmatpush1.msra.mxu0 %v1278
    %1296 = vmatprep.subr.mxu0 0.0
    %1297 = vmatpush1.msra.mxu0 0.0
    %1298 = vmatprep.subr.mxu0 0.0
    %1299 = vmatpush1.msra.mxu0 0.0
    %1300 = vmatprep.subr.mxu0 0.0
    %1301 = vmatpush1.msra.mxu0 0.0
    %1302 = vmatprep.subr.mxu0 0.0
    %1303 = vmatpush1.msra.mxu0 0.0
    %1304 = vmatprep.subr.mxu0 0.0
    %1305 = vmatpush1.msra.mxu0 0.0
    %1306 = vmatprep.subr.mxu0 0.0
    %1307 = vmatpush1.msra.mxu0 0.0
    %1308 = vmatprep.subr.mxu0 0.0
    %1309 = vmatpush1.msra.mxu0 0.0
    %1310 = vmatprep.subr.mxu0 0.0
    %1311 = vmatpush1.msra.mxu0 0.0
    %1312 = vmatprep.subr.mxu0 0.0
    %1313 = vmatpush1.msra.mxu0 0.0
    %1314 = vmatprep.subr.mxu0 0.0
    %1315 = vmatpush1.msra.mxu0 0.0
    %1316 = vmatprep.subr.mxu0 0.0
    %1317 = vmatpush1.msra.mxu0 0.0
    %1318 = vmatprep.subr.mxu0 0.0
    %1319 = vmatpush1.msra.mxu0 0.0
    %1320 = vmatprep.subr.mxu0 0.0
    %1321 = vmatpush1.msra.mxu0 0.0
    %1322 = vmatprep.subr.mxu0 0.0
    %1323 = vmatpush1.msra.mxu0 0.0
    %1324 = vmatprep.subr.mxu0 0.0
    %1325 = vmatpush1.msra.mxu0 0.0
    %1326 = vmatprep.subr.mxu0 0.0
    %1327 = vmatpush1.msra.mxu0 0.0
    %1328 = vmatprep.subr.mxu0 0.0
    %1329 = vmatpush1.msra.mxu0 0.0
    %1330 = vmatprep.subr.mxu0 0.0
    %1331 = vmatpush1.msra.mxu0 0.0
    %1332 = vmatprep.subr.mxu0 0.0
    %1333 = vmatpush1.msra.mxu0 0.0
    %1334 = vmatprep.subr.mxu0 0.0
    %1335 = vmatpush1.msra.mxu0 0.0
    %1336 = vmatprep.subr.mxu0 0.0
    %1337 = vmatpush1.msra.mxu0 0.0
    %1338 = vmatprep.subr.mxu0 0.0
    %1339 = vmatpush1.msra.mxu0 0.0
    %1340 = vmatprep.subr.mxu0 0.0
    %1341 = vmatpush1.msra.mxu0 0.0
    %1342 = vmatprep.subr.mxu0 0.0
    %1343 = vmatpush1.msra.mxu0 0.0
    %1344 = vmatprep.subr.mxu0 0.0
    %1345 = vmatpush1.msra.mxu0 0.0
    %1346 = vmatprep.subr.mxu0 0.0
    %1347 = vmatpush1.msra.mxu0 0.0
    %1348 = vmatprep.subr.mxu0 0.0
    %1349 = vmatpush1.msra.mxu0 0.0
    %1350 = vmatprep.subr.mxu0 0.0
    %1351 = vmatpush1.msra.mxu0 0.0
    %1352 = vmatprep.mubr.f32.mxu0 0.0
    %1353 = vmatmul.mubr.f32.gmra.mrb[0].mxu0 %v1283
    %v1354 = vpop.f32.mrb[0].mxu0
    %v1355 = vadd.f32 0.0, %v1354
    %v1356 = vpop.f32.mrb[0].mxu0
    %1357 = vmatprep.mubr.f32.mxu0 0.0
    %1358 = vmatmul.mubr.f32.gmra.mrb[0].mxu0 %v1286
    %v1359 = vpop.f32.mrb[0].mxu0
    %v1360 = vadd.f32 0.0, %v1359
    %v1361 = vpop.f32.mrb[0].mxu0
    %1362 = vdwg.mxu0
    %v1363 = vld [vmem:[%s10] sm:$0xff]
    %v1364 = vld [vmem:[%s10 + $0x8] sm:$0xff]
    %v1365 = vld [vmem:[%s10 + $0x10] sm:$0xff]
    %v1366 = vld [vmem:[%s10 + $0x18] sm:$0xff]
    %v1367 = vld [vmem:[%s10 + $0x20] sm:$0xff]
    %v1368 = vld [vmem:[%s10 + $0x28] sm:$0xff]
    %v1369 = vld [vmem:[%s10 + $0x30] sm:$0xff]
    %v1370 = vld [vmem:[%s10 + $0x38] sm:$0xff]
    %v1371 = vld [vmem:[%s10 + $0x40] sm:$0xff]
    %v1372 = vld [vmem:[%s10 + $0x48] sm:$0xff]
    %v1373 = vld [vmem:[%s10 + $0x50] sm:$0xff]
    %v1374 = vld [vmem:[%s10 + $0x58] sm:$0xff]
    %v1375 = vld [vmem:[%s10 + $0x60] sm:$0xff]
    %v1376 = vld [vmem:[%s10 + $0x68] sm:$0xff]
    %v1377 = vld [vmem:[%s10 + $0x70] sm:$0xff]
    %v1378 = vld [vmem:[%s10 + $0x78] sm:$0xff]
    %1379 = vmatprep.subr.mxu0 0.0
    %1380 = vmatpush1.msra.mxu0 %v1363
    %1381 = vmatprep.subr.mxu0 0.0
    %1382 = vmatpush1.msra.mxu0 %v1364
    %1383 = vmatprep.subr.mxu0 0.0
    %1384 = vmatpush1.msra.mxu0 %v1365
    %1385 = vmatprep.subr.mxu0 0.0
    %1386 = vmatpush1.msra.mxu0 %v1366
    %1387 = vmatprep.subr.mxu0 0.0
    %1388 = vmatpush1.msra.mxu0 %v1367
    %1389 = vmatprep.subr.mxu0 0.0
    %1390 = vmatpush1.msra.mxu0 %v1368
    %1391 = vmatprep.subr.mxu0 0.0
    %1392 = vmatpush1.msra.mxu0 %v1369
    %1393 = vmatprep.subr.mxu0 0.0
    %1394 = vmatpush1.msra.mxu0 %v1370
    %1395 = vmatprep.subr.mxu0 0.0
    %1396 = vmatpush1.msra.mxu0 %v1371
    %1397 = vmatprep.subr.mxu0 0.0
    %1398 = vmatpush1.msra.mxu0 %v1372
    %1399 = vmatprep.subr.mxu0 0.0
    %1400 = vmatpush1.msra.mxu0 %v1373
    %1401 = vmatprep.subr.mxu0 0.0
    %1402 = vmatpush1.msra.mxu0 %v1374
    %1403 = vmatprep.subr.mxu0 0.0
    %1404 = vmatpush1.msra.mxu0 %v1375
    %1405 = vmatprep.subr.mxu0 0.0
    %1406 = vmatpush1.msra.mxu0 %v1376
    %1407 = vmatprep.subr.mxu0 0.0
    %1408 = vmatpush1.msra.mxu0 %v1377
    %1409 = vmatprep.subr.mxu0 0.0
    %1410 = vmatpush1.msra.mxu0 %v1378
    %1411 = vmatprep.subr.mxu0 0.0
    %1412 = vmatpush1.msra.mxu0 0.0
    %1413 = vmatprep.subr.mxu0 0.0
    %1414 = vmatpush1.msra.mxu0 0.0
    %1415 = vmatprep.subr.mxu0 0.0
    %1416 = vmatpush1.msra.mxu0 0.0
    %1417 = vmatprep.subr.mxu0 0.0
    %1418 = vmatpush1.msra.mxu0 0.0
    %1419 = vmatprep.subr.mxu0 0.0
    %1420 = vmatpush1.msra.mxu0 0.0
    %1421 = vmatprep.subr.mxu0 0.0
    %1422 = vmatpush1.msra.mxu0 0.0
    %1423 = vmatprep.subr.mxu0 0.0
    %1424 = vmatpush1.msra.mxu0 0.0
    %1425 = vmatprep.subr.mxu0 0.0
    %1426 = vmatpush1.msra.mxu0 0.0
    %1427 = vmatprep.subr.mxu0 0.0
    %1428 = vmatpush1.msra.mxu0 0.0
    %1429 = vmatprep.subr.mxu0 0.0
    %1430 = vmatpush1.msra.mxu0 0.0
    %1431 = vmatprep.subr.mxu0 0.0
    %1432 = vmatpush1.msra.mxu0 0.0
    %1433 = vmatprep.subr.mxu0 0.0
    %1434 = vmatpush1.msra.mxu0 0.0
    %1435 = vmatprep.subr.mxu0 0.0
    %1436 = vmatpush1.msra.mxu0 0.0
    %1437 = vmatprep.subr.mxu0 0.0
    %1438 = vmatpush1.msra.mxu0 0.0
    %1439 = vmatprep.subr.mxu0 0.0
    %1440 = vmatpush1.msra.mxu0 0.0
    %1441 = vmatprep.subr.mxu0 0.0
    %1442 = vmatpush1.msra.mxu0 0.0
    %1443 = vmatprep.mubr.f32.mxu0 0.0
    %1444 = vmatmul.mubr.f32.gmra.mrb[0].mxu0 %v1355
    %v1445 = vpop.f32.mrb[0].mxu0
    %v1446 = vadd.f32 0.0, %v1445
    %v1447 = vpop.f32.mrb[0].mxu0
    %1448 = vmatprep.mubr.f32.mxu0 0.0
    %1449 = vmatmul.mubr.f32.gmra.mrb[0].mxu0 %v1360
    %v1450 = vpop.f32.mrb[0].mxu0
    %v1451 = vadd.f32 0.0, %v1450
    %v1452 = vpop.f32.mrb[0].mxu0
    %1453 = vdwg.mxu0
    %v1454 = vpack.c.bf16 %v1451, %v1446
    %v1455 = vld [vmem:[%s15] sm:$0xf]
    %v1456 = vld [vmem:[%s15 + $0x4] sm:$0xf]
    %v1457 = vld [vmem:[%s15 + $0x8] sm:$0xf]
    %v1458 = vld [vmem:[%s15 + $0xc] sm:$0xf]
    %v1459 = vld [vmem:[%s15 + $0x10] sm:$0xf]
    %v1460 = vld [vmem:[%s15 + $0x14] sm:$0xf]
    %v1461 = vld [vmem:[%s15 + $0x18] sm:$0xf]
    %v1462 = vld [vmem:[%s15 + $0x1c] sm:$0xf]
    %v1471 = vunpack.c.l.b16 %v1455
    %v1472 = vunpack.c.l.b16 %v1456
    %v1473 = vunpack.c.l.b16 %v1457
    %v1474 = vunpack.c.l.b16 %v1458
    %v1475 = vunpack.c.l.b16 %v1459
    %v1476 = vunpack.c.l.b16 %v1460
    %v1477 = vunpack.c.l.b16 %v1461
    %v1478 = vunpack.c.l.b16 %v1462
    %v1479 = vpack.c.b16 %v1472, %v1471
    %v1480 = vpack.c.b16 %v1474, %v1473
    %v1481 = vpack.c.b16 %v1476, %v1475
    %v1482 = vpack.c.b16 %v1478, %v1477
    %vm1487 = vcmask 523264
    %v1489 = vsel %vm1487, %v1454, 0
    %1491 = vmatprep.subr.bf16.mxu0 0
    %1492 = vmatpush1.bf16.msra.mxu0 %v1479
    %1493 = vmatprep.subr.bf16.mxu0 0
    %1494 = vmatpush1.bf16.msra.mxu0 %v1480
    %1495 = vmatprep.subr.bf16.mxu0 0
    %1496 = vmatpush1.bf16.msra.mxu0 %v1481
    %1497 = vmatprep.subr.bf16.mxu0 0
    %1498 = vmatpush1.bf16.msra.mxu0 %v1482
    %1499 = vmatprep.subr.bf16.mxu0 0
    %1500 = vmatpush1.bf16.msra.mxu0 0
    %1501 = vmatprep.subr.bf16.mxu0 0
    %1502 = vmatpush1.bf16.msra.mxu0 0
    %1503 = vmatprep.subr.bf16.mxu0 0
    %1504 = vmatpush1.bf16.msra.mxu0 0
    %1505 = vmatprep.subr.bf16.mxu0 0
    %1506 = vmatpush1.bf16.msra.mxu0 0
    %1507 = vmatprep.subr.bf16.mxu0 0
    %1508 = vmatpush1.bf16.msra.mxu0 0
    %1509 = vmatprep.subr.bf16.mxu0 0
    %1510 = vmatpush1.bf16.msra.mxu0 0
    %1511 = vmatprep.subr.bf16.mxu0 0
    %1512 = vmatpush1.bf16.msra.mxu0 0
    %1513 = vmatprep.subr.bf16.mxu0 0
    %1514 = vmatpush1.bf16.msra.mxu0 0
    %1515 = vmatprep.subr.bf16.mxu0 0
    %1516 = vmatpush1.bf16.msra.mxu0 0
    %1517 = vmatprep.subr.bf16.mxu0 0
    %1518 = vmatpush1.bf16.msra.mxu0 0
    %1519 = vmatprep.subr.bf16.mxu0 0
    %1520 = vmatpush1.bf16.msra.mxu0 0
    %1521 = vmatprep.subr.bf16.mxu0 0
    %1522 = vmatpush1.bf16.msra.mxu0 0
    %1523 = vmatprep.mubr.bf16.mxu0 0
    %1524 = vmatmul.mubr.bf16.gmra.mrb[0].mxu0 %v1489
    %v1525 = vpop.f32.mrb[0].mxu0
    %v1526 = vadd.f32 0.0, %v1525
    %v1527 = vpop.f32.mrb[0].mxu0
    %v1528 = vpop.f32.mrb[0].mxu0
    %v1529 = vadd.f32 0.0, %v1528
    %v1530 = vpop.f32.mrb[0].mxu0
    %1531 = vdwg.mxu0
    %vm1532 = vcmp.gt.f32.partialorder %v1446, 0.0
    %vm1533 = vcmp.gt.f32.partialorder %v1451, 0.0
    %v1534 = vmul.f32 %v1446, 0.2
    %v1535 = vmul.f32 %v1451, 0.2
    %v1536 = vsel %vm1532, %v1446, %v1534
    %v1537 = vsel %vm1533, %v1451, %v1535
    %vm1538 = vcmask 516096
    %1539 = vst.msk [vmem:[#allocation3] sm:$0x1] %vm1538, 0.0
    %1540 = vst.msk [vmem:[#allocation3 + $0x10] sm:$0x1] %vm1538, 0.0
    %1541 = vst.msk [vmem:[#allocation3 + $0x9] sm:$0x1] %vm1538, 0.0
    %1542 = vst.msk [vmem:[#allocation3 + $0x19] sm:$0x1] %vm1538, 0.0
    %1543 = vst.msk [vmem:[#allocation3 + $0x1] sm:$0xff] %vm1487, %v1536
    %1544 = vst.msk [vmem:[#allocation3 + $0x11] sm:$0xff] %vm1487, %v1537
    %v1545 = vld [vmem:[#allocation3] sm:$0xff]
    %v1546 = vld [vmem:[#allocation3 + $0x10] sm:$0xff]
    %v1547 = vpack.c.bf16 %v1546, %v1545
    %v1548 = vld [vmem:[%s11] sm:$0xf]
    %v1549 = vld [vmem:[%s11 + $0x4] sm:$0xf]
    %v1550 = vld [vmem:[%s11 + $0x8] sm:$0xf]
    %v1551 = vld [vmem:[%s11 + $0xc] sm:$0xf]
    %v1552 = vld [vmem:[%s11 + $0x10] sm:$0xf]
    %v1553 = vld [vmem:[%s11 + $0x14] sm:$0xf]
    %v1554 = vld [vmem:[%s11 + $0x18] sm:$0xf]
    %v1555 = vld [vmem:[%s11 + $0x1c] sm:$0xf]
    %v1556 = vld [vmem:[#allocation3 + $0x1] sm:$0xff]
    %v1557 = vld [vmem:[#allocation3 + $0x11] sm:$0xff]
    %v1558 = vpack.c.bf16 %v1557, %v1556
    %s1559 = scalar_lea.vmem %s11, 32
    %v1560 = vld [vmem:[%s1559] sm:$0xf]
    %v1561 = vld [vmem:[%s1559 + $0x4] sm:$0xf]
    %v1562 = vld [vmem:[%s1559 + $0x8] sm:$0xf]
    %v1563 = vld [vmem:[%s1559 + $0xc] sm:$0xf]
    %v1564 = vld [vmem:[%s1559 + $0x10] sm:$0xf]
    %v1565 = vld [vmem:[%s1559 + $0x14] sm:$0xf]
    %v1566 = vld [vmem:[%s1559 + $0x18] sm:$0xf]
    %v1567 = vld [vmem:[%s1559 + $0x1c] sm:$0xf]
    %v1576 = vunpack.c.l.b16 %v1560
    %v1577 = vunpack.c.l.b16 %v1561
    %v1578 = vunpack.c.l.b16 %v1562
    %v1579 = vunpack.c.l.b16 %v1563
    %v1580 = vunpack.c.l.b16 %v1564
    %v1581 = vunpack.c.l.b16 %v1565
    %v1582 = vunpack.c.l.b16 %v1566
    %v1583 = vunpack.c.l.b16 %v1567
    %v1584 = vpack.c.b16 %v1577, %v1576
    %v1585 = vpack.c.b16 %v1579, %v1578
    %v1586 = vpack.c.b16 %v1581, %v1580
    %v1587 = vpack.c.b16 %v1583, %v1582
    %v1593 = vsel %vm1487, %v1558, 0
    %1595 = vmatprep.subr.bf16.mxu0 0
    %1596 = vmatpush1.bf16.msra.mxu0 %v1584
    %1597 = vmatprep.subr.bf16.mxu0 0
    %1598 = vmatpush1.bf16.msra.mxu0 %v1585
    %1599 = vmatprep.subr.bf16.mxu0 0
    %1600 = vmatpush1.bf16.msra.mxu0 %v1586
    %1601 = vmatprep.subr.bf16.mxu0 0
    %1602 = vmatpush1.bf16.msra.mxu0 %v1587
    %1603 = vmatprep.subr.bf16.mxu0 0
    %1604 = vmatpush1.bf16.msra.mxu0 0
    %1605 = vmatprep.subr.bf16.mxu0 0
    %1606 = vmatpush1.bf16.msra.mxu0 0
    %1607 = vmatprep.subr.bf16.mxu0 0
    %1608 = vmatpush1.bf16.msra.mxu0 0
    %1609 = vmatprep.subr.bf16.mxu0 0
    %1610 = vmatpush1.bf16.msra.mxu0 0
    %1611 = vmatprep.subr.bf16.mxu0 0
    %1612 = vmatpush1.bf16.msra.mxu0 0
    %1613 = vmatprep.subr.bf16.mxu0 0
    %1614 = vmatpush1.bf16.msra.mxu0 0
    %1615 = vmatprep.subr.bf16.mxu0 0
    %1616 = vmatpush1.bf16.msra.mxu0 0
    %1617 = vmatprep.subr.bf16.mxu0 0
    %1618 = vmatpush1.bf16.msra.mxu0 0
    %1619 = vmatprep.subr.bf16.mxu0 0
    %1620 = vmatpush1.bf16.msra.mxu0 0
    %1621 = vmatprep.subr.bf16.mxu0 0
    %1622 = vmatpush1.bf16.msra.mxu0 0
    %1623 = vmatprep.subr.bf16.mxu0 0
    %1624 = vmatpush1.bf16.msra.mxu0 0
    %1625 = vmatprep.subr.bf16.mxu0 0
    %1626 = vmatpush1.bf16.msra.mxu0 0
    %1627 = vmatprep.mubr.bf16.mxu0 0
    %1628 = vmatmul.mubr.bf16.gmra.mrb[0].mxu0 %v1593
    %v1629 = vpop.f32.mrb[0].mxu0
    %v1630 = vadd.f32 0.0, %v1629
    %v1631 = vpop.f32.mrb[0].mxu0
    %v1632 = vpop.f32.mrb[0].mxu0
    %v1633 = vadd.f32 0.0, %v1632
    %v1634 = vpop.f32.mrb[0].mxu0
    %1635 = vdwg.mxu0
    %v1644 = vunpack.c.l.b16 %v1548
    %v1645 = vunpack.c.l.b16 %v1549
    %v1646 = vunpack.c.l.b16 %v1550
    %v1647 = vunpack.c.l.b16 %v1551
    %v1648 = vunpack.c.l.b16 %v1552
    %v1649 = vunpack.c.l.b16 %v1553
    %v1650 = vunpack.c.l.b16 %v1554
    %v1651 = vunpack.c.l.b16 %v1555
    %v1652 = vpack.c.b16 %v1645, %v1644
    %v1653 = vpack.c.b16 %v1647, %v1646
    %v1654 = vpack.c.b16 %v1649, %v1648
    %v1655 = vpack.c.b16 %v1651, %v1650
    %v1661 = vsel %vm1487, %v1547, 0
    %1663 = vmatprep.subr.bf16.mxu0 0
    %1664 = vmatpush1.bf16.msra.mxu0 %v1652
    %1665 = vmatprep.subr.bf16.mxu0 0
    %1666 = vmatpush1.bf16.msra.mxu0 %v1653
    %1667 = vmatprep.subr.bf16.mxu0 0
    %1668 = vmatpush1.bf16.msra.mxu0 %v1654
    %1669 = vmatprep.subr.bf16.mxu0 0
    %1670 = vmatpush1.bf16.msra.mxu0 %v1655
    %1671 = vmatprep.subr.bf16.mxu0 0
    %1672 = vmatpush1.bf16.msra.mxu0 0
    %1673 = vmatprep.subr.bf16.mxu0 0
    %1674 = vmatpush1.bf16.msra.mxu0 0
    %1675 = vmatprep.subr.bf16.mxu0 0
    %1676 = vmatpush1.bf16.msra.mxu0 0
    %1677 = vmatprep.subr.bf16.mxu0 0
    %1678 = vmatpush1.bf16.msra.mxu0 0
    %1679 = vmatprep.subr.bf16.mxu0 0
    %1680 = vmatpush1.bf16.msra.mxu0 0
    %1681 = vmatprep.subr.bf16.mxu0 0
    %1682 = vmatpush1.bf16.msra.mxu0 0
    %1683 = vmatprep.subr.bf16.mxu0 0
    %1684 = vmatpush1.bf16.msra.mxu0 0
    %1685 = vmatprep.subr.bf16.mxu0 0
    %1686 = vmatpush1.bf16.msra.mxu0 0
    %1687 = vmatprep.subr.bf16.mxu0 0
    %1688 = vmatpush1.bf16.msra.mxu0 0
    %1689 = vmatprep.subr.bf16.mxu0 0
    %1690 = vmatpush1.bf16.msra.mxu0 0
    %1691 = vmatprep.subr.bf16.mxu0 0
    %1692 = vmatpush1.bf16.msra.mxu0 0
    %1693 = vmatprep.subr.bf16.mxu0 0
    %1694 = vmatpush1.bf16.msra.mxu0 0
    %1695 = vmatprep.mubr.bf16.mxu0 0
    %1696 = vmatmul.mubr.bf16.gmra.mrb[0].mxu0 %v1661
    %v1697 = vpop.f32.mrb[0].mxu0
    %v1698 = vadd.f32 %v1630, %v1697
    %v1699 = vpop.f32.mrb[0].mxu0
    %v1700 = vpop.f32.mrb[0].mxu0
    %v1701 = vadd.f32 %v1633, %v1700
    %v1702 = vpop.f32.mrb[0].mxu0
    %1703 = vdwg.mxu0
    %v1704 = vld [vmem:[#allocation3 + $0x2] sm:$0xff]
    %v1705 = vld [vmem:[#allocation3 + $0x12] sm:$0xff]
    %v1706 = vpack.c.bf16 %v1705, %v1704
    %s1707 = scalar_lea.vmem %s11, 64
    %v1708 = vld [vmem:[%s1707] sm:$0xf]
    %v1709 = vld [vmem:[%s1707 + $0x4] sm:$0xf]
    %v1710 = vld [vmem:[%s1707 + $0x8] sm:$0xf]
    %v1711 = vld [vmem:[%s1707 + $0xc] sm:$0xf]
    %v1712 = vld [vmem:[%s1707 + $0x10] sm:$0xf]
    %v1713 = vld [vmem:[%s1707 + $0x14] sm:$0xf]
    %v1714 = vld [vmem:[%s1707 + $0x18] sm:$0xf]
    %v1715 = vld [vmem:[%s1707 + $0x1c] sm:$0xf]
    %v1724 = vunpack.c.l.b16 %v1708
    %v1725 = vunpack.c.l.b16 %v1709
    %v1726 = vunpack.c.l.b16 %v1710
    %v1727 = vunpack.c.l.b16 %v1711
    %v1728 = vunpack.c.l.b16 %v1712
    %v1729 = vunpack.c.l.b16 %v1713
    %v1730 = vunpack.c.l.b16 %v1714
    %v1731 = vunpack.c.l.b16 %v1715
    %v1732 = vpack.c.b16 %v1725, %v1724
    %v1733 = vpack.c.b16 %v1727, %v1726
    %v1734 = vpack.c.b16 %v1729, %v1728
    %v1735 = vpack.c.b16 %v1731, %v1730
    %v1741 = vsel %vm1487, %v1706, 0
    %1743 = vmatprep.subr.bf16.mxu0 0
    %1744 = vmatpush1.bf16.msra.mxu0 %v1732
    %1745 = vmatprep.subr.bf16.mxu0 0
    %1746 = vmatpush1.bf16.msra.mxu0 %v1733
    %1747 = vmatprep.subr.bf16.mxu0 0
    %1748 = vmatpush1.bf16.msra.mxu0 %v1734
    %1749 = vmatprep.subr.bf16.mxu0 0
    %1750 = vmatpush1.bf16.msra.mxu0 %v1735
    %1751 = vmatprep.subr.bf16.mxu0 0
    %1752 = vmatpush1.bf16.msra.mxu0 0
    %1753 = vmatprep.subr.bf16.mxu0 0
    %1754 = vmatpush1.bf16.msra.mxu0 0
    %1755 = vmatprep.subr.bf16.mxu0 0
    %1756 = vmatpush1.bf16.msra.mxu0 0
    %1757 = vmatprep.subr.bf16.mxu0 0
    %1758 = vmatpush1.bf16.msra.mxu0 0
    %1759 = vmatprep.subr.bf16.mxu0 0
    %1760 = vmatpush1.bf16.msra.mxu0 0
    %1761 = vmatprep.subr.bf16.mxu0 0
    %1762 = vmatpush1.bf16.msra.mxu0 0
    %1763 = vmatprep.subr.bf16.mxu0 0
    %1764 = vmatpush1.bf16.msra.mxu0 0
    %1765 = vmatprep.subr.bf16.mxu0 0
    %1766 = vmatpush1.bf16.msra.mxu0 0
    %1767 = vmatprep.subr.bf16.mxu0 0
    %1768 = vmatpush1.bf16.msra.mxu0 0
    %1769 = vmatprep.subr.bf16.mxu0 0
    %1770 = vmatpush1.bf16.msra.mxu0 0
    %1771 = vmatprep.subr.bf16.mxu0 0
    %1772 = vmatpush1.bf16.msra.mxu0 0
    %1773 = vmatprep.subr.bf16.mxu0 0
    %1774 = vmatpush1.bf16.msra.mxu0 0
    %1775 = vmatprep.mubr.bf16.mxu0 0
    %1776 = vmatmul.mubr.bf16.gmra.mrb[0].mxu0 %v1741
    %v1777 = vpop.f32.mrb[0].mxu0
    %v1778 = vadd.f32 0.0, %v1777
    %v1779 = vpop.f32.mrb[0].mxu0
    %v1780 = vpop.f32.mrb[0].mxu0
    %v1781 = vadd.f32 0.0, %v1780
    %v1782 = vpop.f32.mrb[0].mxu0
    %1783 = vdwg.mxu0
    %v1784 = vadd.f32 %v1698, %v1778
    %v1785 = vadd.f32 %v1701, %v1781
    %v1786 = vld [vmem:[%s12] sm:$0x1]
    %v1788 = vlaneseq
    %v1789 = vshrl.u32 %v1788, 7
    %v1790 = vsub.s32 0, %v1789
    %v1791 = vrot.slane %v1786, %v1790
    %v1793 = vadd.f32 %v1784, %v1791
    %v1794 = vadd.f32 %v1785, %v1791
    %vm1795 = vcmp.gt.f32.partialorder %v1793, 0.0
    %vm1796 = vcmp.gt.f32.partialorder %v1794, 0.0
    %v1797 = vmul.f32 %v1793, 0.2
    %v1798 = vmul.f32 %v1794, 0.2
    %v1799 = vsel %vm1795, %v1793, %v1797
    %v1800 = vsel %vm1796, %v1794, %v1798
    %1801 = vst [vmem:[#allocation4] sm:$0x1] 0.0
    %1802 = vst [vmem:[#allocation4 + $0x10] sm:$0x1] 0.0
    %1803 = vst [vmem:[#allocation4 + $0x9] sm:$0x1] 0.0
    %1804 = vst [vmem:[#allocation4 + $0x19] sm:$0x1] 0.0
    %1805 = vst [vmem:[#allocation4 + $0x1] sm:$0xff] %v1799
    %1806 = vst [vmem:[#allocation4 + $0x11] sm:$0xff] %v1800
    %v1807 = vld [vmem:[#allocation4] sm:$0xff]
    %v1808 = vld [vmem:[#allocation4 + $0x10] sm:$0xff]
    %v1809 = vpack.c.bf16 %v1808, %v1807
    %v1810 = vld [vmem:[%s13] sm:$0xf]
    %v1811 = vld [vmem:[%s13 + $0x4] sm:$0xf]
    %v1812 = vld [vmem:[%s13 + $0x8] sm:$0xf]
    %v1813 = vld [vmem:[%s13 + $0xc] sm:$0xf]
    %v1814 = vld [vmem:[%s13 + $0x10] sm:$0xf]
    %v1815 = vld [vmem:[%s13 + $0x14] sm:$0xf]
    %v1816 = vld [vmem:[%s13 + $0x18] sm:$0xf]
    %v1817 = vld [vmem:[%s13 + $0x1c] sm:$0xf]
    %v1818 = vld [vmem:[%s13 + $0x20] sm:$0xf]
    %v1819 = vld [vmem:[%s13 + $0x24] sm:$0xf]
    %v1820 = vld [vmem:[%s13 + $0x28] sm:$0xf]
    %v1821 = vld [vmem:[%s13 + $0x2c] sm:$0xf]
    %v1822 = vld [vmem:[%s13 + $0x30] sm:$0xf]
    %v1823 = vld [vmem:[%s13 + $0x34] sm:$0xf]
    %v1824 = vld [vmem:[%s13 + $0x38] sm:$0xf]
    %v1825 = vld [vmem:[%s13 + $0x3c] sm:$0xf]
    %v1826 = vld [vmem:[#allocation4 + $0x1] sm:$0xff]
    %v1827 = vld [vmem:[#allocation4 + $0x11] sm:$0xff]
    %v1828 = vpack.c.bf16 %v1827, %v1826
    %s1829 = scalar_lea.vmem %s13, 64
    %v1830 = vld [vmem:[%s1829] sm:$0xf]
    %v1831 = vld [vmem:[%s1829 + $0x4] sm:$0xf]
    %v1832 = vld [vmem:[%s1829 + $0x8] sm:$0xf]
    %v1833 = vld [vmem:[%s1829 + $0xc] sm:$0xf]
    %v1834 = vld [vmem:[%s1829 + $0x10] sm:$0xf]
    %v1835 = vld [vmem:[%s1829 + $0x14] sm:$0xf]
    %v1836 = vld [vmem:[%s1829 + $0x18] sm:$0xf]
    %v1837 = vld [vmem:[%s1829 + $0x1c] sm:$0xf]
    %v1838 = vld [vmem:[%s1829 + $0x20] sm:$0xf]
    %v1839 = vld [vmem:[%s1829 + $0x24] sm:$0xf]
    %v1840 = vld [vmem:[%s1829 + $0x28] sm:$0xf]
    %v1841 = vld [vmem:[%s1829 + $0x2c] sm:$0xf]
    %v1842 = vld [vmem:[%s1829 + $0x30] sm:$0xf]
    %v1843 = vld [vmem:[%s1829 + $0x34] sm:$0xf]
    %v1844 = vld [vmem:[%s1829 + $0x38] sm:$0xf]
    %v1845 = vld [vmem:[%s1829 + $0x3c] sm:$0xf]
    %v1862 = vunpack.c.l.b16 %v1830
    %v1863 = vunpack.c.l.b16 %v1831
    %v1864 = vunpack.c.l.b16 %v1832
    %v1865 = vunpack.c.l.b16 %v1833
    %v1866 = vunpack.c.l.b16 %v1834
    %v1867 = vunpack.c.l.b16 %v1835
    %v1868 = vunpack.c.l.b16 %v1836
    %v1869 = vunpack.c.l.b16 %v1837
    %v1870 = vunpack.c.l.b16 %v1838
    %v1871 = vunpack.c.l.b16 %v1839
    %v1872 = vunpack.c.l.b16 %v1840
    %v1873 = vunpack.c.l.b16 %v1841
    %v1874 = vunpack.c.l.b16 %v1842
    %v1875 = vunpack.c.l.b16 %v1843
    %v1876 = vunpack.c.l.b16 %v1844
    %v1877 = vunpack.c.l.b16 %v1845
    %v1878 = vpack.c.b16 %v1863, %v1862
    %v1879 = vpack.c.b16 %v1865, %v1864
    %v1880 = vpack.c.b16 %v1867, %v1866
    %v1881 = vpack.c.b16 %v1869, %v1868
    %v1882 = vpack.c.b16 %v1871, %v1870
    %v1883 = vpack.c.b16 %v1873, %v1872
    %v1884 = vpack.c.b16 %v1875, %v1874
    %v1885 = vpack.c.b16 %v1877, %v1876
    %1894 = vmatprep.subr.bf16.mxu0 0
    %1895 = vmatpush1.bf16.msra.mxu0 %v1878
    %1896 = vmatprep.subr.bf16.mxu0 0
    %1897 = vmatpush1.bf16.msra.mxu0 %v1879
    %1898 = vmatprep.subr.bf16.mxu0 0
    %1899 = vmatpush1.bf16.msra.mxu0 %v1880
    %1900 = vmatprep.subr.bf16.mxu0 0
    %1901 = vmatpush1.bf16.msra.mxu0 %v1881
    %1902 = vmatprep.subr.bf16.mxu0 0
    %1903 = vmatpush1.bf16.msra.mxu0 %v1882
    %1904 = vmatprep.subr.bf16.mxu0 0
    %1905 = vmatpush1.bf16.msra.mxu0 %v1883
    %1906 = vmatprep.subr.bf16.mxu0 0
    %1907 = vmatpush1.bf16.msra.mxu0 %v1884
    %1908 = vmatprep.subr.bf16.mxu0 0
    %1909 = vmatpush1.bf16.msra.mxu0 %v1885
    %1910 = vmatprep.subr.bf16.mxu0 0
    %1911 = vmatpush1.bf16.msra.mxu0 0
    %1912 = vmatprep.subr.bf16.mxu0 0
    %1913 = vmatpush1.bf16.msra.mxu0 0
    %1914 = vmatprep.subr.bf16.mxu0 0
    %1915 = vmatpush1.bf16.msra.mxu0 0
    %1916 = vmatprep.subr.bf16.mxu0 0
    %1917 = vmatpush1.bf16.msra.mxu0 0
    %1918 = vmatprep.subr.bf16.mxu0 0
    %1919 = vmatpush1.bf16.msra.mxu0 0
    %1920 = vmatprep.subr.bf16.mxu0 0
    %1921 = vmatpush1.bf16.msra.mxu0 0
    %1922 = vmatprep.subr.bf16.mxu0 0
    %1923 = vmatpush1.bf16.msra.mxu0 0
    %1924 = vmatprep.subr.bf16.mxu0 0
    %1925 = vmatpush1.bf16.msra.mxu0 0
    %1926 = vmatprep.mubr.bf16.mxu0 0
    %1927 = vmatmul.mubr.bf16.gmra.mrb[0].mxu0 %v1828
    %v1928 = vpop.f32.mrb[0].mxu0
    %v1929 = vadd.f32 0.0, %v1928
    %v1930 = vpop.f32.mrb[0].mxu0
    %v1931 = vpop.f32.mrb[0].mxu0
    %v1932 = vadd.f32 0.0, %v1931
    %v1933 = vpop.f32.mrb[0].mxu0
    %1934 = vdwg.mxu0
    %v1951 = vunpack.c.l.b16 %v1810
    %v1952 = vunpack.c.l.b16 %v1811
    %v1953 = vunpack.c.l.b16 %v1812
    %v1954 = vunpack.c.l.b16 %v1813
    %v1955 = vunpack.c.l.b16 %v1814
    %v1956 = vunpack.c.l.b16 %v1815
    %v1957 = vunpack.c.l.b16 %v1816
    %v1958 = vunpack.c.l.b16 %v1817
    %v1959 = vunpack.c.l.b16 %v1818
    %v1960 = vunpack.c.l.b16 %v1819
    %v1961 = vunpack.c.l.b16 %v1820
    %v1962 = vunpack.c.l.b16 %v1821
    %v1963 = vunpack.c.l.b16 %v1822
    %v1964 = vunpack.c.l.b16 %v1823
    %v1965 = vunpack.c.l.b16 %v1824
    %v1966 = vunpack.c.l.b16 %v1825
    %v1967 = vpack.c.b16 %v1952, %v1951
    %v1968 = vpack.c.b16 %v1954, %v1953
    %v1969 = vpack.c.b16 %v1956, %v1955
    %v1970 = vpack.c.b16 %v1958, %v1957
    %v1971 = vpack.c.b16 %v1960, %v1959
    %v1972 = vpack.c.b16 %v1962, %v1961
    %v1973 = vpack.c.b16 %v1964, %v1963
    %v1974 = vpack.c.b16 %v1966, %v1965
    %1983 = vmatprep.subr.bf16.mxu0 0
    %1984 = vmatpush1.bf16.msra.mxu0 %v1967
    %1985 = vmatprep.subr.bf16.mxu0 0
    %1986 = vmatpush1.bf16.msra.mxu0 %v1968
    %1987 = vmatprep.subr.bf16.mxu0 0
    %1988 = vmatpush1.bf16.msra.mxu0 %v1969
    %1989 = vmatprep.subr.bf16.mxu0 0
    %1990 = vmatpush1.bf16.msra.mxu0 %v1970
    %1991 = vmatprep.subr.bf16.mxu0 0
    %1992 = vmatpush1.bf16.msra.mxu0 %v1971
    %1993 = vmatprep.subr.bf16.mxu0 0
    %1994 = vmatpush1.bf16.msra.mxu0 %v1972
    %1995 = vmatprep.subr.bf16.mxu0 0
    %1996 = vmatpush1.bf16.msra.mxu0 %v1973
    %1997 = vmatprep.subr.bf16.mxu0 0
    %1998 = vmatpush1.bf16.msra.mxu0 %v1974
    %1999 = vmatprep.subr.bf16.mxu0 0
    %2000 = vmatpush1.bf16.msra.mxu0 0
    %2001 = vmatprep.subr.bf16.mxu0 0
    %2002 = vmatpush1.bf16.msra.mxu0 0
    %2003 = vmatprep.subr.bf16.mxu0 0
    %2004 = vmatpush1.bf16.msra.mxu0 0
    %2005 = vmatprep.subr.bf16.mxu0 0
    %2006 = vmatpush1.bf16.msra.mxu0 0
    %2007 = vmatprep.subr.bf16.mxu0 0
    %2008 = vmatpush1.bf16.msra.mxu0 0
    %2009 = vmatprep.subr.bf16.mxu0 0
    %2010 = vmatpush1.bf16.msra.mxu0 0
    %2011 = vmatprep.subr.bf16.mxu0 0
    %2012 = vmatpush1.bf16.msra.mxu0 0
    %2013 = vmatprep.subr.bf16.mxu0 0
    %2014 = vmatpush1.bf16.msra.mxu0 0
    %2015 = vmatprep.mubr.bf16.mxu0 0
    %2016 = vmatmul.mubr.bf16.gmra.mrb[0].mxu0 %v1809
    %v2017 = vpop.f32.mrb[0].mxu0
    %v2018 = vadd.f32 %v1929, %v2017
    %v2019 = vpop.f32.mrb[0].mxu0
    %v2020 = vpop.f32.mrb[0].mxu0
    %v2021 = vadd.f32 %v1932, %v2020
    %v2022 = vpop.f32.mrb[0].mxu0
    %2023 = vdwg.mxu0
    %v2024 = vld [vmem:[#allocation4 + $0x2] sm:$0xff]
    %v2025 = vld [vmem:[#allocation4 + $0x12] sm:$0xff]
    %v2026 = vpack.c.bf16 %v2025, %v2024
    %s2027 = scalar_lea.vmem %s13, 128
    %v2028 = vld [vmem:[%s2027] sm:$0xf]
    %v2029 = vld [vmem:[%s2027 + $0x4] sm:$0xf]
    %v2030 = vld [vmem:[%s2027 + $0x8] sm:$0xf]
    %v2031 = vld [vmem:[%s2027 + $0xc] sm:$0xf]
    %v2032 = vld [vmem:[%s2027 + $0x10] sm:$0xf]
    %v2033 = vld [vmem:[%s2027 + $0x14] sm:$0xf]
    %v2034 = vld [vmem:[%s2027 + $0x18] sm:$0xf]
    %v2035 = vld [vmem:[%s2027 + $0x1c] sm:$0xf]
    %v2036 = vld [vmem:[%s2027 + $0x20] sm:$0xf]
    %v2037 = vld [vmem:[%s2027 + $0x24] sm:$0xf]
    %v2038 = vld [vmem:[%s2027 + $0x28] sm:$0xf]
    %v2039 = vld [vmem:[%s2027 + $0x2c] sm:$0xf]
    %v2040 = vld [vmem:[%s2027 + $0x30] sm:$0xf]
    %v2041 = vld [vmem:[%s2027 + $0x34] sm:$0xf]
    %v2042 = vld [vmem:[%s2027 + $0x38] sm:$0xf]
    %v2043 = vld [vmem:[%s2027 + $0x3c] sm:$0xf]
    %v2060 = vunpack.c.l.b16 %v2028
    %v2061 = vunpack.c.l.b16 %v2029
    %v2062 = vunpack.c.l.b16 %v2030
    %v2063 = vunpack.c.l.b16 %v2031
    %v2064 = vunpack.c.l.b16 %v2032
    %v2065 = vunpack.c.l.b16 %v2033
    %v2066 = vunpack.c.l.b16 %v2034
    %v2067 = vunpack.c.l.b16 %v2035
    %v2068 = vunpack.c.l.b16 %v2036
    %v2069 = vunpack.c.l.b16 %v2037
    %v2070 = vunpack.c.l.b16 %v2038
    %v2071 = vunpack.c.l.b16 %v2039
    %v2072 = vunpack.c.l.b16 %v2040
    %v2073 = vunpack.c.l.b16 %v2041
    %v2074 = vunpack.c.l.b16 %v2042
    %v2075 = vunpack.c.l.b16 %v2043
    %v2076 = vpack.c.b16 %v2061, %v2060
    %v2077 = vpack.c.b16 %v2063, %v2062
    %v2078 = vpack.c.b16 %v2065, %v2064
    %v2079 = vpack.c.b16 %v2067, %v2066
    %v2080 = vpack.c.b16 %v2069, %v2068
    %v2081 = vpack.c.b16 %v2071, %v2070
    %v2082 = vpack.c.b16 %v2073, %v2072
    %v2083 = vpack.c.b16 %v2075, %v2074
    %2092 = vmatprep.subr.bf16.mxu0 0
    %2093 = vmatpush1.bf16.msra.mxu0 %v2076
    %2094 = vmatprep.subr.bf16.mxu0 0
    %2095 = vmatpush1.bf16.msra.mxu0 %v2077
    %2096 = vmatprep.subr.bf16.mxu0 0
    %2097 = vmatpush1.bf16.msra.mxu0 %v2078
    %2098 = vmatprep.subr.bf16.mxu0 0
    %2099 = vmatpush1.bf16.msra.mxu0 %v2079
    %2100 = vmatprep.subr.bf16.mxu0 0
    %2101 = vmatpush1.bf16.msra.mxu0 %v2080
    %2102 = vmatprep.subr.bf16.mxu0 0
    %2103 = vmatpush1.bf16.msra.mxu0 %v2081
    %2104 = vmatprep.subr.bf16.mxu0 0
    %2105 = vmatpush1.bf16.msra.mxu0 %v2082
    %2106 = vmatprep.subr.bf16.mxu0 0
    %2107 = vmatpush1.bf16.msra.mxu0 %v2083
    %2108 = vmatprep.subr.bf16.mxu0 0
    %2109 = vmatpush1.bf16.msra.mxu0 0
    %2110 = vmatprep.subr.bf16.mxu0 0
    %2111 = vmatpush1.bf16.msra.mxu0 0
    %2112 = vmatprep.subr.bf16.mxu0 0
    %2113 = vmatpush1.bf16.msra.mxu0 0
    %2114 = vmatprep.subr.bf16.mxu0 0
    %2115 = vmatpush1.bf16.msra.mxu0 0
    %2116 = vmatprep.subr.bf16.mxu0 0
    %2117 = vmatpush1.bf16.msra.mxu0 0
    %2118 = vmatprep.subr.bf16.mxu0 0
    %2119 = vmatpush1.bf16.msra.mxu0 0
    %2120 = vmatprep.subr.bf16.mxu0 0
    %2121 = vmatpush1.bf16.msra.mxu0 0
    %2122 = vmatprep.subr.bf16.mxu0 0
    %2123 = vmatpush1.bf16.msra.mxu0 0
    %2124 = vmatprep.mubr.bf16.mxu0 0
    %2125 = vmatmul.mubr.bf16.gmra.mrb[0].mxu0 %v2026
    %v2126 = vpop.f32.mrb[0].mxu0
    %v2127 = vadd.f32 0.0, %v2126
    %v2128 = vpop.f32.mrb[0].mxu0
    %v2129 = vpop.f32.mrb[0].mxu0
    %v2130 = vadd.f32 0.0, %v2129
    %v2131 = vpop.f32.mrb[0].mxu0
    %2132 = vdwg.mxu0
    %v2133 = vadd.f32 %v2018, %v2127
    %v2134 = vadd.f32 %v2021, %v2130
    %v2135 = vld [vmem:[%s14] sm:$0x1]
    %v2137 = vlaneseq
    %v2138 = vshrl.u32 %v2137, 7
    %v2139 = vsub.s32 0, %v2138
    %v2140 = vrot.slane %v2135, %v2139
    %v2142 = vadd.f32 %v2133, %v2140
    %v2143 = vadd.f32 %v2134, %v2140
    %v2144 = vadd.f32 %v2142, %v1526
    %v2145 = vadd.f32 %v2143, %v1529
    %vm2146 = vcmp.gt.f32.partialorder %v2144, 0.0
    %vm2147 = vcmp.gt.f32.partialorder %v2145, 0.0
    %v2148 = vmul.f32 %v2144, 0.2
    %v2149 = vmul.f32 %v2145, 0.2
    %v2150 = vsel %vm2146, %v2144, %v2148
    %v2151 = vsel %vm2147, %v2145, %v2149
    %v2152 = vrot.slane %v2150, 4
    %v2153 = vadd.f32 %v2150, %v2152
    %v2154 = vrot.slane %v2153, 2
    %v2155 = vadd.f32 %v2153, %v2154
    %v2156 = vrot.slane %v2155, 1
    %v2157 = vadd.f32 %v2155, %v2156
    %v2158 = vrot.slane %v2151, 4
    %v2159 = vadd.f32 %v2151, %v2158
    %v2160 = vrot.slane %v2159, 2
    %v2161 = vadd.f32 %v2159, %v2160
    %v2162 = vrot.slane %v2161, 1
    %v2163 = vadd.f32 %v2161, %v2162
    %v2164 = vrcp.pop 8.0
    %v2165 = vmul.f32 %v2157, %v2164
    %v2166 = vmul.f32 %v2163, %v2164
    %v2167 = vld [vmem:[%s16] sm:$0xff]
    %v2168 = vld [vmem:[%s16 + $0x8] sm:$0xff]
    %v2169 = vld [vmem:[%s16 + $0x10] sm:$0xff]
    %v2170 = vld [vmem:[%s16 + $0x18] sm:$0xff]
    %v2171 = vld [vmem:[%s16 + $0x20] sm:$0xff]
    %v2172 = vld [vmem:[%s16 + $0x28] sm:$0xff]
    %v2173 = vld [vmem:[%s16 + $0x30] sm:$0xff]
    %v2174 = vld [vmem:[%s16 + $0x38] sm:$0xff]
    %v2175 = vld [vmem:[%s16 + $0x40] sm:$0xff]
    %v2176 = vld [vmem:[%s16 + $0x48] sm:$0xff]
    %v2177 = vld [vmem:[%s16 + $0x50] sm:$0xff]
    %v2178 = vld [vmem:[%s16 + $0x58] sm:$0xff]
    %v2179 = vld [vmem:[%s16 + $0x60] sm:$0xff]
    %v2180 = vld [vmem:[%s16 + $0x68] sm:$0xff]
    %v2181 = vld [vmem:[%s16 + $0x70] sm:$0xff]
    %v2182 = vld [vmem:[%s16 + $0x78] sm:$0xff]
    %vm2185 = vcmask 1041409
    %v2186 = vsel %vm2185, %v2166, %v2165
    %2188 = vmatprep.subr.mxu0 0.0
    %2189 = vmatpush1.msra.mxu0 %v2167
    %2190 = vmatprep.subr.mxu0 0.0
    %2191 = vmatpush1.msra.mxu0 %v2168
    %2192 = vmatprep.subr.mxu0 0.0
    %2193 = vmatpush1.msra.mxu0 %v2169
    %2194 = vmatprep.subr.mxu0 0.0
    %2195 = vmatpush1.msra.mxu0 %v2170
    %2196 = vmatprep.subr.mxu0 0.0
    %2197 = vmatpush1.msra.mxu0 %v2171
    %2198 = vmatprep.subr.mxu0 0.0
    %2199 = vmatpush1.msra.mxu0 %v2172
    %2200 = vmatprep.subr.mxu0 0.0
    %2201 = vmatpush1.msra.mxu0 %v2173
    %2202 = vmatprep.subr.mxu0 0.0
    %2203 = vmatpush1.msra.mxu0 %v2174
    %2204 = vmatprep.subr.mxu0 0.0
    %2205 = vmatpush1.msra.mxu0 %v2175
    %2206 = vmatprep.subr.mxu0 0.0
    %2207 = vmatpush1.msra.mxu0 %v2176
    %2208 = vmatprep.subr.mxu0 0.0
    %2209 = vmatpush1.msra.mxu0 %v2177
    %2210 = vmatprep.subr.mxu0 0.0
    %2211 = vmatpush1.msra.mxu0 %v2178
    %2212 = vmatprep.subr.mxu0 0.0
    %2213 = vmatpush1.msra.mxu0 %v2179
    %2214 = vmatprep.subr.mxu0 0.0
    %2215 = vmatpush1.msra.mxu0 %v2180
    %2216 = vmatprep.subr.mxu0 0.0
    %2217 = vmatpush1.msra.mxu0 %v2181
    %2218 = vmatprep.subr.mxu0 0.0
    %2219 = vmatpush1.msra.mxu0 %v2182
    %2220 = vmatprep.subr.mxu0 0.0
    %2221 = vmatpush1.msra.mxu0 0.0
    %2222 = vmatprep.subr.mxu0 0.0
    %2223 = vmatpush1.msra.mxu0 0.0
    %2224 = vmatprep.subr.mxu0 0.0
    %2225 = vmatpush1.msra.mxu0 0.0
    %2226 = vmatprep.subr.mxu0 0.0
    %2227 = vmatpush1.msra.mxu0 0.0
    %2228 = vmatprep.subr.mxu0 0.0
    %2229 = vmatpush1.msra.mxu0 0.0
    %2230 = vmatprep.subr.mxu0 0.0
    %2231 = vmatpush1.msra.mxu0 0.0
    %2232 = vmatprep.subr.mxu0 0.0
    %2233 = vmatpush1.msra.mxu0 0.0
    %2234 = vmatprep.subr.mxu0 0.0
    %2235 = vmatpush1.msra.mxu0 0.0
    %2236 = vmatprep.subr.mxu0 0.0
    %2237 = vmatpush1.msra.mxu0 0.0
    %2238 = vmatprep.subr.mxu0 0.0
    %2239 = vmatpush1.msra.mxu0 0.0
    %2240 = vmatprep.subr.mxu0 0.0
    %2241 = vmatpush1.msra.mxu0 0.0
    %2242 = vmatprep.subr.mxu0 0.0
    %2243 = vmatpush1.msra.mxu0 0.0
    %2244 = vmatprep.subr.mxu0 0.0
    %2245 = vmatpush1.msra.mxu0 0.0
    %2246 = vmatprep.subr.mxu0 0.0
    %2247 = vmatpush1.msra.mxu0 0.0
    %2248 = vmatprep.subr.mxu0 0.0
    %2249 = vmatpush1.msra.mxu0 0.0
    %2250 = vmatprep.subr.mxu0 0.0
    %2251 = vmatpush1.msra.mxu0 0.0
    %2252 = vmatprep.mubr.f32.mxu0 0.0
    %2253 = vmatmul.mubr.f32.gmra.mrb[0].mxu0 %v2186
    %v2254 = vpop.f32.mrb[0].mxu0
    %v2255 = vadd.f32 0.0, %v2254
    %v2256 = vpop.f32.mrb[0].mxu0
    %2257 = vdwg.mxu0
    %v2258 = vld [vmem:[%s17] sm:$0xff]
    %v2259 = vld [vmem:[%s17 + $0x8] sm:$0xff]
    %v2260 = vld [vmem:[%s17 + $0x10] sm:$0xff]
    %v2261 = vld [vmem:[%s17 + $0x18] sm:$0xff]
    %v2262 = vld [vmem:[%s17 + $0x20] sm:$0xff]
    %v2263 = vld [vmem:[%s17 + $0x28] sm:$0xff]
    %v2264 = vld [vmem:[%s17 + $0x30] sm:$0xff]
    %v2265 = vld [vmem:[%s17 + $0x38] sm:$0xff]
    %v2266 = vld [vmem:[%s17 + $0x40] sm:$0xff]
    %v2267 = vld [vmem:[%s17 + $0x48] sm:$0xff]
    %v2268 = vld [vmem:[%s17 + $0x50] sm:$0xff]
    %v2269 = vld [vmem:[%s17 + $0x58] sm:$0xff]
    %v2270 = vld [vmem:[%s17 + $0x60] sm:$0xff]
    %v2271 = vld [vmem:[%s17 + $0x68] sm:$0xff]
    %v2272 = vld [vmem:[%s17 + $0x70] sm:$0xff]
    %v2273 = vld [vmem:[%s17 + $0x78] sm:$0xff]
    %v2274 = vld [vmem:[%s17 + $0x80] sm:$0xff]
    %v2275 = vld [vmem:[%s17 + $0x88] sm:$0xff]
    %v2276 = vld [vmem:[%s17 + $0x90] sm:$0xff]
    %v2277 = vld [vmem:[%s17 + $0x98] sm:$0xff]
    %v2278 = vld [vmem:[%s17 + $0xa0] sm:$0xff]
    %v2279 = vld [vmem:[%s17 + $0xa8] sm:$0xff]
    %v2280 = vld [vmem:[%s17 + $0xb0] sm:$0xff]
    %v2281 = vld [vmem:[%s17 + $0xb8] sm:$0xff]
    %v2282 = vld [vmem:[%s17 + $0xc0] sm:$0xff]
    %v2283 = vld [vmem:[%s17 + $0xc8] sm:$0xff]
    %v2284 = vld [vmem:[%s17 + $0xd0] sm:$0xff]
    %v2285 = vld [vmem:[%s17 + $0xd8] sm:$0xff]
    %v2286 = vld [vmem:[%s17 + $0xe0] sm:$0xff]
    %v2287 = vld [vmem:[%s17 + $0xe8] sm:$0xff]
    %v2288 = vld [vmem:[%s17 + $0xf0] sm:$0xff]
    %v2289 = vld [vmem:[%s17 + $0xf8] sm:$0xff]
    %v2290 = vld [vmem:[%s18] sm:$0xff]
    %v2291 = vld [vmem:[%s18 + $0x8] sm:$0xff]
    %v2294 = vlaneseq
    %v2295 = vshrl.u32 %v2294, 7
    %v2296 = vsub.s32 0, %v2295
    %v2297 = vrot.slane %v2290, %v2296
    %v2298 = vlaneseq
    %v2299 = vshrl.u32 %v2298, 7
    %v2300 = vsub.s32 1, %v2299
    %v2301 = vrot.slane %v2290, %v2300
    %v2302 = vlaneseq
    %v2303 = vshrl.u32 %v2302, 7
    %v2304 = vsub.s32 2, %v2303
    %v2305 = vrot.slane %v2290, %v2304
    %v2306 = vlaneseq
    %v2307 = vshrl.u32 %v2306, 7
    %v2308 = vsub.s32 3, %v2307
    %v2309 = vrot.slane %v2290, %v2308
    %v2310 = vlaneseq
    %v2311 = vshrl.u32 %v2310, 7
    %v2312 = vsub.s32 4, %v2311
    %v2313 = vrot.slane %v2290, %v2312
    %v2314 = vlaneseq
    %v2315 = vshrl.u32 %v2314, 7
    %v2316 = vsub.s32 5, %v2315
    %v2317 = vrot.slane %v2290, %v2316
    %v2318 = vlaneseq
    %v2319 = vshrl.u32 %v2318, 7
    %v2320 = vsub.s32 6, %v2319
    %v2321 = vrot.slane %v2290, %v2320
    %v2322 = vlaneseq
    %v2323 = vshrl.u32 %v2322, 7
    %v2324 = vsub.s32 7, %v2323
    %v2325 = vrot.slane %v2290, %v2324
    %v2326 = vlaneseq
    %v2327 = vshrl.u32 %v2326, 7
    %v2328 = vsub.s32 0, %v2327
    %v2329 = vrot.slane %v2291, %v2328
    %v2330 = vlaneseq
    %v2331 = vshrl.u32 %v2330, 7
    %v2332 = vsub.s32 1, %v2331
    %v2333 = vrot.slane %v2291, %v2332
    %v2334 = vlaneseq
    %v2335 = vshrl.u32 %v2334, 7
    %v2336 = vsub.s32 2, %v2335
    %v2337 = vrot.slane %v2291, %v2336
    %v2338 = vlaneseq
    %v2339 = vshrl.u32 %v2338, 7
    %v2340 = vsub.s32 3, %v2339
    %v2341 = vrot.slane %v2291, %v2340
    %v2342 = vlaneseq
    %v2343 = vshrl.u32 %v2342, 7
    %v2344 = vsub.s32 4, %v2343
    %v2345 = vrot.slane %v2291, %v2344
    %v2346 = vlaneseq
    %v2347 = vshrl.u32 %v2346, 7
    %v2348 = vsub.s32 5, %v2347
    %v2349 = vrot.slane %v2291, %v2348
    %v2350 = vlaneseq
    %v2351 = vshrl.u32 %v2350, 7
    %v2352 = vsub.s32 6, %v2351
    %v2353 = vrot.slane %v2291, %v2352
    %v2354 = vlaneseq
    %v2355 = vshrl.u32 %v2354, 7
    %v2356 = vsub.s32 7, %v2355
    %v2357 = vrot.slane %v2291, %v2356
    %vm2374 = vcmask 130048
    %v2376 = vsel %vm2374, %v2255, 0
    %2378 = vmatprep.subr.mxu0 %v2259
    %2379 = vmatpush1.msra.mxu0 %v2258
    %2380 = vmatprep.subr.mxu0 %v2275
    %2381 = vmatpush1.msra.mxu0 %v2274
    %2382 = vmatprep.subr.mxu0 0.0
    %2383 = vmatpush1.msra.mxu0 0.0
    %2384 = vmatprep.subr.mxu0 0.0
    %2385 = vmatpush1.msra.mxu0 0.0
    %2386 = vmatprep.subr.mxu0 0.0
    %2387 = vmatpush1.msra.mxu0 0.0
    %2388 = vmatprep.subr.mxu0 0.0
    %2389 = vmatpush1.msra.mxu0 0.0
    %2390 = vmatprep.subr.mxu0 0.0
    %2391 = vmatpush1.msra.mxu0 0.0
    %2392 = vmatprep.subr.mxu0 0.0
    %2393 = vmatpush1.msra.mxu0 0.0
    %2394 = vmatprep.subr.mxu0 0.0
    %2395 = vmatpush1.msra.mxu0 0.0
    %2396 = vmatprep.subr.mxu0 0.0
    %2397 = vmatpush1.msra.mxu0 0.0
    %2398 = vmatprep.subr.mxu0 0.0
    %2399 = vmatpush1.msra.mxu0 0.0
    %2400 = vmatprep.subr.mxu0 0.0
    %2401 = vmatpush1.msra.mxu0 0.0
    %2402 = vmatprep.subr.mxu0 0.0
    %2403 = vmatpush1.msra.mxu0 0.0
    %2404 = vmatprep.subr.mxu0 0.0
    %2405 = vmatpush1.msra.mxu0 0.0
    %2406 = vmatprep.subr.mxu0 0.0
    %2407 = vmatpush1.msra.mxu0 0.0
    %2408 = vmatprep.subr.mxu0 0.0
    %2409 = vmatpush1.msra.mxu0 0.0
    %2410 = vmatprep.subr.mxu0 0.0
    %2411 = vmatpush1.msra.mxu0 0.0
    %2412 = vmatprep.subr.mxu0 0.0
    %2413 = vmatpush1.msra.mxu0 0.0
    %2414 = vmatprep.subr.mxu0 0.0
    %2415 = vmatpush1.msra.mxu0 0.0
    %2416 = vmatprep.subr.mxu0 0.0
    %2417 = vmatpush1.msra.mxu0 0.0
    %2418 = vmatprep.subr.mxu0 0.0
    %2419 = vmatpush1.msra.mxu0 0.0
    %2420 = vmatprep.subr.mxu0 0.0
    %2421 = vmatpush1.msra.mxu0 0.0
    %2422 = vmatprep.subr.mxu0 0.0
    %2423 = vmatpush1.msra.mxu0 0.0
    %2424 = vmatprep.subr.mxu0 0.0
    %2425 = vmatpush1.msra.mxu0 0.0
    %2426 = vmatprep.subr.mxu0 0.0
    %2427 = vmatpush1.msra.mxu0 0.0
    %2428 = vmatprep.subr.mxu0 0.0
    %2429 = vmatpush1.msra.mxu0 0.0
    %2430 = vmatprep.subr.mxu0 0.0
    %2431 = vmatpush1.msra.mxu0 0.0
    %2432 = vmatprep.subr.mxu0 0.0
    %2433 = vmatpush1.msra.mxu0 0.0
    %2434 = vmatprep.subr.mxu0 0.0
    %2435 = vmatpush1.msra.mxu0 0.0
    %2436 = vmatprep.subr.mxu0 0.0
    %2437 = vmatpush1.msra.mxu0 0.0
    %2438 = vmatprep.subr.mxu0 0.0
    %2439 = vmatpush1.msra.mxu0 0.0
    %2440 = vmatprep.subr.mxu0 0.0
    %2441 = vmatpush1.msra.mxu0 0.0
    %2442 = vmatprep.mubr.f32.mxu0 0.0
    %2443 = vmatmul.mubr.f32.gmra.mrb[0].mxu0 %v2376
    %v2444 = vpop.f32.mrb[0].mxu0
    %v2445 = vadd.f32 %v2297, %v2444
    %v2446 = vpop.f32.mrb[0].mxu0
    %v2447 = vadd.f32 %v2301, %v2446
    %2448 = vdwg.mxu0
    %2449 = vmatprep.subr.mxu0 %v2261
    %2450 = vmatpush1.msra.mxu0 %v2260
    %2451 = vmatprep.subr.mxu0 %v2277
    %2452 = vmatpush1.msra.mxu0 %v2276
    %2453 = vmatprep.subr.mxu0 0.0
    %2454 = vmatpush1.msra.mxu0 0.0
    %2455 = vmatprep.subr.mxu0 0.0
    %2456 = vmatpush1.msra.mxu0 0.0
    %2457 = vmatprep.subr.mxu0 0.0
    %2458 = vmatpush1.msra.mxu0 0.0
    %2459 = vmatprep.subr.mxu0 0.0
    %2460 = vmatpush1.msra.mxu0 0.0
    %2461 = vmatprep.subr.mxu0 0.0
    %2462 = vmatpush1.msra.mxu0 0.0
    %2463 = vmatprep.subr.mxu0 0.0
    %2464 = vmatpush1.msra.mxu0 0.0
    %2465 = vmatprep.subr.mxu0 0.0
    %2466 = vmatpush1.msra.mxu0 0.0
    %2467 = vmatprep.subr.mxu0 0.0
    %2468 = vmatpush1.msra.mxu0 0.0
    %2469 = vmatprep.subr.mxu0 0.0
    %2470 = vmatpush1.msra.mxu0 0.0
    %2471 = vmatprep.subr.mxu0 0.0
    %2472 = vmatpush1.msra.mxu0 0.0
    %2473 = vmatprep.subr.mxu0 0.0
    %2474 = vmatpush1.msra.mxu0 0.0
    %2475 = vmatprep.subr.mxu0 0.0
    %2476 = vmatpush1.msra.mxu0 0.0
    %2477 = vmatprep.subr.mxu0 0.0
    %2478 = vmatpush1.msra.mxu0 0.0
    %2479 = vmatprep.subr.mxu0 0.0
    %2480 = vmatpush1.msra.mxu0 0.0
    %2481 = vmatprep.subr.mxu0 0.0
    %2482 = vmatpush1.msra.mxu0 0.0
    %2483 = vmatprep.subr.mxu0 0.0
    %2484 = vmatpush1.msra.mxu0 0.0
    %2485 = vmatprep.subr.mxu0 0.0
    %2486 = vmatpush1.msra.mxu0 0.0
    %2487 = vmatprep.subr.mxu0 0.0
    %2488 = vmatpush1.msra.mxu0 0.0
    %2489 = vmatprep.subr.mxu0 0.0
    %2490 = vmatpush1.msra.mxu0 0.0
    %2491 = vmatprep.subr.mxu0 0.0
    %2492 = vmatpush1.msra.mxu0 0.0
    %2493 = vmatprep.subr.mxu0 0.0
    %2494 = vmatpush1.msra.mxu0 0.0
    %2495 = vmatprep.subr.mxu0 0.0
    %2496 = vmatpush1.msra.mxu0 0.0
    %2497 = vmatprep.subr.mxu0 0.0
    %2498 = vmatpush1.msra.mxu0 0.0
    %2499 = vmatprep.subr.mxu0 0.0
    %2500 = vmatpush1.msra.mxu0 0.0
    %2501 = vmatprep.subr.mxu0 0.0
    %2502 = vmatpush1.msra.mxu0 0.0
    %2503 = vmatprep.subr.mxu0 0.0
    %2504 = vmatpush1.msra.mxu0 0.0
    %2505 = vmatprep.subr.mxu0 0.0
    %2506 = vmatpush1.msra.mxu0 0.0
    %2507 = vmatprep.subr.mxu0 0.0
    %2508 = vmatpush1.msra.mxu0 0.0
    %2509 = vmatprep.subr.mxu0 0.0
    %2510 = vmatpush1.msra.mxu0 0.0
    %2511 = vmatprep.subr.mxu0 0.0
    %2512 = vmatpush1.msra.mxu0 0.0
    %2513 = vmatprep.mubr.f32.mxu0 0.0
    %2514 = vmatmul.mubr.f32.gmra.mrb[0].mxu0 %v2376
    %v2515 = vpop.f32.mrb[0].mxu0
    %v2516 = vadd.f32 %v2305, %v2515
    %v2517 = vpop.f32.mrb[0].mxu0
    %v2518 = vadd.f32 %v2309, %v2517
    %2519 = vdwg.mxu0
    %2520 = vmatprep.subr.mxu0 %v2263
    %2521 = vmatpush1.msra.mxu0 %v2262
    %2522 = vmatprep.subr.mxu0 %v2279
    %2523 = vmatpush1.msra.mxu0 %v2278
    %2524 = vmatprep.subr.mxu0 0.0
    %2525 = vmatpush1.msra.mxu0 0.0
    %2526 = vmatprep.subr.mxu0 0.0
    %2527 = vmatpush1.msra.mxu0 0.0
    %2528 = vmatprep.subr.mxu0 0.0
    %2529 = vmatpush1.msra.mxu0 0.0
    %2530 = vmatprep.subr.mxu0 0.0
    %2531 = vmatpush1.msra.mxu0 0.0
    %2532 = vmatprep.subr.mxu0 0.0
    %2533 = vmatpush1.msra.mxu0 0.0
    %2534 = vmatprep.subr.mxu0 0.0
    %2535 = vmatpush1.msra.mxu0 0.0
    %2536 = vmatprep.subr.mxu0 0.0
    %2537 = vmatpush1.msra.mxu0 0.0
    %2538 = vmatprep.subr.mxu0 0.0
    %2539 = vmatpush1.msra.mxu0 0.0
    %2540 = vmatprep.subr.mxu0 0.0
    %2541 = vmatpush1.msra.mxu0 0.0
    %2542 = vmatprep.subr.mxu0 0.0
    %2543 = vmatpush1.msra.mxu0 0.0
    %2544 = vmatprep.subr.mxu0 0.0
    %2545 = vmatpush1.msra.mxu0 0.0
    %2546 = vmatprep.subr.mxu0 0.0
    %2547 = vmatpush1.msra.mxu0 0.0
    %2548 = vmatprep.subr.mxu0 0.0
    %2549 = vmatpush1.msra.mxu0 0.0
    %2550 = vmatprep.subr.mxu0 0.0
    %2551 = vmatpush1.msra.mxu0 0.0
    %2552 = vmatprep.subr.mxu0 0.0
    %2553 = vmatpush1.msra.mxu0 0.0
    %2554 = vmatprep.subr.mxu0 0.0
    %2555 = vmatpush1.msra.mxu0 0.0
    %2556 = vmatprep.subr.mxu0 0.0
    %2557 = vmatpush1.msra.mxu0 0.0
    %2558 = vmatprep.subr.mxu0 0.0
    %2559 = vmatpush1.msra.mxu0 0.0
    %2560 = vmatprep.subr.mxu0 0.0
    %2561 = vmatpush1.msra.mxu0 0.0
    %2562 = vmatprep.subr.mxu0 0.0
    %2563 = vmatpush1.msra.mxu0 0.0
    %2564 = vmatprep.subr.mxu0 0.0
    %2565 = vmatpush1.msra.mxu0 0.0
    %2566 = vmatprep.subr.mxu0 0.0
    %2567 = vmatpush1.msra.mxu0 0.0
    %2568 = vmatprep.subr.mxu0 0.0
    %2569 = vmatpush1.msra.mxu0 0.0
    %2570 = vmatprep.subr.mxu0 0.0
    %2571 = vmatpush1.msra.mxu0 0.0
    %2572 = vmatprep.subr.mxu0 0.0
    %2573 = vmatpush1.msra.mxu0 0.0
    %2574 = vmatprep.subr.mxu0 0.0
    %2575 = vmatpush1.msra.mxu0 0.0
    %2576 = vmatprep.subr.mxu0 0.0
    %2577 = vmatpush1.msra.mxu0 0.0
    %2578 = vmatprep.subr.mxu0 0.0
    %2579 = vmatpush1.msra.mxu0 0.0
    %2580 = vmatprep.subr.mxu0 0.0
    %2581 = vmatpush1.msra.mxu0 0.0
    %2582 = vmatprep.subr.mxu0 0.0
    %2583 = vmatpush1.msra.mxu0 0.0
    %2584 = vmatprep.mubr.f32.mxu0 0.0
    %2585 = vmatmul.mubr.f32.gmra.mrb[0].mxu0 %v2376
    %v2586 = vpop.f32.mrb[0].mxu0
    %v2587 = vadd.f32 %v2313, %v2586
    %v2588 = vpop.f32.mrb[0].mxu0
    %v2589 = vadd.f32 %v2317, %v2588
    %2590 = vdwg.mxu0
    %2591 = vmatprep.subr.mxu0 %v2265
    %2592 = vmatpush1.msra.mxu0 %v2264
    %2593 = vmatprep.subr.mxu0 %v2281
    %2594 = vmatpush1.msra.mxu0 %v2280
    %2595 = vmatprep.subr.mxu0 0.0
    %2596 = vmatpush1.msra.mxu0 0.0
    %2597 = vmatprep.subr.mxu0 0.0
    %2598 = vmatpush1.msra.mxu0 0.0
    %2599 = vmatprep.subr.mxu0 0.0
    %2600 = vmatpush1.msra.mxu0 0.0
    %2601 = vmatprep.subr.mxu0 0.0
    %2602 = vmatpush1.msra.mxu0 0.0
    %2603 = vmatprep.subr.mxu0 0.0
    %2604 = vmatpush1.msra.mxu0 0.0
    %2605 = vmatprep.subr.mxu0 0.0
    %2606 = vmatpush1.msra.mxu0 0.0
    %2607 = vmatprep.subr.mxu0 0.0
    %2608 = vmatpush1.msra.mxu0 0.0
    %2609 = vmatprep.subr.mxu0 0.0
    %2610 = vmatpush1.msra.mxu0 0.0
    %2611 = vmatprep.subr.mxu0 0.0
    %2612 = vmatpush1.msra.mxu0 0.0
    %2613 = vmatprep.subr.mxu0 0.0
    %2614 = vmatpush1.msra.mxu0 0.0
    %2615 = vmatprep.subr.mxu0 0.0
    %2616 = vmatpush1.msra.mxu0 0.0
    %2617 = vmatprep.subr.mxu0 0.0
    %2618 = vmatpush1.msra.mxu0 0.0
    %2619 = vmatprep.subr.mxu0 0.0
    %2620 = vmatpush1.msra.mxu0 0.0
    %2621 = vmatprep.subr.mxu0 0.0
    %2622 = vmatpush1.msra.mxu0 0.0
    %2623 = vmatprep.subr.mxu0 0.0
    %2624 = vmatpush1.msra.mxu0 0.0
    %2625 = vmatprep.subr.mxu0 0.0
    %2626 = vmatpush1.msra.mxu0 0.0
    %2627 = vmatprep.subr.mxu0 0.0
    %2628 = vmatpush1.msra.mxu0 0.0
    %2629 = vmatprep.subr.mxu0 0.0
    %2630 = vmatpush1.msra.mxu0 0.0
    %2631 = vmatprep.subr.mxu0 0.0
    %2632 = vmatpush1.msra.mxu0 0.0
    %2633 = vmatprep.subr.mxu0 0.0
    %2634 = vmatpush1.msra.mxu0 0.0
    %2635 = vmatprep.subr.mxu0 0.0
    %2636 = vmatpush1.msra.mxu0 0.0
    %2637 = vmatprep.subr.mxu0 0.0
    %2638 = vmatpush1.msra.mxu0 0.0
    %2639 = vmatprep.subr.mxu0 0.0
    %2640 = vmatpush1.msra.mxu0 0.0
    %2641 = vmatprep.subr.mxu0 0.0
    %2642 = vmatpush1.msra.mxu0 0.0
    %2643 = vmatprep.subr.mxu0 0.0
    %2644 = vmatpush1.msra.mxu0 0.0
    %2645 = vmatprep.subr.mxu0 0.0
    %2646 = vmatpush1.msra.mxu0 0.0
    %2647 = vmatprep.subr.mxu0 0.0
    %2648 = vmatpush1.msra.mxu0 0.0
    %2649 = vmatprep.subr.mxu0 0.0
    %2650 = vmatpush1.msra.mxu0 0.0
    %2651 = vmatprep.subr.mxu0 0.0
    %2652 = vmatpush1.msra.mxu0 0.0
    %2653 = vmatprep.subr.mxu0 0.0
    %2654 = vmatpush1.msra.mxu0 0.0
    %2655 = vmatprep.mubr.f32.mxu0 0.0
    %2656 = vmatmul.mubr.f32.gmra.mrb[0].mxu0 %v2376
    %v2657 = vpop.f32.mrb[0].mxu0
    %v2658 = vadd.f32 %v2321, %v2657
    %v2659 = vpop.f32.mrb[0].mxu0
    %v2660 = vadd.f32 %v2325, %v2659
    %2661 = vdwg.mxu0
    %2662 = vmatprep.subr.mxu0 %v2267
    %2663 = vmatpush1.msra.mxu0 %v2266
    %2664 = vmatprep.subr.mxu0 %v2283
    %2665 = vmatpush1.msra.mxu0 %v2282
    %2666 = vmatprep.subr.mxu0 0.0
    %2667 = vmatpush1.msra.mxu0 0.0
    %2668 = vmatprep.subr.mxu0 0.0
    %2669 = vmatpush1.msra.mxu0 0.0
    %2670 = vmatprep.subr.mxu0 0.0
    %2671 = vmatpush1.msra.mxu0 0.0
    %2672 = vmatprep.subr.mxu0 0.0
    %2673 = vmatpush1.msra.mxu0 0.0
    %2674 = vmatprep.subr.mxu0 0.0
    %2675 = vmatpush1.msra.mxu0 0.0
    %2676 = vmatprep.subr.mxu0 0.0
    %2677 = vmatpush1.msra.mxu0 0.0
    %2678 = vmatprep.subr.mxu0 0.0
    %2679 = vmatpush1.msra.mxu0 0.0
    %2680 = vmatprep.subr.mxu0 0.0
    %2681 = vmatpush1.msra.mxu0 0.0
    %2682 = vmatprep.subr.mxu0 0.0
    %2683 = vmatpush1.msra.mxu0 0.0
    %2684 = vmatprep.subr.mxu0 0.0
    %2685 = vmatpush1.msra.mxu0 0.0
    %2686 = vmatprep.subr.mxu0 0.0
    %2687 = vmatpush1.msra.mxu0 0.0
    %2688 = vmatprep.subr.mxu0 0.0
    %2689 = vmatpush1.msra.mxu0 0.0
    %2690 = vmatprep.subr.mxu0 0.0
    %2691 = vmatpush1.msra.mxu0 0.0
    %2692 = vmatprep.subr.mxu0 0.0
    %2693 = vmatpush1.msra.mxu0 0.0
    %2694 = vmatprep.subr.mxu0 0.0
    %2695 = vmatpush1.msra.mxu0 0.0
    %2696 = vmatprep.subr.mxu0 0.0
    %2697 = vmatpush1.msra.mxu0 0.0
    %2698 = vmatprep.subr.mxu0 0.0
    %2699 = vmatpush1.msra.mxu0 0.0
    %2700 = vmatprep.subr.mxu0 0.0
    %2701 = vmatpush1.msra.mxu0 0.0
    %2702 = vmatprep.subr.mxu0 0.0
    %2703 = vmatpush1.msra.mxu0 0.0
    %2704 = vmatprep.subr.mxu0 0.0
    %2705 = vmatpush1.msra.mxu0 0.0
    %2706 = vmatprep.subr.mxu0 0.0
    %2707 = vmatpush1.msra.mxu0 0.0
    %2708 = vmatprep.subr.mxu0 0.0
    %2709 = vmatpush1.msra.mxu0 0.0
    %2710 = vmatprep.subr.mxu0 0.0
    %2711 = vmatpush1.msra.mxu0 0.0
    %2712 = vmatprep.subr.mxu0 0.0
    %2713 = vmatpush1.msra.mxu0 0.0
    %2714 = vmatprep.subr.mxu0 0.0
    %2715 = vmatpush1.msra.mxu0 0.0
    %2716 = vmatprep.subr.mxu0 0.0
    %2717 = vmatpush1.msra.mxu0 0.0
    %2718 = vmatprep.subr.mxu0 0.0
    %2719 = vmatpush1.msra.mxu0 0.0
    %2720 = vmatprep.subr.mxu0 0.0
    %2721 = vmatpush1.msra.mxu0 0.0
    %2722 = vmatprep.subr.mxu0 0.0
    %2723 = vmatpush1.msra.mxu0 0.0
    %2724 = vmatprep.subr.mxu0 0.0
    %2725 = vmatpush1.msra.mxu0 0.0
    %2726 = vmatprep.mubr.f32.mxu0 0.0
    %2727 = vmatmul.mubr.f32.gmra.mrb[0].mxu0 %v2376
    %v2728 = vpop.f32.mrb[0].mxu0
    %v2729 = vadd.f32 %v2329, %v2728
    %v2730 = vpop.f32.mrb[0].mxu0
    %v2731 = vadd.f32 %v2333, %v2730
    %2732 = vdwg.mxu0
    %2733 = vmatprep.subr.mxu0 %v2269
    %2734 = vmatpush1.msra.mxu0 %v2268
    %2735 = vmatprep.subr.mxu0 %v2285
    %2736 = vmatpush1.msra.mxu0 %v2284
    %2737 = vmatprep.subr.mxu0 0.0
    %2738 = vmatpush1.msra.mxu0 0.0
    %2739 = vmatprep.subr.mxu0 0.0
    %2740 = vmatpush1.msra.mxu0 0.0
    %2741 = vmatprep.subr.mxu0 0.0
    %2742 = vmatpush1.msra.mxu0 0.0
    %2743 = vmatprep.subr.mxu0 0.0
    %2744 = vmatpush1.msra.mxu0 0.0
    %2745 = vmatprep.subr.mxu0 0.0
    %2746 = vmatpush1.msra.mxu0 0.0
    %2747 = vmatprep.subr.mxu0 0.0
    %2748 = vmatpush1.msra.mxu0 0.0
    %2749 = vmatprep.subr.mxu0 0.0
    %2750 = vmatpush1.msra.mxu0 0.0
    %2751 = vmatprep.subr.mxu0 0.0
    %2752 = vmatpush1.msra.mxu0 0.0
    %2753 = vmatprep.subr.mxu0 0.0
    %2754 = vmatpush1.msra.mxu0 0.0
    %2755 = vmatprep.subr.mxu0 0.0
    %2756 = vmatpush1.msra.mxu0 0.0
    %2757 = vmatprep.subr.mxu0 0.0
    %2758 = vmatpush1.msra.mxu0 0.0
    %2759 = vmatprep.subr.mxu0 0.0
    %2760 = vmatpush1.msra.mxu0 0.0
    %2761 = vmatprep.subr.mxu0 0.0
    %2762 = vmatpush1.msra.mxu0 0.0
    %2763 = vmatprep.subr.mxu0 0.0
    %2764 = vmatpush1.msra.mxu0 0.0
    %2765 = vmatprep.subr.mxu0 0.0
    %2766 = vmatpush1.msra.mxu0 0.0
    %2767 = vmatprep.subr.mxu0 0.0
    %2768 = vmatpush1.msra.mxu0 0.0
    %2769 = vmatprep.subr.mxu0 0.0
    %2770 = vmatpush1.msra.mxu0 0.0
    %2771 = vmatprep.subr.mxu0 0.0
    %2772 = vmatpush1.msra.mxu0 0.0
    %2773 = vmatprep.subr.mxu0 0.0
    %2774 = vmatpush1.msra.mxu0 0.0
    %2775 = vmatprep.subr.mxu0 0.0
    %2776 = vmatpush1.msra.mxu0 0.0
    %2777 = vmatprep.subr.mxu0 0.0
    %2778 = vmatpush1.msra.mxu0 0.0
    %2779 = vmatprep.subr.mxu0 0.0
    %2780 = vmatpush1.msra.mxu0 0.0
    %2781 = vmatprep.subr.mxu0 0.0
    %2782 = vmatpush1.msra.mxu0 0.0
    %2783 = vmatprep.subr.mxu0 0.0
    %2784 = vmatpush1.msra.mxu0 0.0
    %2785 = vmatprep.subr.mxu0 0.0
    %2786 = vmatpush1.msra.mxu0 0.0
    %2787 = vmatprep.subr.mxu0 0.0
    %2788 = vmatpush1.msra.mxu0 0.0
    %2789 = vmatprep.subr.mxu0 0.0
    %2790 = vmatpush1.msra.mxu0 0.0
    %2791 = vmatprep.subr.mxu0 0.0
    %2792 = vmatpush1.msra.mxu0 0.0
    %2793 = vmatprep.subr.mxu0 0.0
    %2794 = vmatpush1.msra.mxu0 0.0
    %2795 = vmatprep.subr.mxu0 0.0
    %2796 = vmatpush1.msra.mxu0 0.0
    %2797 = vmatprep.mubr.f32.mxu0 0.0
    %2798 = vmatmul.mubr.f32.gmra.mrb[0].mxu0 %v2376
    %v2799 = vpop.f32.mrb[0].mxu0
    %v2800 = vadd.f32 %v2337, %v2799
    %v2801 = vpop.f32.mrb[0].mxu0
    %v2802 = vadd.f32 %v2341, %v2801
    %2803 = vdwg.mxu0
    %2804 = vmatprep.subr.mxu0 %v2271
    %2805 = vmatpush1.msra.mxu0 %v2270
    %2806 = vmatprep.subr.mxu0 %v2287
    %2807 = vmatpush1.msra.mxu0 %v2286
    %2808 = vmatprep.subr.mxu0 0.0
    %2809 = vmatpush1.msra.mxu0 0.0
    %2810 = vmatprep.subr.mxu0 0.0
    %2811 = vmatpush1.msra.mxu0 0.0
    %2812 = vmatprep.subr.mxu0 0.0
    %2813 = vmatpush1.msra.mxu0 0.0
    %2814 = vmatprep.subr.mxu0 0.0
    %2815 = vmatpush1.msra.mxu0 0.0
    %2816 = vmatprep.subr.mxu0 0.0
    %2817 = vmatpush1.msra.mxu0 0.0
    %2818 = vmatprep.subr.mxu0 0.0
    %2819 = vmatpush1.msra.mxu0 0.0
    %2820 = vmatprep.subr.mxu0 0.0
    %2821 = vmatpush1.msra.mxu0 0.0
    %2822 = vmatprep.subr.mxu0 0.0
    %2823 = vmatpush1.msra.mxu0 0.0
    %2824 = vmatprep.subr.mxu0 0.0
    %2825 = vmatpush1.msra.mxu0 0.0
    %2826 = vmatprep.subr.mxu0 0.0
    %2827 = vmatpush1.msra.mxu0 0.0
    %2828 = vmatprep.subr.mxu0 0.0
    %2829 = vmatpush1.msra.mxu0 0.0
    %2830 = vmatprep.subr.mxu0 0.0
    %2831 = vmatpush1.msra.mxu0 0.0
    %2832 = vmatprep.subr.mxu0 0.0
    %2833 = vmatpush1.msra.mxu0 0.0
    %2834 = vmatprep.subr.mxu0 0.0
    %2835 = vmatpush1.msra.mxu0 0.0
    %2836 = vmatprep.subr.mxu0 0.0
    %2837 = vmatpush1.msra.mxu0 0.0
    %2838 = vmatprep.subr.mxu0 0.0
    %2839 = vmatpush1.msra.mxu0 0.0
    %2840 = vmatprep.subr.mxu0 0.0
    %2841 = vmatpush1.msra.mxu0 0.0
    %2842 = vmatprep.subr.mxu0 0.0
    %2843 = vmatpush1.msra.mxu0 0.0
    %2844 = vmatprep.subr.mxu0 0.0
    %2845 = vmatpush1.msra.mxu0 0.0
    %2846 = vmatprep.subr.mxu0 0.0
    %2847 = vmatpush1.msra.mxu0 0.0
    %2848 = vmatprep.subr.mxu0 0.0
    %2849 = vmatpush1.msra.mxu0 0.0
    %2850 = vmatprep.subr.mxu0 0.0
    %2851 = vmatpush1.msra.mxu0 0.0
    %2852 = vmatprep.subr.mxu0 0.0
    %2853 = vmatpush1.msra.mxu0 0.0
    %2854 = vmatprep.subr.mxu0 0.0
    %2855 = vmatpush1.msra.mxu0 0.0
    %2856 = vmatprep.subr.mxu0 0.0
    %2857 = vmatpush1.msra.mxu0 0.0
    %2858 = vmatprep.subr.mxu0 0.0
    %2859 = vmatpush1.msra.mxu0 0.0
    %2860 = vmatprep.subr.mxu0 0.0
    %2861 = vmatpush1.msra.mxu0 0.0
    %2862 = vmatprep.subr.mxu0 0.0
    %2863 = vmatpush1.msra.mxu0 0.0
    %2864 = vmatprep.subr.mxu0 0.0
    %2865 = vmatpush1.msra.mxu0 0.0
    %2866 = vmatprep.subr.mxu0 0.0
    %2867 = vmatpush1.msra.mxu0 0.0
    %2868 = vmatprep.mubr.f32.mxu0 0.0
    %2869 = vmatmul.mubr.f32.gmra.mrb[0].mxu0 %v2376
    %v2870 = vpop.f32.mrb[0].mxu0
    %v2871 = vadd.f32 %v2345, %v2870
    %v2872 = vpop.f32.mrb[0].mxu0
    %v2873 = vadd.f32 %v2349, %v2872
    %2874 = vdwg.mxu0
    %2875 = vmatprep.subr.mxu0 %v2273
    %2876 = vmatpush1.msra.mxu0 %v2272
    %2877 = vmatprep.subr.mxu0 %v2289
    %2878 = vmatpush1.msra.mxu0 %v2288
    %2879 = vmatprep.subr.mxu0 0.0
    %2880 = vmatpush1.msra.mxu0 0.0
    %2881 = vmatprep.subr.mxu0 0.0
    %2882 = vmatpush1.msra.mxu0 0.0
    %2883 = vmatprep.subr.mxu0 0.0
    %2884 = vmatpush1.msra.mxu0 0.0
    %2885 = vmatprep.subr.mxu0 0.0
    %2886 = vmatpush1.msra.mxu0 0.0
    %2887 = vmatprep.subr.mxu0 0.0
    %2888 = vmatpush1.msra.mxu0 0.0
    %2889 = vmatprep.subr.mxu0 0.0
    %2890 = vmatpush1.msra.mxu0 0.0
    %2891 = vmatprep.subr.mxu0 0.0
    %2892 = vmatpush1.msra.mxu0 0.0
    %2893 = vmatprep.subr.mxu0 0.0
    %2894 = vmatpush1.msra.mxu0 0.0
    %2895 = vmatprep.subr.mxu0 0.0
    %2896 = vmatpush1.msra.mxu0 0.0
    %2897 = vmatprep.subr.mxu0 0.0
    %2898 = vmatpush1.msra.mxu0 0.0
    %2899 = vmatprep.subr.mxu0 0.0
    %2900 = vmatpush1.msra.mxu0 0.0
    %2901 = vmatprep.subr.mxu0 0.0
    %2902 = vmatpush1.msra.mxu0 0.0
    %2903 = vmatprep.subr.mxu0 0.0
    %2904 = vmatpush1.msra.mxu0 0.0
    %2905 = vmatprep.subr.mxu0 0.0
    %2906 = vmatpush1.msra.mxu0 0.0
    %2907 = vmatprep.subr.mxu0 0.0
    %2908 = vmatpush1.msra.mxu0 0.0
    %2909 = vmatprep.subr.mxu0 0.0
    %2910 = vmatpush1.msra.mxu0 0.0
    %2911 = vmatprep.subr.mxu0 0.0
    %2912 = vmatpush1.msra.mxu0 0.0
    %2913 = vmatprep.subr.mxu0 0.0
    %2914 = vmatpush1.msra.mxu0 0.0
    %2915 = vmatprep.subr.mxu0 0.0
    %2916 = vmatpush1.msra.mxu0 0.0
    %2917 = vmatprep.subr.mxu0 0.0
    %2918 = vmatpush1.msra.mxu0 0.0
    %2919 = vmatprep.subr.mxu0 0.0
    %2920 = vmatpush1.msra.mxu0 0.0
    %2921 = vmatprep.subr.mxu0 0.0
    %2922 = vmatpush1.msra.mxu0 0.0
    %2923 = vmatprep.subr.mxu0 0.0
    %2924 = vmatpush1.msra.mxu0 0.0
    %2925 = vmatprep.subr.mxu0 0.0
    %2926 = vmatpush1.msra.mxu0 0.0
    %2927 = vmatprep.subr.mxu0 0.0
    %2928 = vmatpush1.msra.mxu0 0.0
    %2929 = vmatprep.subr.mxu0 0.0
    %2930 = vmatpush1.msra.mxu0 0.0
    %2931 = vmatprep.subr.mxu0 0.0
    %2932 = vmatpush1.msra.mxu0 0.0
    %2933 = vmatprep.subr.mxu0 0.0
    %2934 = vmatpush1.msra.mxu0 0.0
    %2935 = vmatprep.subr.mxu0 0.0
    %2936 = vmatpush1.msra.mxu0 0.0
    %2937 = vmatprep.subr.mxu0 0.0
    %2938 = vmatpush1.msra.mxu0 0.0
    %2939 = vmatprep.mubr.f32.mxu0 0.0
    %2940 = vmatmul.mubr.f32.gmra.mrb[0].mxu0 %v2376
    %v2941 = vpop.f32.mrb[0].mxu0
    %v2942 = vadd.f32 %v2353, %v2941
    %v2943 = vpop.f32.mrb[0].mxu0
    %v2944 = vadd.f32 %v2357, %v2943
    %2945 = vdwg.mxu0
    %vm2946 = vcmp.gt.f32.partialorder %v2445, 0.0
    %vm2947 = vcmp.gt.f32.partialorder %v2447, 0.0
    %vm2948 = vcmp.gt.f32.partialorder %v2516, 0.0
    %vm2949 = vcmp.gt.f32.partialorder %v2518, 0.0
    %vm2950 = vcmp.gt.f32.partialorder %v2587, 0.0
    %vm2951 = vcmp.gt.f32.partialorder %v2589, 0.0
    %vm2952 = vcmp.gt.f32.partialorder %v2658, 0.0
    %vm2953 = vcmp.gt.f32.partialorder %v2660, 0.0
    %vm2954 = vcmp.gt.f32.partialorder %v2729, 0.0
    %vm2955 = vcmp.gt.f32.partialorder %v2731, 0.0
    %vm2956 = vcmp.gt.f32.partialorder %v2800, 0.0
    %vm2957 = vcmp.gt.f32.partialorder %v2802, 0.0
    %vm2958 = vcmp.gt.f32.partialorder %v2871, 0.0
    %vm2959 = vcmp.gt.f32.partialorder %v2873, 0.0
    %vm2960 = vcmp.gt.f32.partialorder %v2942, 0.0
    %vm2961 = vcmp.gt.f32.partialorder %v2944, 0.0
    %v2962 = vmul.f32 %v2445, 0.2
    %v2963 = vmul.f32 %v2447, 0.2
    %v2964 = vmul.f32 %v2516, 0.2
    %v2965 = vmul.f32 %v2518, 0.2
    %v2966 = vmul.f32 %v2587, 0.2
    %v2967 = vmul.f32 %v2589, 0.2
    %v2968 = vmul.f32 %v2658, 0.2
    %v2969 = vmul.f32 %v2660, 0.2
    %v2970 = vmul.f32 %v2729, 0.2
    %v2971 = vmul.f32 %v2731, 0.2
    %v2972 = vmul.f32 %v2800, 0.2
    %v2973 = vmul.f32 %v2802, 0.2
    %v2974 = vmul.f32 %v2871, 0.2
    %v2975 = vmul.f32 %v2873, 0.2
    %v2976 = vmul.f32 %v2942, 0.2
    %v2977 = vmul.f32 %v2944, 0.2
    %v2978 = vsel %vm2946, %v2445, %v2962
    %v2979 = vsel %vm2947, %v2447, %v2963
    %v2980 = vsel %vm2948, %v2516, %v2964
    %v2981 = vsel %vm2949, %v2518, %v2965
    %v2982 = vsel %vm2950, %v2587, %v2966
    %v2983 = vsel %vm2951, %v2589, %v2967
    %v2984 = vsel %vm2952, %v2658, %v2968
    %v2985 = vsel %vm2953, %v2660, %v2969
    %v2986 = vsel %vm2954, %v2729, %v2970
    %v2987 = vsel %vm2955, %v2731, %v2971
    %v2988 = vsel %vm2956, %v2800, %v2972
    %v2989 = vsel %vm2957, %v2802, %v2973
    %v2990 = vsel %vm2958, %v2871, %v2974
    %v2991 = vsel %vm2959, %v2873, %v2975
    %v2992 = vsel %vm2960, %v2942, %v2976
    %v2993 = vsel %vm2961, %v2944, %v2977
    %v2994 = vld [vmem:[%s19] sm:$0xff]
    %v2995 = vld [vmem:[%s19 + $0x8] sm:$0xff]
    %v2996 = vld [vmem:[%s19 + $0x10] sm:$0xff]
    %v2997 = vld [vmem:[%s19 + $0x18] sm:$0xff]
    %v2998 = vld [vmem:[%s19 + $0x20] sm:$0xff]
    %v2999 = vld [vmem:[%s19 + $0x28] sm:$0xff]
    %v3000 = vld [vmem:[%s19 + $0x30] sm:$0xff]
    %v3001 = vld [vmem:[%s19 + $0x38] sm:$0xff]
    %v3002 = vld [vmem:[%s19 + $0x40] sm:$0xff]
    %v3003 = vld [vmem:[%s19 + $0x48] sm:$0xff]
    %v3004 = vld [vmem:[%s19 + $0x50] sm:$0xff]
    %v3005 = vld [vmem:[%s19 + $0x58] sm:$0xff]
    %v3006 = vld [vmem:[%s19 + $0x60] sm:$0xff]
    %v3007 = vld [vmem:[%s19 + $0x68] sm:$0xff]
    %v3008 = vld [vmem:[%s19 + $0x70] sm:$0xff]
    %v3009 = vld [vmem:[%s19 + $0x78] sm:$0xff]
    %v3010 = vld [vmem:[%s19 + $0x80] sm:$0xff]
    %v3011 = vld [vmem:[%s19 + $0x88] sm:$0xff]
    %v3012 = vld [vmem:[%s19 + $0x90] sm:$0xff]
    %v3013 = vld [vmem:[%s19 + $0x98] sm:$0xff]
    %v3014 = vld [vmem:[%s19 + $0xa0] sm:$0xff]
    %v3015 = vld [vmem:[%s19 + $0xa8] sm:$0xff]
    %v3016 = vld [vmem:[%s19 + $0xb0] sm:$0xff]
    %v3017 = vld [vmem:[%s19 + $0xb8] sm:$0xff]
    %v3018 = vld [vmem:[%s19 + $0xc0] sm:$0xff]
    %v3019 = vld [vmem:[%s19 + $0xc8] sm:$0xff]
    %v3020 = vld [vmem:[%s19 + $0xd0] sm:$0xff]
    %v3021 = vld [vmem:[%s19 + $0xd8] sm:$0xff]
    %v3022 = vld [vmem:[%s19 + $0xe0] sm:$0xff]
    %v3023 = vld [vmem:[%s19 + $0xe8] sm:$0xff]
    %v3024 = vld [vmem:[%s19 + $0xf0] sm:$0xff]
    %v3025 = vld [vmem:[%s19 + $0xf8] sm:$0xff]
    %v3026 = vld [vmem:[%s19 + $0x100] sm:$0xff]
    %v3027 = vld [vmem:[%s19 + $0x108] sm:$0xff]
    %v3028 = vld [vmem:[%s19 + $0x110] sm:$0xff]
    %v3029 = vld [vmem:[%s19 + $0x118] sm:$0xff]
    %v3030 = vld [vmem:[%s19 + $0x120] sm:$0xff]
    %v3031 = vld [vmem:[%s19 + $0x128] sm:$0xff]
    %v3032 = vld [vmem:[%s19 + $0x130] sm:$0xff]
    %v3033 = vld [vmem:[%s19 + $0x138] sm:$0xff]
    %v3034 = vld [vmem:[%s19 + $0x140] sm:$0xff]
    %v3035 = vld [vmem:[%s19 + $0x148] sm:$0xff]
    %v3036 = vld [vmem:[%s19 + $0x150] sm:$0xff]
    %v3037 = vld [vmem:[%s19 + $0x158] sm:$0xff]
    %v3038 = vld [vmem:[%s19 + $0x160] sm:$0xff]
    %v3039 = vld [vmem:[%s19 + $0x168] sm:$0xff]
    %v3040 = vld [vmem:[%s19 + $0x170] sm:$0xff]
    %v3041 = vld [vmem:[%s19 + $0x178] sm:$0xff]
    %v3042 = vld [vmem:[%s19 + $0x180] sm:$0xff]
    %v3043 = vld [vmem:[%s19 + $0x188] sm:$0xff]
    %v3044 = vld [vmem:[%s19 + $0x190] sm:$0xff]
    %v3045 = vld [vmem:[%s19 + $0x198] sm:$0xff]
    %v3046 = vld [vmem:[%s19 + $0x1a0] sm:$0xff]
    %v3047 = vld [vmem:[%s19 + $0x1a8] sm:$0xff]
    %v3048 = vld [vmem:[%s19 + $0x1b0] sm:$0xff]
    %v3049 = vld [vmem:[%s19 + $0x1b8] sm:$0xff]
    %v3050 = vld [vmem:[%s19 + $0x1c0] sm:$0xff]
    %v3051 = vld [vmem:[%s19 + $0x1c8] sm:$0xff]
    %v3052 = vld [vmem:[%s19 + $0x1d0] sm:$0xff]
    %v3053 = vld [vmem:[%s19 + $0x1d8] sm:$0xff]
    %v3054 = vld [vmem:[%s19 + $0x1e0] sm:$0xff]
    %v3055 = vld [vmem:[%s19 + $0x1e8] sm:$0xff]
    %v3056 = vld [vmem:[%s19 + $0x1f0] sm:$0xff]
    %v3057 = vld [vmem:[%s19 + $0x1f8] sm:$0xff]
    %v3058 = vld [vmem:[%s19 + $0x200] sm:$0xff]
    %v3059 = vld [vmem:[%s19 + $0x208] sm:$0xff]
    %v3060 = vld [vmem:[%s19 + $0x210] sm:$0xff]
    %v3061 = vld [vmem:[%s19 + $0x218] sm:$0xff]
    %v3062 = vld [vmem:[%s19 + $0x220] sm:$0xff]
    %v3063 = vld [vmem:[%s19 + $0x228] sm:$0xff]
    %v3064 = vld [vmem:[%s19 + $0x230] sm:$0xff]
    %v3065 = vld [vmem:[%s19 + $0x238] sm:$0xff]
    %v3066 = vld [vmem:[%s19 + $0x240] sm:$0xff]
    %v3067 = vld [vmem:[%s19 + $0x248] sm:$0xff]
    %v3068 = vld [vmem:[%s19 + $0x250] sm:$0xff]
    %v3069 = vld [vmem:[%s19 + $0x258] sm:$0xff]
    %v3070 = vld [vmem:[%s19 + $0x260] sm:$0xff]
    %v3071 = vld [vmem:[%s19 + $0x268] sm:$0xff]
    %v3072 = vld [vmem:[%s19 + $0x270] sm:$0xff]
    %v3073 = vld [vmem:[%s19 + $0x278] sm:$0xff]
    %v3074 = vld [vmem:[%s19 + $0x280] sm:$0xff]
    %v3075 = vld [vmem:[%s19 + $0x288] sm:$0xff]
    %v3076 = vld [vmem:[%s19 + $0x290] sm:$0xff]
    %v3077 = vld [vmem:[%s19 + $0x298] sm:$0xff]
    %v3078 = vld [vmem:[%s19 + $0x2a0] sm:$0xff]
    %v3079 = vld [vmem:[%s19 + $0x2a8] sm:$0xff]
    %v3080 = vld [vmem:[%s19 + $0x2b0] sm:$0xff]
    %v3081 = vld [vmem:[%s19 + $0x2b8] sm:$0xff]
    %v3082 = vld [vmem:[%s19 + $0x2c0] sm:$0xff]
    %v3083 = vld [vmem:[%s19 + $0x2c8] sm:$0xff]
    %v3084 = vld [vmem:[%s19 + $0x2d0] sm:$0xff]
    %v3085 = vld [vmem:[%s19 + $0x2d8] sm:$0xff]
    %v3086 = vld [vmem:[%s19 + $0x2e0] sm:$0xff]
    %v3087 = vld [vmem:[%s19 + $0x2e8] sm:$0xff]
    %v3088 = vld [vmem:[%s19 + $0x2f0] sm:$0xff]
    %v3089 = vld [vmem:[%s19 + $0x2f8] sm:$0xff]
    %v3090 = vld [vmem:[%s19 + $0x300] sm:$0xff]
    %v3091 = vld [vmem:[%s19 + $0x308] sm:$0xff]
    %v3092 = vld [vmem:[%s19 + $0x310] sm:$0xff]
    %v3093 = vld [vmem:[%s19 + $0x318] sm:$0xff]
    %v3094 = vld [vmem:[%s19 + $0x320] sm:$0xff]
    %v3095 = vld [vmem:[%s19 + $0x328] sm:$0xff]
    %v3096 = vld [vmem:[%s19 + $0x330] sm:$0xff]
    %v3097 = vld [vmem:[%s19 + $0x338] sm:$0xff]
    %v3098 = vld [vmem:[%s19 + $0x340] sm:$0xff]
    %v3099 = vld [vmem:[%s19 + $0x348] sm:$0xff]
    %v3100 = vld [vmem:[%s19 + $0x350] sm:$0xff]
    %v3101 = vld [vmem:[%s19 + $0x358] sm:$0xff]
    %v3102 = vld [vmem:[%s19 + $0x360] sm:$0xff]
    %v3103 = vld [vmem:[%s19 + $0x368] sm:$0xff]
    %v3104 = vld [vmem:[%s19 + $0x370] sm:$0xff]
    %v3105 = vld [vmem:[%s19 + $0x378] sm:$0xff]
    %v3106 = vld [vmem:[%s19 + $0x380] sm:$0xff]
    %v3107 = vld [vmem:[%s19 + $0x388] sm:$0xff]
    %v3108 = vld [vmem:[%s19 + $0x390] sm:$0xff]
    %v3109 = vld [vmem:[%s19 + $0x398] sm:$0xff]
    %v3110 = vld [vmem:[%s19 + $0x3a0] sm:$0xff]
    %v3111 = vld [vmem:[%s19 + $0x3a8] sm:$0xff]
    %v3112 = vld [vmem:[%s19 + $0x3b0] sm:$0xff]
    %v3113 = vld [vmem:[%s19 + $0x3b8] sm:$0xff]
    %v3114 = vld [vmem:[%s19 + $0x3c0] sm:$0xff]
    %v3115 = vld [vmem:[%s19 + $0x3c8] sm:$0xff]
    %v3116 = vld [vmem:[%s19 + $0x3d0] sm:$0xff]
    %v3117 = vld [vmem:[%s19 + $0x3d8] sm:$0xff]
    %v3118 = vld [vmem:[%s19 + $0x3e0] sm:$0xff]
    %v3119 = vld [vmem:[%s19 + $0x3e8] sm:$0xff]
    %v3120 = vld [vmem:[%s19 + $0x3f0] sm:$0xff]
    %v3121 = vld [vmem:[%s19 + $0x3f8] sm:$0xff]
    %v3122 = vld [vmem:[%s19 + $0x400] sm:$0xff]
    %v3123 = vld [vmem:[%s19 + $0x408] sm:$0xff]
    %v3124 = vld [vmem:[%s19 + $0x410] sm:$0xff]
    %v3125 = vld [vmem:[%s19 + $0x418] sm:$0xff]
    %v3126 = vld [vmem:[%s19 + $0x420] sm:$0xff]
    %v3127 = vld [vmem:[%s19 + $0x428] sm:$0xff]
    %v3128 = vld [vmem:[%s19 + $0x430] sm:$0xff]
    %v3129 = vld [vmem:[%s19 + $0x438] sm:$0xff]
    %v3130 = vld [vmem:[%s19 + $0x440] sm:$0xff]
    %v3131 = vld [vmem:[%s19 + $0x448] sm:$0xff]
    %v3132 = vld [vmem:[%s19 + $0x450] sm:$0xff]
    %v3133 = vld [vmem:[%s19 + $0x458] sm:$0xff]
    %v3134 = vld [vmem:[%s19 + $0x460] sm:$0xff]
    %v3135 = vld [vmem:[%s19 + $0x468] sm:$0xff]
    %v3136 = vld [vmem:[%s19 + $0x470] sm:$0xff]
    %v3137 = vld [vmem:[%s19 + $0x478] sm:$0xff]
    %v3138 = vld [vmem:[%s19 + $0x480] sm:$0xff]
    %v3139 = vld [vmem:[%s19 + $0x488] sm:$0xff]
    %v3140 = vld [vmem:[%s19 + $0x490] sm:$0xff]
    %v3141 = vld [vmem:[%s19 + $0x498] sm:$0xff]
    %v3142 = vld [vmem:[%s19 + $0x4a0] sm:$0xff]
    %v3143 = vld [vmem:[%s19 + $0x4a8] sm:$0xff]
    %v3144 = vld [vmem:[%s19 + $0x4b0] sm:$0xff]
    %v3145 = vld [vmem:[%s19 + $0x4b8] sm:$0xff]
    %v3146 = vld [vmem:[%s19 + $0x4c0] sm:$0xff]
    %v3147 = vld [vmem:[%s19 + $0x4c8] sm:$0xff]
    %v3148 = vld [vmem:[%s19 + $0x4d0] sm:$0xff]
    %v3149 = vld [vmem:[%s19 + $0x4d8] sm:$0xff]
    %v3150 = vld [vmem:[%s19 + $0x4e0] sm:$0xff]
    %v3151 = vld [vmem:[%s19 + $0x4e8] sm:$0xff]
    %v3152 = vld [vmem:[%s19 + $0x4f0] sm:$0xff]
    %v3153 = vld [vmem:[%s19 + $0x4f8] sm:$0xff]
    %v3154 = vld [vmem:[%s19 + $0x500] sm:$0xff]
    %v3155 = vld [vmem:[%s19 + $0x508] sm:$0xff]
    %v3156 = vld [vmem:[%s19 + $0x510] sm:$0xff]
    %v3157 = vld [vmem:[%s19 + $0x518] sm:$0xff]
    %v3158 = vld [vmem:[%s19 + $0x520] sm:$0xff]
    %v3159 = vld [vmem:[%s19 + $0x528] sm:$0xff]
    %v3160 = vld [vmem:[%s19 + $0x530] sm:$0xff]
    %v3161 = vld [vmem:[%s19 + $0x538] sm:$0xff]
    %v3162 = vld [vmem:[%s19 + $0x540] sm:$0xff]
    %v3163 = vld [vmem:[%s19 + $0x548] sm:$0xff]
    %v3164 = vld [vmem:[%s19 + $0x550] sm:$0xff]
    %v3165 = vld [vmem:[%s19 + $0x558] sm:$0xff]
    %v3166 = vld [vmem:[%s19 + $0x560] sm:$0xff]
    %v3167 = vld [vmem:[%s19 + $0x568] sm:$0xff]
    %v3168 = vld [vmem:[%s19 + $0x570] sm:$0xff]
    %v3169 = vld [vmem:[%s19 + $0x578] sm:$0xff]
    %v3170 = vld [vmem:[%s19 + $0x580] sm:$0xff]
    %v3171 = vld [vmem:[%s19 + $0x588] sm:$0xff]
    %v3172 = vld [vmem:[%s19 + $0x590] sm:$0xff]
    %v3173 = vld [vmem:[%s19 + $0x598] sm:$0xff]
    %v3174 = vld [vmem:[%s19 + $0x5a0] sm:$0xff]
    %v3175 = vld [vmem:[%s19 + $0x5a8] sm:$0xff]
    %v3176 = vld [vmem:[%s19 + $0x5b0] sm:$0xff]
    %v3177 = vld [vmem:[%s19 + $0x5b8] sm:$0xff]
    %v3178 = vld [vmem:[%s19 + $0x5c0] sm:$0xff]
    %v3179 = vld [vmem:[%s19 + $0x5c8] sm:$0xff]
    %v3180 = vld [vmem:[%s19 + $0x5d0] sm:$0xff]
    %v3181 = vld [vmem:[%s19 + $0x5d8] sm:$0xff]
    %v3182 = vld [vmem:[%s19 + $0x5e0] sm:$0xff]
    %v3183 = vld [vmem:[%s19 + $0x5e8] sm:$0xff]
    %v3184 = vld [vmem:[%s19 + $0x5f0] sm:$0xff]
    %v3185 = vld [vmem:[%s19 + $0x5f8] sm:$0xff]
    %v3186 = vld [vmem:[%s19 + $0x600] sm:$0xff]
    %v3187 = vld [vmem:[%s19 + $0x608] sm:$0xff]
    %v3188 = vld [vmem:[%s19 + $0x610] sm:$0xff]
    %v3189 = vld [vmem:[%s19 + $0x618] sm:$0xff]
    %v3190 = vld [vmem:[%s19 + $0x620] sm:$0xff]
    %v3191 = vld [vmem:[%s19 + $0x628] sm:$0xff]
    %v3192 = vld [vmem:[%s19 + $0x630] sm:$0xff]
    %v3193 = vld [vmem:[%s19 + $0x638] sm:$0xff]
    %v3194 = vld [vmem:[%s19 + $0x640] sm:$0xff]
    %v3195 = vld [vmem:[%s19 + $0x648] sm:$0xff]
    %v3196 = vld [vmem:[%s19 + $0x650] sm:$0xff]
    %v3197 = vld [vmem:[%s19 + $0x658] sm:$0xff]
    %v3198 = vld [vmem:[%s19 + $0x660] sm:$0xff]
    %v3199 = vld [vmem:[%s19 + $0x668] sm:$0xff]
    %v3200 = vld [vmem:[%s19 + $0x670] sm:$0xff]
    %v3201 = vld [vmem:[%s19 + $0x678] sm:$0xff]
    %v3202 = vld [vmem:[%s19 + $0x680] sm:$0xff]
    %v3203 = vld [vmem:[%s19 + $0x688] sm:$0xff]
    %v3204 = vld [vmem:[%s19 + $0x690] sm:$0xff]
    %v3205 = vld [vmem:[%s19 + $0x698] sm:$0xff]
    %v3206 = vld [vmem:[%s19 + $0x6a0] sm:$0xff]
    %v3207 = vld [vmem:[%s19 + $0x6a8] sm:$0xff]
    %v3208 = vld [vmem:[%s19 + $0x6b0] sm:$0xff]
    %v3209 = vld [vmem:[%s19 + $0x6b8] sm:$0xff]
    %v3210 = vld [vmem:[%s19 + $0x6c0] sm:$0xff]
    %v3211 = vld [vmem:[%s19 + $0x6c8] sm:$0xff]
    %v3212 = vld [vmem:[%s19 + $0x6d0] sm:$0xff]
    %v3213 = vld [vmem:[%s19 + $0x6d8] sm:$0xff]
    %v3214 = vld [vmem:[%s19 + $0x6e0] sm:$0xff]
    %v3215 = vld [vmem:[%s19 + $0x6e8] sm:$0xff]
    %v3216 = vld [vmem:[%s19 + $0x6f0] sm:$0xff]
    %v3217 = vld [vmem:[%s19 + $0x6f8] sm:$0xff]
    %v3218 = vld [vmem:[%s19 + $0x700] sm:$0xff]
    %v3219 = vld [vmem:[%s19 + $0x708] sm:$0xff]
    %v3220 = vld [vmem:[%s19 + $0x710] sm:$0xff]
    %v3221 = vld [vmem:[%s19 + $0x718] sm:$0xff]
    %v3222 = vld [vmem:[%s19 + $0x720] sm:$0xff]
    %v3223 = vld [vmem:[%s19 + $0x728] sm:$0xff]
    %v3224 = vld [vmem:[%s19 + $0x730] sm:$0xff]
    %v3225 = vld [vmem:[%s19 + $0x738] sm:$0xff]
    %v3226 = vld [vmem:[%s19 + $0x740] sm:$0xff]
    %v3227 = vld [vmem:[%s19 + $0x748] sm:$0xff]
    %v3228 = vld [vmem:[%s19 + $0x750] sm:$0xff]
    %v3229 = vld [vmem:[%s19 + $0x758] sm:$0xff]
    %v3230 = vld [vmem:[%s19 + $0x760] sm:$0xff]
    %v3231 = vld [vmem:[%s19 + $0x768] sm:$0xff]
    %v3232 = vld [vmem:[%s19 + $0x770] sm:$0xff]
    %v3233 = vld [vmem:[%s19 + $0x778] sm:$0xff]
    %v3234 = vld [vmem:[%s19 + $0x780] sm:$0xff]
    %v3235 = vld [vmem:[%s19 + $0x788] sm:$0xff]
    %v3236 = vld [vmem:[%s19 + $0x790] sm:$0xff]
    %v3237 = vld [vmem:[%s19 + $0x798] sm:$0xff]
    %v3238 = vld [vmem:[%s19 + $0x7a0] sm:$0xff]
    %v3239 = vld [vmem:[%s19 + $0x7a8] sm:$0xff]
    %v3240 = vld [vmem:[%s19 + $0x7b0] sm:$0xff]
    %v3241 = vld [vmem:[%s19 + $0x7b8] sm:$0xff]
    %v3242 = vld [vmem:[%s19 + $0x7c0] sm:$0xff]
    %v3243 = vld [vmem:[%s19 + $0x7c8] sm:$0xff]
    %v3244 = vld [vmem:[%s19 + $0x7d0] sm:$0xff]
    %v3245 = vld [vmem:[%s19 + $0x7d8] sm:$0xff]
    %v3246 = vld [vmem:[%s19 + $0x7e0] sm:$0xff]
    %v3247 = vld [vmem:[%s19 + $0x7e8] sm:$0xff]
    %v3248 = vld [vmem:[%s19 + $0x7f0] sm:$0xff]
    %v3249 = vld [vmem:[%s19 + $0x7f8] sm:$0xff]
    %v3250 = vld [vmem:[%s20] sm:$0x1]
    %v3252 = vlaneseq
    %v3253 = vshrl.u32 %v3252, 7
    %v3254 = vsub.s32 0, %v3253
    %v3255 = vrot.slane %v3250, %v3254
    %3257 = vmatprep.subr.mxu0 0.0
    %3258 = vmatpush1.msra.mxu0 %v2994
    %3259 = vmatprep.subr.mxu0 0.0
    %3260 = vmatpush1.msra.mxu0 %v2995
    %3261 = vmatprep.subr.mxu0 0.0
    %3262 = vmatpush1.msra.mxu0 %v2996
    %3263 = vmatprep.subr.mxu0 0.0
    %3264 = vmatpush1.msra.mxu0 %v2997
    %3265 = vmatprep.subr.mxu0 0.0
    %3266 = vmatpush1.msra.mxu0 %v2998
    %3267 = vmatprep.subr.mxu0 0.0
    %3268 = vmatpush1.msra.mxu0 %v2999
    %3269 = vmatprep.subr.mxu0 0.0
    %3270 = vmatpush1.msra.mxu0 %v3000
    %3271 = vmatprep.subr.mxu0 0.0
    %3272 = vmatpush1.msra.mxu0 %v3001
    %3273 = vmatprep.subr.mxu0 0.0
    %3274 = vmatpush1.msra.mxu0 %v3002
    %3275 = vmatprep.subr.mxu0 0.0
    %3276 = vmatpush1.msra.mxu0 %v3003
    %3277 = vmatprep.subr.mxu0 0.0
    %3278 = vmatpush1.msra.mxu0 %v3004
    %3279 = vmatprep.subr.mxu0 0.0
    %3280 = vmatpush1.msra.mxu0 %v3005
    %3281 = vmatprep.subr.mxu0 0.0
    %3282 = vmatpush1.msra.mxu0 %v3006
    %3283 = vmatprep.subr.mxu0 0.0
    %3284 = vmatpush1.msra.mxu0 %v3007
    %3285 = vmatprep.subr.mxu0 0.0
    %3286 = vmatpush1.msra.mxu0 %v3008
    %3287 = vmatprep.subr.mxu0 0.0
    %3288 = vmatpush1.msra.mxu0 %v3009
    %3289 = vmatprep.subr.mxu0 0.0
    %3290 = vmatpush1.msra.mxu0 %v3010
    %3291 = vmatprep.subr.mxu0 0.0
    %3292 = vmatpush1.msra.mxu0 %v3011
    %3293 = vmatprep.subr.mxu0 0.0
    %3294 = vmatpush1.msra.mxu0 %v3012
    %3295 = vmatprep.subr.mxu0 0.0
    %3296 = vmatpush1.msra.mxu0 %v3013
    %3297 = vmatprep.subr.mxu0 0.0
    %3298 = vmatpush1.msra.mxu0 %v3014
    %3299 = vmatprep.subr.mxu0 0.0
    %3300 = vmatpush1.msra.mxu0 %v3015
    %3301 = vmatprep.subr.mxu0 0.0
    %3302 = vmatpush1.msra.mxu0 %v3016
    %3303 = vmatprep.subr.mxu0 0.0
    %3304 = vmatpush1.msra.mxu0 %v3017
    %3305 = vmatprep.subr.mxu0 0.0
    %3306 = vmatpush1.msra.mxu0 %v3018
    %3307 = vmatprep.subr.mxu0 0.0
    %3308 = vmatpush1.msra.mxu0 %v3019
    %3309 = vmatprep.subr.mxu0 0.0
    %3310 = vmatpush1.msra.mxu0 %v3020
    %3311 = vmatprep.subr.mxu0 0.0
    %3312 = vmatpush1.msra.mxu0 %v3021
    %3313 = vmatprep.subr.mxu0 0.0
    %3314 = vmatpush1.msra.mxu0 %v3022
    %3315 = vmatprep.subr.mxu0 0.0
    %3316 = vmatpush1.msra.mxu0 %v3023
    %3317 = vmatprep.subr.mxu0 0.0
    %3318 = vmatpush1.msra.mxu0 %v3024
    %3319 = vmatprep.subr.mxu0 0.0
    %3320 = vmatpush1.msra.mxu0 %v3025
    %3321 = vmatprep.mubr.f32.mxu0 %v2979
    %3322 = vmatmul.mubr.f32.gmra.mrb[0].mxu0 %v2978
    %v3323 = vpop.f32.mrb[0].mxu0
    %v3324 = vadd.f32 %v3255, %v3323
    %v3325 = vpop.f32.mrb[0].mxu0
    %3326 = vdwg.mxu0
    %3327 = vmatprep.subr.mxu0 0.0
    %3328 = vmatpush1.msra.mxu0 %v3026
    %3329 = vmatprep.subr.mxu0 0.0
    %3330 = vmatpush1.msra.mxu0 %v3027
    %3331 = vmatprep.subr.mxu0 0.0
    %3332 = vmatpush1.msra.mxu0 %v3028
    %3333 = vmatprep.subr.mxu0 0.0
    %3334 = vmatpush1.msra.mxu0 %v3029
    %3335 = vmatprep.subr.mxu0 0.0
    %3336 = vmatpush1.msra.mxu0 %v3030
    %3337 = vmatprep.subr.mxu0 0.0
    %3338 = vmatpush1.msra.mxu0 %v3031
    %3339 = vmatprep.subr.mxu0 0.0
    %3340 = vmatpush1.msra.mxu0 %v3032
    %3341 = vmatprep.subr.mxu0 0.0
    %3342 = vmatpush1.msra.mxu0 %v3033
    %3343 = vmatprep.subr.mxu0 0.0
    %3344 = vmatpush1.msra.mxu0 %v3034
    %3345 = vmatprep.subr.mxu0 0.0
    %3346 = vmatpush1.msra.mxu0 %v3035
    %3347 = vmatprep.subr.mxu0 0.0
    %3348 = vmatpush1.msra.mxu0 %v3036
    %3349 = vmatprep.subr.mxu0 0.0
    %3350 = vmatpush1.msra.mxu0 %v3037
    %3351 = vmatprep.subr.mxu0 0.0
    %3352 = vmatpush1.msra.mxu0 %v3038
    %3353 = vmatprep.subr.mxu0 0.0
    %3354 = vmatpush1.msra.mxu0 %v3039
    %3355 = vmatprep.subr.mxu0 0.0
    %3356 = vmatpush1.msra.mxu0 %v3040
    %3357 = vmatprep.subr.mxu0 0.0
    %3358 = vmatpush1.msra.mxu0 %v3041
    %3359 = vmatprep.subr.mxu0 0.0
    %3360 = vmatpush1.msra.mxu0 %v3042
    %3361 = vmatprep.subr.mxu0 0.0
    %3362 = vmatpush1.msra.mxu0 %v3043
    %3363 = vmatprep.subr.mxu0 0.0
    %3364 = vmatpush1.msra.mxu0 %v3044
    %3365 = vmatprep.subr.mxu0 0.0
    %3366 = vmatpush1.msra.mxu0 %v3045
    %3367 = vmatprep.subr.mxu0 0.0
    %3368 = vmatpush1.msra.mxu0 %v3046
    %3369 = vmatprep.subr.mxu0 0.0
    %3370 = vmatpush1.msra.mxu0 %v3047
    %3371 = vmatprep.subr.mxu0 0.0
    %3372 = vmatpush1.msra.mxu0 %v3048
    %3373 = vmatprep.subr.mxu0 0.0
    %3374 = vmatpush1.msra.mxu0 %v3049
    %3375 = vmatprep.subr.mxu0 0.0
    %3376 = vmatpush1.msra.mxu0 %v3050
    %3377 = vmatprep.subr.mxu0 0.0
    %3378 = vmatpush1.msra.mxu0 %v3051
    %3379 = vmatprep.subr.mxu0 0.0
    %3380 = vmatpush1.msra.mxu0 %v3052
    %3381 = vmatprep.subr.mxu0 0.0
    %3382 = vmatpush1.msra.mxu0 %v3053
    %3383 = vmatprep.subr.mxu0 0.0
    %3384 = vmatpush1.msra.mxu0 %v3054
    %3385 = vmatprep.subr.mxu0 0.0
    %3386 = vmatpush1.msra.mxu0 %v3055
    %3387 = vmatprep.subr.mxu0 0.0
    %3388 = vmatpush1.msra.mxu0 %v3056
    %3389 = vmatprep.subr.mxu0 0.0
    %3390 = vmatpush1.msra.mxu0 %v3057
    %3391 = vmatprep.mubr.f32.mxu0 %v2981
    %3392 = vmatmul.mubr.f32.gmra.mrb[0].mxu0 %v2980
    %v3393 = vpop.f32.mrb[0].mxu0
    %v3394 = vadd.f32 %v3324, %v3393
    %v3395 = vpop.f32.mrb[0].mxu0
    %3396 = vdwg.mxu0
    %3397 = vmatprep.subr.mxu0 0.0
    %3398 = vmatpush1.msra.mxu0 %v3058
    %3399 = vmatprep.subr.mxu0 0.0
    %3400 = vmatpush1.msra.mxu0 %v3059
    %3401 = vmatprep.subr.mxu0 0.0
    %3402 = vmatpush1.msra.mxu0 %v3060
    %3403 = vmatprep.subr.mxu0 0.0
    %3404 = vmatpush1.msra.mxu0 %v3061
    %3405 = vmatprep.subr.mxu0 0.0
    %3406 = vmatpush1.msra.mxu0 %v3062
    %3407 = vmatprep.subr.mxu0 0.0
    %3408 = vmatpush1.msra.mxu0 %v3063
    %3409 = vmatprep.subr.mxu0 0.0
    %3410 = vmatpush1.msra.mxu0 %v3064
    %3411 = vmatprep.subr.mxu0 0.0
    %3412 = vmatpush1.msra.mxu0 %v3065
    %3413 = vmatprep.subr.mxu0 0.0
    %3414 = vmatpush1.msra.mxu0 %v3066
    %3415 = vmatprep.subr.mxu0 0.0
    %3416 = vmatpush1.msra.mxu0 %v3067
    %3417 = vmatprep.subr.mxu0 0.0
    %3418 = vmatpush1.msra.mxu0 %v3068
    %3419 = vmatprep.subr.mxu0 0.0
    %3420 = vmatpush1.msra.mxu0 %v3069
    %3421 = vmatprep.subr.mxu0 0.0
    %3422 = vmatpush1.msra.mxu0 %v3070
    %3423 = vmatprep.subr.mxu0 0.0
    %3424 = vmatpush1.msra.mxu0 %v3071
    %3425 = vmatprep.subr.mxu0 0.0
    %3426 = vmatpush1.msra.mxu0 %v3072
    %3427 = vmatprep.subr.mxu0 0.0
    %3428 = vmatpush1.msra.mxu0 %v3073
    %3429 = vmatprep.subr.mxu0 0.0
    %3430 = vmatpush1.msra.mxu0 %v3074
    %3431 = vmatprep.subr.mxu0 0.0
    %3432 = vmatpush1.msra.mxu0 %v3075
    %3433 = vmatprep.subr.mxu0 0.0
    %3434 = vmatpush1.msra.mxu0 %v3076
    %3435 = vmatprep.subr.mxu0 0.0
    %3436 = vmatpush1.msra.mxu0 %v3077
    %3437 = vmatprep.subr.mxu0 0.0
    %3438 = vmatpush1.msra.mxu0 %v3078
    %3439 = vmatprep.subr.mxu0 0.0
    %3440 = vmatpush1.msra.mxu0 %v3079
    %3441 = vmatprep.subr.mxu0 0.0
    %3442 = vmatpush1.msra.mxu0 %v3080
    %3443 = vmatprep.subr.mxu0 0.0
    %3444 = vmatpush1.msra.mxu0 %v3081
    %3445 = vmatprep.subr.mxu0 0.0
    %3446 = vmatpush1.msra.mxu0 %v3082
    %3447 = vmatprep.subr.mxu0 0.0
    %3448 = vmatpush1.msra.mxu0 %v3083
    %3449 = vmatprep.subr.mxu0 0.0
    %3450 = vmatpush1.msra.mxu0 %v3084
    %3451 = vmatprep.subr.mxu0 0.0
    %3452 = vmatpush1.msra.mxu0 %v3085
    %3453 = vmatprep.subr.mxu0 0.0
    %3454 = vmatpush1.msra.mxu0 %v3086
    %3455 = vmatprep.subr.mxu0 0.0
    %3456 = vmatpush1.msra.mxu0 %v3087
    %3457 = vmatprep.subr.mxu0 0.0
    %3458 = vmatpush1.msra.mxu0 %v3088
    %3459 = vmatprep.subr.mxu0 0.0
    %3460 = vmatpush1.msra.mxu0 %v3089
    %3461 = vmatprep.mubr.f32.mxu0 %v2983
    %3462 = vmatmul.mubr.f32.gmra.mrb[0].mxu0 %v2982
    %v3463 = vpop.f32.mrb[0].mxu0
    %v3464 = vadd.f32 %v3394, %v3463
    %v3465 = vpop.f32.mrb[0].mxu0
    %3466 = vdwg.mxu0
    %3467 = vmatprep.subr.mxu0 0.0
    %3468 = vmatpush1.msra.mxu0 %v3090
    %3469 = vmatprep.subr.mxu0 0.0
    %3470 = vmatpush1.msra.mxu0 %v3091
    %3471 = vmatprep.subr.mxu0 0.0
    %3472 = vmatpush1.msra.mxu0 %v3092
    %3473 = vmatprep.subr.mxu0 0.0
    %3474 = vmatpush1.msra.mxu0 %v3093
    %3475 = vmatprep.subr.mxu0 0.0
    %3476 = vmatpush1.msra.mxu0 %v3094
    %3477 = vmatprep.subr.mxu0 0.0
    %3478 = vmatpush1.msra.mxu0 %v3095
    %3479 = vmatprep.subr.mxu0 0.0
    %3480 = vmatpush1.msra.mxu0 %v3096
    %3481 = vmatprep.subr.mxu0 0.0
    %3482 = vmatpush1.msra.mxu0 %v3097
    %3483 = vmatprep.subr.mxu0 0.0
    %3484 = vmatpush1.msra.mxu0 %v3098
    %3485 = vmatprep.subr.mxu0 0.0
    %3486 = vmatpush1.msra.mxu0 %v3099
    %3487 = vmatprep.subr.mxu0 0.0
    %3488 = vmatpush1.msra.mxu0 %v3100
    %3489 = vmatprep.subr.mxu0 0.0
    %3490 = vmatpush1.msra.mxu0 %v3101
    %3491 = vmatprep.subr.mxu0 0.0
    %3492 = vmatpush1.msra.mxu0 %v3102
    %3493 = vmatprep.subr.mxu0 0.0
    %3494 = vmatpush1.msra.mxu0 %v3103
    %3495 = vmatprep.subr.mxu0 0.0
    %3496 = vmatpush1.msra.mxu0 %v3104
    %3497 = vmatprep.subr.mxu0 0.0
    %3498 = vmatpush1.msra.mxu0 %v3105
    %3499 = vmatprep.subr.mxu0 0.0
    %3500 = vmatpush1.msra.mxu0 %v3106
    %3501 = vmatprep.subr.mxu0 0.0
    %3502 = vmatpush1.msra.mxu0 %v3107
    %3503 = vmatprep.subr.mxu0 0.0
    %3504 = vmatpush1.msra.mxu0 %v3108
    %3505 = vmatprep.subr.mxu0 0.0
    %3506 = vmatpush1.msra.mxu0 %v3109
    %3507 = vmatprep.subr.mxu0 0.0
    %3508 = vmatpush1.msra.mxu0 %v3110
    %3509 = vmatprep.subr.mxu0 0.0
    %3510 = vmatpush1.msra.mxu0 %v3111
    %3511 = vmatprep.subr.mxu0 0.0
    %3512 = vmatpush1.msra.mxu0 %v3112
    %3513 = vmatprep.subr.mxu0 0.0
    %3514 = vmatpush1.msra.mxu0 %v3113
    %3515 = vmatprep.subr.mxu0 0.0
    %3516 = vmatpush1.msra.mxu0 %v3114
    %3517 = vmatprep.subr.mxu0 0.0
    %3518 = vmatpush1.msra.mxu0 %v3115
    %3519 = vmatprep.subr.mxu0 0.0
    %3520 = vmatpush1.msra.mxu0 %v3116
    %3521 = vmatprep.subr.mxu0 0.0
    %3522 = vmatpush1.msra.mxu0 %v3117
    %3523 = vmatprep.subr.mxu0 0.0
    %3524 = vmatpush1.msra.mxu0 %v3118
    %3525 = vmatprep.subr.mxu0 0.0
    %3526 = vmatpush1.msra.mxu0 %v3119
    %3527 = vmatprep.subr.mxu0 0.0
    %3528 = vmatpush1.msra.mxu0 %v3120
    %3529 = vmatprep.subr.mxu0 0.0
    %3530 = vmatpush1.msra.mxu0 %v3121
    %3531 = vmatprep.mubr.f32.mxu0 %v2985
    %3532 = vmatmul.mubr.f32.gmra.mrb[0].mxu0 %v2984
    %v3533 = vpop.f32.mrb[0].mxu0
    %v3534 = vadd.f32 %v3464, %v3533
    %v3535 = vpop.f32.mrb[0].mxu0
    %3536 = vdwg.mxu0
    %3537 = vmatprep.subr.mxu0 0.0
    %3538 = vmatpush1.msra.mxu0 %v3122
    %3539 = vmatprep.subr.mxu0 0.0
    %3540 = vmatpush1.msra.mxu0 %v3123
    %3541 = vmatprep.subr.mxu0 0.0
    %3542 = vmatpush1.msra.mxu0 %v3124
    %3543 = vmatprep.subr.mxu0 0.0
    %3544 = vmatpush1.msra.mxu0 %v3125
    %3545 = vmatprep.subr.mxu0 0.0
    %3546 = vmatpush1.msra.mxu0 %v3126
    %3547 = vmatprep.subr.mxu0 0.0
    %3548 = vmatpush1.msra.mxu0 %v3127
    %3549 = vmatprep.subr.mxu0 0.0
    %3550 = vmatpush1.msra.mxu0 %v3128
    %3551 = vmatprep.subr.mxu0 0.0
    %3552 = vmatpush1.msra.mxu0 %v3129
    %3553 = vmatprep.subr.mxu0 0.0
    %3554 = vmatpush1.msra.mxu0 %v3130
    %3555 = vmatprep.subr.mxu0 0.0
    %3556 = vmatpush1.msra.mxu0 %v3131
    %3557 = vmatprep.subr.mxu0 0.0
    %3558 = vmatpush1.msra.mxu0 %v3132
    %3559 = vmatprep.subr.mxu0 0.0
    %3560 = vmatpush1.msra.mxu0 %v3133
    %3561 = vmatprep.subr.mxu0 0.0
    %3562 = vmatpush1.msra.mxu0 %v3134
    %3563 = vmatprep.subr.mxu0 0.0
    %3564 = vmatpush1.msra.mxu0 %v3135
    %3565 = vmatprep.subr.mxu0 0.0
    %3566 = vmatpush1.msra.mxu0 %v3136
    %3567 = vmatprep.subr.mxu0 0.0
    %3568 = vmatpush1.msra.mxu0 %v3137
    %3569 = vmatprep.subr.mxu0 0.0
    %3570 = vmatpush1.msra.mxu0 %v3138
    %3571 = vmatprep.subr.mxu0 0.0
    %3572 = vmatpush1.msra.mxu0 %v3139
    %3573 = vmatprep.subr.mxu0 0.0
    %3574 = vmatpush1.msra.mxu0 %v3140
    %3575 = vmatprep.subr.mxu0 0.0
    %3576 = vmatpush1.msra.mxu0 %v3141
    %3577 = vmatprep.subr.mxu0 0.0
    %3578 = vmatpush1.msra.mxu0 %v3142
    %3579 = vmatprep.subr.mxu0 0.0
    %3580 = vmatpush1.msra.mxu0 %v3143
    %3581 = vmatprep.subr.mxu0 0.0
    %3582 = vmatpush1.msra.mxu0 %v3144
    %3583 = vmatprep.subr.mxu0 0.0
    %3584 = vmatpush1.msra.mxu0 %v3145
    %3585 = vmatprep.subr.mxu0 0.0
    %3586 = vmatpush1.msra.mxu0 %v3146
    %3587 = vmatprep.subr.mxu0 0.0
    %3588 = vmatpush1.msra.mxu0 %v3147
    %3589 = vmatprep.subr.mxu0 0.0
    %3590 = vmatpush1.msra.mxu0 %v3148
    %3591 = vmatprep.subr.mxu0 0.0
    %3592 = vmatpush1.msra.mxu0 %v3149
    %3593 = vmatprep.subr.mxu0 0.0
    %3594 = vmatpush1.msra.mxu0 %v3150
    %3595 = vmatprep.subr.mxu0 0.0
    %3596 = vmatpush1.msra.mxu0 %v3151
    %3597 = vmatprep.subr.mxu0 0.0
    %3598 = vmatpush1.msra.mxu0 %v3152
    %3599 = vmatprep.subr.mxu0 0.0
    %3600 = vmatpush1.msra.mxu0 %v3153
    %3601 = vmatprep.mubr.f32.mxu0 %v2987
    %3602 = vmatmul.mubr.f32.gmra.mrb[0].mxu0 %v2986
    %v3603 = vpop.f32.mrb[0].mxu0
    %v3604 = vadd.f32 %v3534, %v3603
    %v3605 = vpop.f32.mrb[0].mxu0
    %3606 = vdwg.mxu0
    %3607 = vmatprep.subr.mxu0 0.0
    %3608 = vmatpush1.msra.mxu0 %v3154
    %3609 = vmatprep.subr.mxu0 0.0
    %3610 = vmatpush1.msra.mxu0 %v3155
    %3611 = vmatprep.subr.mxu0 0.0
    %3612 = vmatpush1.msra.mxu0 %v3156
    %3613 = vmatprep.subr.mxu0 0.0
    %3614 = vmatpush1.msra.mxu0 %v3157
    %3615 = vmatprep.subr.mxu0 0.0
    %3616 = vmatpush1.msra.mxu0 %v3158
    %3617 = vmatprep.subr.mxu0 0.0
    %3618 = vmatpush1.msra.mxu0 %v3159
    %3619 = vmatprep.subr.mxu0 0.0
    %3620 = vmatpush1.msra.mxu0 %v3160
    %3621 = vmatprep.subr.mxu0 0.0
    %3622 = vmatpush1.msra.mxu0 %v3161
    %3623 = vmatprep.subr.mxu0 0.0
    %3624 = vmatpush1.msra.mxu0 %v3162
    %3625 = vmatprep.subr.mxu0 0.0
    %3626 = vmatpush1.msra.mxu0 %v3163
    %3627 = vmatprep.subr.mxu0 0.0
    %3628 = vmatpush1.msra.mxu0 %v3164
    %3629 = vmatprep.subr.mxu0 0.0
    %3630 = vmatpush1.msra.mxu0 %v3165
    %3631 = vmatprep.subr.mxu0 0.0
    %3632 = vmatpush1.msra.mxu0 %v3166
    %3633 = vmatprep.subr.mxu0 0.0
    %3634 = vmatpush1.msra.mxu0 %v3167
    %3635 = vmatprep.subr.mxu0 0.0
    %3636 = vmatpush1.msra.mxu0 %v3168
    %3637 = vmatprep.subr.mxu0 0.0
    %3638 = vmatpush1.msra.mxu0 %v3169
    %3639 = vmatprep.subr.mxu0 0.0
    %3640 = vmatpush1.msra.mxu0 %v3170
    %3641 = vmatprep.subr.mxu0 0.0
    %3642 = vmatpush1.msra.mxu0 %v3171
    %3643 = vmatprep.subr.mxu0 0.0
    %3644 = vmatpush1.msra.mxu0 %v3172
    %3645 = vmatprep.subr.mxu0 0.0
    %3646 = vmatpush1.msra.mxu0 %v3173
    %3647 = vmatprep.subr.mxu0 0.0
    %3648 = vmatpush1.msra.mxu0 %v3174
    %3649 = vmatprep.subr.mxu0 0.0
    %3650 = vmatpush1.msra.mxu0 %v3175
    %3651 = vmatprep.subr.mxu0 0.0
    %3652 = vmatpush1.msra.mxu0 %v3176
    %3653 = vmatprep.subr.mxu0 0.0
    %3654 = vmatpush1.msra.mxu0 %v3177
    %3655 = vmatprep.subr.mxu0 0.0
    %3656 = vmatpush1.msra.mxu0 %v3178
    %3657 = vmatprep.subr.mxu0 0.0
    %3658 = vmatpush1.msra.mxu0 %v3179
    %3659 = vmatprep.subr.mxu0 0.0
    %3660 = vmatpush1.msra.mxu0 %v3180
    %3661 = vmatprep.subr.mxu0 0.0
    %3662 = vmatpush1.msra.mxu0 %v3181
    %3663 = vmatprep.subr.mxu0 0.0
    %3664 = vmatpush1.msra.mxu0 %v3182
    %3665 = vmatprep.subr.mxu0 0.0
    %3666 = vmatpush1.msra.mxu0 %v3183
    %3667 = vmatprep.subr.mxu0 0.0
    %3668 = vmatpush1.msra.mxu0 %v3184
    %3669 = vmatprep.subr.mxu0 0.0
    %3670 = vmatpush1.msra.mxu0 %v3185
    %3671 = vmatprep.mubr.f32.mxu0 %v2989
    %3672 = vmatmul.mubr.f32.gmra.mrb[0].mxu0 %v2988
    %v3673 = vpop.f32.mrb[0].mxu0
    %v3674 = vadd.f32 %v3604, %v3673
    %v3675 = vpop.f32.mrb[0].mxu0
    %3676 = vdwg.mxu0
    %3677 = vmatprep.subr.mxu0 0.0
    %3678 = vmatpush1.msra.mxu0 %v3186
    %3679 = vmatprep.subr.mxu0 0.0
    %3680 = vmatpush1.msra.mxu0 %v3187
    %3681 = vmatprep.subr.mxu0 0.0
    %3682 = vmatpush1.msra.mxu0 %v3188
    %3683 = vmatprep.subr.mxu0 0.0
    %3684 = vmatpush1.msra.mxu0 %v3189
    %3685 = vmatprep.subr.mxu0 0.0
    %3686 = vmatpush1.msra.mxu0 %v3190
    %3687 = vmatprep.subr.mxu0 0.0
    %3688 = vmatpush1.msra.mxu0 %v3191
    %3689 = vmatprep.subr.mxu0 0.0
    %3690 = vmatpush1.msra.mxu0 %v3192
    %3691 = vmatprep.subr.mxu0 0.0
    %3692 = vmatpush1.msra.mxu0 %v3193
    %3693 = vmatprep.subr.mxu0 0.0
    %3694 = vmatpush1.msra.mxu0 %v3194
    %3695 = vmatprep.subr.mxu0 0.0
    %3696 = vmatpush1.msra.mxu0 %v3195
    %3697 = vmatprep.subr.mxu0 0.0
    %3698 = vmatpush1.msra.mxu0 %v3196
    %3699 = vmatprep.subr.mxu0 0.0
    %3700 = vmatpush1.msra.mxu0 %v3197
    %3701 = vmatprep.subr.mxu0 0.0
    %3702 = vmatpush1.msra.mxu0 %v3198
    %3703 = vmatprep.subr.mxu0 0.0
    %3704 = vmatpush1.msra.mxu0 %v3199
    %3705 = vmatprep.subr.mxu0 0.0
    %3706 = vmatpush1.msra.mxu0 %v3200
    %3707 = vmatprep.subr.mxu0 0.0
    %3708 = vmatpush1.msra.mxu0 %v3201
    %3709 = vmatprep.subr.mxu0 0.0
    %3710 = vmatpush1.msra.mxu0 %v3202
    %3711 = vmatprep.subr.mxu0 0.0
    %3712 = vmatpush1.msra.mxu0 %v3203
    %3713 = vmatprep.subr.mxu0 0.0
    %3714 = vmatpush1.msra.mxu0 %v3204
    %3715 = vmatprep.subr.mxu0 0.0
    %3716 = vmatpush1.msra.mxu0 %v3205
    %3717 = vmatprep.subr.mxu0 0.0
    %3718 = vmatpush1.msra.mxu0 %v3206
    %3719 = vmatprep.subr.mxu0 0.0
    %3720 = vmatpush1.msra.mxu0 %v3207
    %3721 = vmatprep.subr.mxu0 0.0
    %3722 = vmatpush1.msra.mxu0 %v3208
    %3723 = vmatprep.subr.mxu0 0.0
    %3724 = vmatpush1.msra.mxu0 %v3209
    %3725 = vmatprep.subr.mxu0 0.0
    %3726 = vmatpush1.msra.mxu0 %v3210
    %3727 = vmatprep.subr.mxu0 0.0
    %3728 = vmatpush1.msra.mxu0 %v3211
    %3729 = vmatprep.subr.mxu0 0.0
    %3730 = vmatpush1.msra.mxu0 %v3212
    %3731 = vmatprep.subr.mxu0 0.0
    %3732 = vmatpush1.msra.mxu0 %v3213
    %3733 = vmatprep.subr.mxu0 0.0
    %3734 = vmatpush1.msra.mxu0 %v3214
    %3735 = vmatprep.subr.mxu0 0.0
    %3736 = vmatpush1.msra.mxu0 %v3215
    %3737 = vmatprep.subr.mxu0 0.0
    %3738 = vmatpush1.msra.mxu0 %v3216
    %3739 = vmatprep.subr.mxu0 0.0
    %3740 = vmatpush1.msra.mxu0 %v3217
    %3741 = vmatprep.mubr.f32.mxu0 %v2991
    %3742 = vmatmul.mubr.f32.gmra.mrb[0].mxu0 %v2990
    %v3743 = vpop.f32.mrb[0].mxu0
    %v3744 = vadd.f32 %v3674, %v3743
    %v3745 = vpop.f32.mrb[0].mxu0
    %3746 = vdwg.mxu0
    %3747 = vmatprep.subr.mxu0 0.0
    %3748 = vmatpush1.msra.mxu0 %v3218
    %3749 = vmatprep.subr.mxu0 0.0
    %3750 = vmatpush1.msra.mxu0 %v3219
    %3751 = vmatprep.subr.mxu0 0.0
    %3752 = vmatpush1.msra.mxu0 %v3220
    %3753 = vmatprep.subr.mxu0 0.0
    %3754 = vmatpush1.msra.mxu0 %v3221
    %3755 = vmatprep.subr.mxu0 0.0
    %3756 = vmatpush1.msra.mxu0 %v3222
    %3757 = vmatprep.subr.mxu0 0.0
    %3758 = vmatpush1.msra.mxu0 %v3223
    %3759 = vmatprep.subr.mxu0 0.0
    %3760 = vmatpush1.msra.mxu0 %v3224
    %3761 = vmatprep.subr.mxu0 0.0
    %3762 = vmatpush1.msra.mxu0 %v3225
    %3763 = vmatprep.subr.mxu0 0.0
    %3764 = vmatpush1.msra.mxu0 %v3226
    %3765 = vmatprep.subr.mxu0 0.0
    %3766 = vmatpush1.msra.mxu0 %v3227
    %3767 = vmatprep.subr.mxu0 0.0
    %3768 = vmatpush1.msra.mxu0 %v3228
    %3769 = vmatprep.subr.mxu0 0.0
    %3770 = vmatpush1.msra.mxu0 %v3229
    %3771 = vmatprep.subr.mxu0 0.0
    %3772 = vmatpush1.msra.mxu0 %v3230
    %3773 = vmatprep.subr.mxu0 0.0
    %3774 = vmatpush1.msra.mxu0 %v3231
    %3775 = vmatprep.subr.mxu0 0.0
    %3776 = vmatpush1.msra.mxu0 %v3232
    %3777 = vmatprep.subr.mxu0 0.0
    %3778 = vmatpush1.msra.mxu0 %v3233
    %3779 = vmatprep.subr.mxu0 0.0
    %3780 = vmatpush1.msra.mxu0 %v3234
    %3781 = vmatprep.subr.mxu0 0.0
    %3782 = vmatpush1.msra.mxu0 %v3235
    %3783 = vmatprep.subr.mxu0 0.0
    %3784 = vmatpush1.msra.mxu0 %v3236
    %3785 = vmatprep.subr.mxu0 0.0
    %3786 = vmatpush1.msra.mxu0 %v3237
    %3787 = vmatprep.subr.mxu0 0.0
    %3788 = vmatpush1.msra.mxu0 %v3238
    %3789 = vmatprep.subr.mxu0 0.0
    %3790 = vmatpush1.msra.mxu0 %v3239
    %3791 = vmatprep.subr.mxu0 0.0
    %3792 = vmatpush1.msra.mxu0 %v3240
    %3793 = vmatprep.subr.mxu0 0.0
    %3794 = vmatpush1.msra.mxu0 %v3241
    %3795 = vmatprep.subr.mxu0 0.0
    %3796 = vmatpush1.msra.mxu0 %v3242
    %3797 = vmatprep.subr.mxu0 0.0
    %3798 = vmatpush1.msra.mxu0 %v3243
    %3799 = vmatprep.subr.mxu0 0.0
    %3800 = vmatpush1.msra.mxu0 %v3244
    %3801 = vmatprep.subr.mxu0 0.0
    %3802 = vmatpush1.msra.mxu0 %v3245
    %3803 = vmatprep.subr.mxu0 0.0
    %3804 = vmatpush1.msra.mxu0 %v3246
    %3805 = vmatprep.subr.mxu0 0.0
    %3806 = vmatpush1.msra.mxu0 %v3247
    %3807 = vmatprep.subr.mxu0 0.0
    %3808 = vmatpush1.msra.mxu0 %v3248
    %3809 = vmatprep.subr.mxu0 0.0
    %3810 = vmatpush1.msra.mxu0 %v3249
    %3811 = vmatprep.mubr.f32.mxu0 %v2993
    %3812 = vmatmul.mubr.f32.gmra.mrb[0].mxu0 %v2992
    %v3813 = vpop.f32.mrb[0].mxu0
    %v3814 = vadd.f32 %v3744, %v3813
    %v3815 = vpop.f32.mrb[0].mxu0
    %3816 = vdwg.mxu0
    %v3817 = vld [vmem:[%s21] sm:$0xff]
    %v3818 = vld [vmem:[%s21 + $0x8] sm:$0xff]
    %v3819 = vld [vmem:[%s21 + $0x10] sm:$0xff]
    %v3820 = vld [vmem:[%s21 + $0x18] sm:$0xff]
    %v3822 = vsel %vm1281, %v3814, 0
    %3824 = vmatprep.subr.mxu0 0.0
    %3825 = vmatpush1.msra.mxu0 %v3817
    %3826 = vmatprep.subr.mxu0 0.0
    %3827 = vmatpush1.msra.mxu0 %v3818
    %3828 = vmatprep.subr.mxu0 0.0
    %3829 = vmatpush1.msra.mxu0 %v3819
    %3830 = vmatprep.subr.mxu0 0.0
    %3831 = vmatpush1.msra.mxu0 %v3820
    %3832 = vmatprep.subr.mxu0 0.0
    %3833 = vmatpush1.msra.mxu0 0.0
    %3834 = vmatprep.subr.mxu0 0.0
    %3835 = vmatpush1.msra.mxu0 0.0
    %3836 = vmatprep.subr.mxu0 0.0
    %3837 = vmatpush1.msra.mxu0 0.0
    %3838 = vmatprep.subr.mxu0 0.0
    %3839 = vmatpush1.msra.mxu0 0.0
    %3840 = vmatprep.subr.mxu0 0.0
    %3841 = vmatpush1.msra.mxu0 0.0
    %3842 = vmatprep.subr.mxu0 0.0
    %3843 = vmatpush1.msra.mxu0 0.0
    %3844 = vmatprep.subr.mxu0 0.0
    %3845 = vmatpush1.msra.mxu0 0.0
    %3846 = vmatprep.subr.mxu0 0.0
    %3847 = vmatpush1.msra.mxu0 0.0
    %3848 = vmatprep.subr.mxu0 0.0
    %3849 = vmatpush1.msra.mxu0 0.0
    %3850 = vmatprep.subr.mxu0 0.0
    %3851 = vmatpush1.msra.mxu0 0.0
    %3852 = vmatprep.subr.mxu0 0.0
    %3853 = vmatpush1.msra.mxu0 0.0
    %3854 = vmatprep.subr.mxu0 0.0
    %3855 = vmatpush1.msra.mxu0 0.0
    %3856 = vmatprep.subr.mxu0 0.0
    %3857 = vmatpush1.msra.mxu0 0.0
    %3858 = vmatprep.subr.mxu0 0.0
    %3859 = vmatpush1.msra.mxu0 0.0
    %3860 = vmatprep.subr.mxu0 0.0
    %3861 = vmatpush1.msra.mxu0 0.0
    %3862 = vmatprep.subr.mxu0 0.0
    %3863 = vmatpush1.msra.mxu0 0.0
    %3864 = vmatprep.subr.mxu0 0.0
    %3865 = vmatpush1.msra.mxu0 0.0
    %3866 = vmatprep.subr.mxu0 0.0
    %3867 = vmatpush1.msra.mxu0 0.0
    %3868 = vmatprep.subr.mxu0 0.0
    %3869 = vmatpush1.msra.mxu0 0.0
    %3870 = vmatprep.subr.mxu0 0.0
    %3871 = vmatpush1.msra.mxu0 0.0
    %3872 = vmatprep.subr.mxu0 0.0
    %3873 = vmatpush1.msra.mxu0 0.0
    %3874 = vmatprep.subr.mxu0 0.0
    %3875 = vmatpush1.msra.mxu0 0.0
    %3876 = vmatprep.subr.mxu0 0.0
    %3877 = vmatpush1.msra.mxu0 0.0
    %3878 = vmatprep.subr.mxu0 0.0
    %3879 = vmatpush1.msra.mxu0 0.0
    %3880 = vmatprep.subr.mxu0 0.0
    %3881 = vmatpush1.msra.mxu0 0.0
    %3882 = vmatprep.subr.mxu0 0.0
    %3883 = vmatpush1.msra.mxu0 0.0
    %3884 = vmatprep.subr.mxu0 0.0
    %3885 = vmatpush1.msra.mxu0 0.0
    %3886 = vmatprep.subr.mxu0 0.0
    %3887 = vmatpush1.msra.mxu0 0.0
    %3888 = vmatprep.mubr.f32.mxu0 0.0
    %3889 = vmatmul.mubr.f32.gmra.mrb[0].mxu0 %v3822
    %v3890 = vpop.f32.mrb[0].mxu0
    %v3891 = vadd.f32 0.0, %v3890
    %v3892 = vpop.f32.mrb[0].mxu0
    %3893 = vdwg.mxu0
    %vm3894 = vcmp.gt.f32.partialorder %v3891, 0.0
    %v3895 = vmul.f32 %v3891, 0.2
    %v3896 = vsel %vm3894, %v3891, %v3895
    %v3897 = vld [vmem:[%s22] sm:$0xff]
    %v3898 = vld [vmem:[%s22 + $0x8] sm:$0xff]
    %v3899 = vld [vmem:[%s22 + $0x10] sm:$0xff]
    %v3900 = vld [vmem:[%s22 + $0x18] sm:$0xff]
    %v3901 = vld [vmem:[%s22 + $0x20] sm:$0xff]
    %v3902 = vld [vmem:[%s22 + $0x28] sm:$0xff]
    %v3903 = vld [vmem:[%s22 + $0x30] sm:$0xff]
    %v3904 = vld [vmem:[%s22 + $0x38] sm:$0xff]
    %v3906 = vsel %vm1487, %v3896, 0
    %3908 = vmatprep.subr.mxu0 0.0
    %3909 = vmatpush1.msra.mxu0 %v3897
    %3910 = vmatprep.subr.mxu0 0.0
    %3911 = vmatpush1.msra.mxu0 %v3898
    %3912 = vmatprep.subr.mxu0 0.0
    %3913 = vmatpush1.msra.mxu0 %v3899
    %3914 = vmatprep.subr.mxu0 0.0
    %3915 = vmatpush1.msra.mxu0 %v3900
    %3916 = vmatprep.subr.mxu0 0.0
    %3917 = vmatpush1.msra.mxu0 %v3901
    %3918 = vmatprep.subr.mxu0 0.0
    %3919 = vmatpush1.msra.mxu0 %v3902
    %3920 = vmatprep.subr.mxu0 0.0
    %3921 = vmatpush1.msra.mxu0 %v3903
    %3922 = vmatprep.subr.mxu0 0.0
    %3923 = vmatpush1.msra.mxu0 %v3904
    %3924 = vmatprep.subr.mxu0 0.0
    %3925 = vmatpush1.msra.mxu0 0.0
    %3926 = vmatprep.subr.mxu0 0.0
    %3927 = vmatpush1.msra.mxu0 0.0
    %3928 = vmatprep.subr.mxu0 0.0
    %3929 = vmatpush1.msra.mxu0 0.0
    %3930 = vmatprep.subr.mxu0 0.0
    %3931 = vmatpush1.msra.mxu0 0.0
    %3932 = vmatprep.subr.mxu0 0.0
    %3933 = vmatpush1.msra.mxu0 0.0
    %3934 = vmatprep.subr.mxu0 0.0
    %3935 = vmatpush1.msra.mxu0 0.0
    %3936 = vmatprep.subr.mxu0 0.0
    %3937 = vmatpush1.msra.mxu0 0.0
    %3938 = vmatprep.subr.mxu0 0.0
    %3939 = vmatpush1.msra.mxu0 0.0
    %3940 = vmatprep.subr.mxu0 0.0
    %3941 = vmatpush1.msra.mxu0 0.0
    %3942 = vmatprep.subr.mxu0 0.0
    %3943 = vmatpush1.msra.mxu0 0.0
    %3944 = vmatprep.subr.mxu0 0.0
    %3945 = vmatpush1.msra.mxu0 0.0
    %3946 = vmatprep.subr.mxu0 0.0
    %3947 = vmatpush1.msra.mxu0 0.0
    %3948 = vmatprep.subr.mxu0 0.0
    %3949 = vmatpush1.msra.mxu0 0.0
    %3950 = vmatprep.subr.mxu0 0.0
    %3951 = vmatpush1.msra.mxu0 0.0
    %3952 = vmatprep.subr.mxu0 0.0
    %3953 = vmatpush1.msra.mxu0 0.0
    %3954 = vmatprep.subr.mxu0 0.0
    %3955 = vmatpush1.msra.mxu0 0.0
    %3956 = vmatprep.subr.mxu0 0.0
    %3957 = vmatpush1.msra.mxu0 0.0
    %3958 = vmatprep.subr.mxu0 0.0
    %3959 = vmatpush1.msra.mxu0 0.0
    %3960 = vmatprep.subr.mxu0 0.0
    %3961 = vmatpush1.msra.mxu0 0.0
    %3962 = vmatprep.subr.mxu0 0.0
    %3963 = vmatpush1.msra.mxu0 0.0
    %3964 = vmatprep.subr.mxu0 0.0
    %3965 = vmatpush1.msra.mxu0 0.0
    %3966 = vmatprep.subr.mxu0 0.0
    %3967 = vmatpush1.msra.mxu0 0.0
    %3968 = vmatprep.subr.mxu0 0.0
    %3969 = vmatpush1.msra.mxu0 0.0
    %3970 = vmatprep.subr.mxu0 0.0
    %3971 = vmatpush1.msra.mxu0 0.0
    %3972 = vmatprep.mubr.f32.mxu0 0.0
    %3973 = vmatmul.mubr.f32.gmra.mrb[0].mxu0 %v3906
    %v3974 = vpop.f32.mrb[0].mxu0
    %v3975 = vadd.f32 0.0, %v3974
    %v3976 = vpop.f32.mrb[0].mxu0
    %3977 = vdwg.mxu0
    %vm3978 = vcmask 254976
    %3979 = vst.msk [vmem:[#allocation5] sm:$0x3] %vm3978, %v3814
    %vm3980 = vcmask 123904
    %3981 = vst.msk [vmem:[#allocation7] sm:$0x3] %vm3980, %v3975
    // Predicated region
    $region94: #{forward.1} parent=1 // pred_check
      _
    $region95: #{forward.1} parent=1 // pred_check_branch
      %3983 = sbr.rel (0) target = $region97
    $region96: #{forward.1} parent=1 // pred_region
      %s3985 = ssub.s32 32, 32
      %3986 = vsyncadd [#allocation6], %s3985
      %s3988 = sshll.u32 [#allocation5], 4
      %s3989 = int_to_ptr.vmem [resolvable:$true] %s3988
      %3991 = dma.vmem_to_hbm [thread:$0]  %s3989, 32, %s23, [#allocation6]
    $region97: #{forward.1} parent=1 // pred_fallthru
      _
    // Predicated region
    $region98: #{forward.1} parent=1 // pred_check
      _
    $region99: #{forward.1} parent=1 // pred_check_branch
      %3993 = sbr.rel (0) target = $region101
    $region100: #{forward.1} parent=1 // pred_region
      %s3995 = ssub.s32 32, 32
      %3996 = vsyncadd [#allocation8], %s3995
      %s3998 = sshll.u32 [#allocation7], 4
      %s3999 = int_to_ptr.vmem [resolvable:$true] %s3998
      %4001 = dma.vmem_to_hbm [thread:$0]  %s3999, 32, %s24, [#allocation8]
    $region101: #{forward.1} parent=1 // pred_fallthru
      _
    // Predicated region
    $region102: #{forward.1} parent=1 // pred_check
      _
    $region103: #{forward.1} parent=1 // pred_check_branch
      %4003 = sbr.rel (0) target = $region105
    $region104: #{forward.1} parent=1 // pred_region
      %4004 = dma.done [#allocation6], 32
    $region105: #{forward.1} parent=1 // pred_fallthru
      _
    // Predicated region
    $region106: #{forward.1} parent=1 // pred_check
      _
    $region107: #{forward.1} parent=1 // pred_check_branch
      %4006 = sbr.rel (0) target = $region109
    $region108: #{forward.1} parent=1 // pred_region
      %4007 = dma.done [#allocation8], 32
    $region109: #{forward.1} parent=1 // pred_fallthru
      _
    %4008 = vsyncpa [#allocation6], 1
    %4009 = vsyncpa [#allocation8], 1

</llo_original>
